<compile_context>
chip_gen: v6e
topology: v6e:2x2x1
jax: 0.10.0
libtpu: 0.0.40
codegen_flags: <defaults>
</compile_context>

<pallas_src>
import functools

import jax
import jax.numpy as jnp
from jax.experimental import pallas as pl
from jax.experimental.pallas import tpu as pltpu


def _round_up(x, m):
    return (x + m - 1) // m * m


def _choose_thw(hw, cap=256):
    """Largest multiple-of-8 spatial tile <= cap that divides hw; else pad hw."""
    cap = max(8, cap - cap % 8)
    for t in range(cap, 7, -8):
        if hw % t == 0:
            return t, hw
    t = min(cap, _round_up(hw, 8))
    return t, _round_up(hw, t)


def _pick_vmem_limit():
    """Per-generation scoped-VMEM limit (96 MB on 128-MiB parts, 40 MB on v7x)."""
    try:
        cap = pltpu.get_tpu_info().vmem_capacity_bytes
    except Exception:
        cap = 0
    if cap >= 100 * (1 << 20):      # v5e / v6e: 128 MiB physical VMEM
        return 96 * (1 << 20)
    if cap > 0:                     # v7x: 64 MiB physical VMEM
        return 40 * (1 << 20)
    return 32 * (1 << 20)           # unknown backend: conservative default


def _supports_pipeline_mode():
    if not hasattr(pl, "Buffered"):
        return False
    try:
        pl.BlockSpec((8, 128), lambda i, j: (0, 0), pipeline_mode=pl.Buffered(1))
        return True
    except Exception:
        return False


def _nic_encoder_kernel(patches_ref, wc_ref, bc_ref, wl_ref, bl_ref,
                        out_ref, acc_ref, *, tb, thw, k, fp, f_chunk, pad_hw):
    """One (batch-tile, HW-tile) step of the fused encoder.

    patches_ref : (TB, THW, K) bf16  im2col patches (K unpadded)
    wc_ref      : (K, Fp)      bf16  conv weight in matmul form
    bc_ref      : (1, Fp)      f32   conv bias
    wl_ref      : (Fp, Ep)     f32   linear weight^T, pre-scaled by 1/HW
    bl_ref      : (1, Ep)      f32   linear bias
    out_ref     : (TB, Ep)     f32   output embeddings for this batch tile
    acc_ref     : (TB, Fp)     f32   running column-sum of relu(conv) features
    """
    hw = pl.program_id(1)

    @pl.when(hw == 0)
    def _init():
        acc_ref[...] = jnp.zeros_like(acc_ref)

    # conv-as-matmul on the MXU for all TB*THW spatial positions of this tile,
    # chunked over the F (output-channel) dimension to bound the live f32 slab.
    p2d = patches_ref[...].reshape(tb * thw, k)                     # bf16
    for c0 in range(0, fp, f_chunk):                                # static, unrolled
        c1 = c0 + f_chunk
        feat = jnp.dot(p2d, wc_ref[:, c0:c1],
                       preferred_element_type=jnp.float32)          # (TB*THW, FC) f32
        feat = jnp.maximum(feat + bc_ref[:, c0:c1], 0.0)
        # vectorized global-average-pool numerator: one reduce per chunk.
        acc_ref[:, c0:c1] += jnp.sum(feat.reshape(tb, thw, f_chunk), axis=1)

    @pl.when(hw == pl.num_programs(1) - 1)
    def _finalize():
        pool = acc_ref[...]
        if pad_hw:
            # zero-padded spatial rows each contributed relu(conv_bias);
            # remove that contribution analytically.
            pool = pool - float(pad_hw) * jnp.maximum(bc_ref[...], 0.0)
        # 1/HW is already folded into wl, so pooled features == column sum.
        emb = jnp.dot(pool, wl_ref[...], preferred_element_type=jnp.float32)
        out_ref[...] = emb + bl_ref[...]


def nic_cnn_encoder(imgs, conv_w, conv_b, lin_w, lin_b, *, thw_cap=256):
    """imgs: [B, Cin, H, W] float32 (NCHW, PyTorch convention).

    conv_w: [3, 3, Cin, F]    conv_b: [F]
    lin_w : [E, F] (PyTorch Linear convention)    lin_b: [E]
    returns: [B, E] float32
    """
    B, Cin, H, W = imgs.shape
    KH = KW = 3
    F = conv_w.shape[-1]
    E = lin_w.shape[0]
    HW = H * W
    K = KH * KW * Cin

    # ---- lane-dense padded sizes (K intentionally left unpadded in HBM) ----
    Fp = _round_up(F, 128)
    Ep = _round_up(E, 128)

    # ---- tile sizes ----
    TB = 8                                   # always a full 8-sublane batch tile
    Bp = _round_up(B, TB)
    THW, HWp = _choose_thw(HW, cap=thw_cap)  # bounded spatial tile (mult of 8)
    pad_hw = HWp - HW

    # in-kernel F chunk (multiple of 128, bounds the live f32 feature slab)
    if Fp % 512 == 0:
        f_chunk = 512
    elif Fp % 256 == 0:
        f_chunk = 256
    else:
        f_chunk = 128

    # ---- plain-JAX glue: NCHW -> NHWC, halo pad, im2col, tile padding ----
    x = jnp.transpose(imgs, (0, 2, 3, 1)).astype(jnp.float32)       # NHWC
    xp = jnp.pad(x, ((0, 0), (1, 1), (1, 1), (0, 0)))
    taps = [xp[:, kh:kh + H, kw:kw + W, :]
            for kh in range(KH) for kw in range(KW)]                # each (B,H,W,Cin)
    patches = jnp.concatenate(taps, axis=-1).reshape(B, HW, K)      # (kh,kw,cin) order
    patches = jnp.pad(patches, ((0, Bp - B), (0, HWp - HW), (0, 0)))
    patches = patches.astype(jnp.bfloat16)                          # bf16 MXU operand

    wc = conv_w.reshape(K, F).astype(jnp.float32)                   # matches tap order
    wc = jnp.pad(wc, ((0, 0), (0, Fp - F))).astype(jnp.bfloat16)
    bc = jnp.pad(conv_b.reshape(1, F).astype(jnp.float32), ((0, 0), (0, Fp - F)))
    # Linear weight^T with the 1/HW pooling scale folded in; kept f32 (tiny).
    wl = jnp.transpose(lin_w).astype(jnp.float32) / HW
    wl = jnp.pad(wl, ((0, Fp - F), (0, Ep - E)))
    bl = jnp.pad(lin_b.reshape(1, E).astype(jnp.float32), ((0, 0), (0, Ep - E)))

    kernel = functools.partial(_nic_encoder_kernel, tb=TB, thw=THW, k=K,
                               fp=Fp, f_chunk=f_chunk, pad_hw=pad_hw)

    def _const_spec(shape, single_buffer):
        # grid-invariant operands: single-buffer them when supported (saves
        # a duplicate conv-weight buffer inside VMEM, relevant on v7x).
        if single_buffer:
            return pl.BlockSpec(shape, lambda b, h: (0, 0),
                                pipeline_mode=pl.Buffered(1))
        return pl.BlockSpec(shape, lambda b, h: (0, 0))

    def run(single_buffer_weights):
        in_specs = [
            # streaming input; sweep pl.Buffered(3) here if DMA is exposed.
            pl.BlockSpec((TB, THW, K), lambda b, h: (b, h, 0)),
            _const_spec((K, Fp), single_buffer_weights),
            _const_spec((1, Fp), single_buffer_weights),
            _const_spec((Fp, Ep), single_buffer_weights),
            _const_spec((1, Ep), single_buffer_weights),
        ]
        return pl.pallas_call(
            kernel,
            out_shape=jax.ShapeDtypeStruct((Bp, Ep), jnp.float32),
            grid_spec=pltpu.PrefetchScalarGridSpec(
                num_scalar_prefetch=0,
                grid=(Bp // TB, HWp // THW),
                in_specs=in_specs,
                out_specs=pl.BlockSpec((TB, Ep), lambda b, h: (b, 0)),
                scratch_shapes=[pltpu.VMEM((TB, Fp), jnp.float32)],
            ),
            compiler_params=pltpu.CompilerParams(
                dimension_semantics=("parallel", "arbitrary"),
                vmem_limit_bytes=_pick_vmem_limit(),
            ),
        )(patches, wc, bc, wl, bl)

    if _supports_pipeline_mode():
        try:
            out = run(True)
        except Exception:
            out = run(False)
    else:
        out = run(False)

    return out[:B, :E]


def _reference(imgs, conv_w, conv_b, lin_w, lin_b):
    """Pure-JAX reference with the same bf16 conv-operand quantization."""
    B, Cin, H, W = imgs.shape
    Fc = conv_w.shape[-1]
    x = jnp.transpose(imgs, (0, 2, 3, 1)).astype(jnp.float32)
    xp = jnp.pad(x, ((0, 0), (1, 1), (1, 1), (0, 0))).astype(jnp.bfloat16)
    cw = conv_w.astype(jnp.bfloat16)
    feat = jnp.zeros((B, H, W, Fc), jnp.float32)
    for kh in range(3):
        for kw in range(3):
            feat = feat + jnp.einsum(
                'bhwc,cf->bhwf', xp[:, kh:kh + H, kw:kw + W, :], cw[kh, kw],
                preferred_element_type=jnp.float32)
    feat = jnp.maximum(feat + conv_b.astype(jnp.float32), 0.0)
    pooled = jnp.mean(feat, axis=(1, 2))                            # (B, F)
    return pooled @ lin_w.astype(jnp.float32).T + lin_b.astype(jnp.float32)


if __name__ == "__main__":
    key = jax.random.PRNGKey(0)
    B, Cin, H, W = 2, 4, 16, 16     # small synthetic image batch (NCHW)
    F = 64                          # stand-in for resnet.fc.in_features (2048)
    E = 32                          # dim_embedding

    k1, k2, k3, k4, k5 = jax.random.split(key, 5)
    imgs = jax.random.normal(k1, (B, Cin, H, W), jnp.float32)
    conv_w = jax.random.normal(k2, (3, 3, Cin, F), jnp.float32) * 0.05
    conv_b = jax.random.normal(k3, (F,), jnp.float32) * 0.05
    lin_w = jax.random.normal(k4, (E, F), jnp.float32) * 0.05
    lin_b = jax.random.normal(k5, (E,), jnp.float32) * 0.05

    out = nic_cnn_encoder(imgs, conv_w, conv_b, lin_w, lin_b)
    out = jax.block_until_ready(out)

    ref = _reference(imgs, conv_w, conv_b, lin_w, lin_b)
    assert out.shape == (B, E)
    # bf16 conv operands on both sides; remaining diff is f32 accumulation order.
    assert jnp.allclose(out, ref, atol=2e-3, rtol=2e-3), "mismatch vs reference"

    print("KERNEL_OK")
</pallas_src>

<mosaic_0001>
module attributes {stable_mosaic.version = 11 : i64} {
  func.func @_nic_encoder_kernel(%arg0: i32, %arg1: i32, %arg2: memref<8x256x36xbf16, #tpu.memory_space<vmem>>, %arg3: memref<36x128xbf16, #tpu.memory_space<vmem>>, %arg4: memref<1x128xf32, #tpu.memory_space<vmem>>, %arg5: memref<128x128xf32, #tpu.memory_space<vmem>>, %arg6: memref<1x128xf32, #tpu.memory_space<vmem>>, %arg7: memref<8x128xf32, #tpu.memory_space<vmem>>, %arg8: memref<8x128xf32, #tpu.memory_space<vmem>>) attributes {dimension_semantics = [#tpu.dimension_semantics<parallel>, #tpu.dimension_semantics<arbitrary>], iteration_bounds = array<i64: 1, 1>, scalar_prefetch = 0 : i64, scratch_operands = 1 : i64, tpu.core_type = #tpu.core_type<tc>, window_params = [{transform_indices = @transform_0, window_bounds = array<i64: 8, 256, 36>}, {pipeline_mode = #tpu.pipeline_mode<synchronous>, transform_indices = @transform_1, window_bounds = array<i64: 36, 128>}, {pipeline_mode = #tpu.pipeline_mode<synchronous>, transform_indices = @transform_2, window_bounds = array<i64: 1, 128>}, {pipeline_mode = #tpu.pipeline_mode<synchronous>, transform_indices = @transform_3, window_bounds = array<i64: 128, 128>}, {pipeline_mode = #tpu.pipeline_mode<synchronous>, transform_indices = @transform_4, window_bounds = array<i64: 1, 128>}, {transform_indices = @transform_5, window_bounds = array<i64: 8, 128>}]} {
    %c0_i32 = arith.constant 0 : i32
    %0 = arith.cmpi eq, %arg1, %c0_i32 : i32
    %1 = arith.extui %0 : i1 to i32
    %c0_i32_0 = arith.constant 0 : i32
    %2 = arith.cmpi ne, %1, %c0_i32_0 : i32
    scf.if %2 {
      %cst_15 = arith.constant 0.000000e+00 : f32
      %20 = vector.broadcast %cst_15 : f32 to vector<8x128xf32>
      %c0_16 = arith.constant 0 : index
      %c0_17 = arith.constant 0 : index
      %21 = vector.load %arg8[%c0_16, %c0_17] : memref<8x128xf32, #tpu.memory_space<vmem>>, vector<8x128xf32>
      tpu.vector_store %arg8[%c0_16, %c0_17], %20 {strides = array<i32>} : memref<8x128xf32, #tpu.memory_space<vmem>>, vector<8x128xf32>,
    } else {
    }
    %c0 = arith.constant 0 : index
    %c0_1 = arith.constant 0 : index
    %c0_2 = arith.constant 0 : index
    %3 = vector.load %arg2[%c0, %c0_1, %c0_2] : memref<8x256x36xbf16, #tpu.memory_space<vmem>>, vector<8x256x36xbf16>
    %4 = vector.shape_cast %3 : vector<8x256x36xbf16> to vector<2048x36xbf16>
    %c0_3 = arith.constant 0 : index
    %c0_4 = arith.constant 0 : index
    %5 = vector.load %arg3[%c0_3, %c0_4] : memref<36x128xbf16, #tpu.memory_space<vmem>>, vector<36x128xbf16>
    %cst = arith.constant dense<0.000000e+00> : vector<2048x128xf32>
    %6 = tpu.matmul %4, %5, %cst {dimension_numbers = #tpu.dot_dimension_numbers<[1], [0], [0], [1], [0, 0, 1, 1], [], []>} : vector<2048x36xbf16>, vector<36x128xbf16>, vector<2048x128xf32> -> vector<2048x128xf32>
    %c0_5 = arith.constant 0 : index
    %c0_6 = arith.constant 0 : index
    %7 = vector.load %arg4[%c0_5, %c0_6] : memref<1x128xf32, #tpu.memory_space<vmem>>, vector<1x128xf32>
    %8 = vector.broadcast %7 : vector<1x128xf32> to vector<2048x128xf32>
    %9 = arith.addf %6, %8 : vector<2048x128xf32>
    %cst_7 = arith.constant 0.000000e+00 : f32
    %10 = vector.broadcast %cst_7 : f32 to vector<2048x128xf32>
    %11 = arith.maximumf %9, %10 : vector<2048x128xf32>
    %c0_8 = arith.constant 0 : index
    %c0_9 = arith.constant 0 : index
    %12 = vector.load %arg8[%c0_8, %c0_9] : memref<8x128xf32, #tpu.memory_space<vmem>>, vector<8x128xf32>
    %13 = vector.shape_cast %11 : vector<2048x128xf32> to vector<8x256x128xf32>
    %cst_10 = arith.constant dense<0.000000e+00> : vector<8x128xf32>
    %14 = vector.multi_reduction <add>, %13, %cst_10 [1] : vector<8x256x128xf32> to vector<8x128xf32>
    %15 = arith.addf %12, %14 : vector<8x128xf32>
    %c0_11 = arith.constant 0 : index
    %c0_12 = arith.constant 0 : index
    %16 = vector.load %arg8[%c0_11, %c0_12] : memref<8x128xf32, #tpu.memory_space<vmem>>, vector<8x128xf32>
    tpu.vector_store %arg8[%c0_11, %c0_12], %15 {strides = array<i32>} : memref<8x128xf32, #tpu.memory_space<vmem>>, vector<8x128xf32>,
    %c0_i32_13 = arith.constant 0 : i32
    %17 = arith.cmpi eq, %arg1, %c0_i32_13 : i32
    %18 = arith.extui %17 : i1 to i32
    %c0_i32_14 = arith.constant 0 : i32
    %19 = arith.cmpi ne, %18, %c0_i32_14 : i32
    scf.if %19 {
      %c0_15 = arith.constant 0 : index
      %c0_16 = arith.constant 0 : index
      %20 = vector.load %arg8[%c0_15, %c0_16] : memref<8x128xf32, #tpu.memory_space<vmem>>, vector<8x128xf32>
      %c0_17 = arith.constant 0 : index
      %c0_18 = arith.constant 0 : index
      %21 = vector.load %arg5[%c0_17, %c0_18] : memref<128x128xf32, #tpu.memory_space<vmem>>, vector<128x128xf32>
      %cst_19 = arith.constant dense<0.000000e+00> : vector<8x128xf32>
      %22 = tpu.matmul %20, %21, %cst_19 {dimension_numbers = #tpu.dot_dimension_numbers<[1], [0], [0], [1], [0, 0, 1, 1], [], []>} : vector<8x128xf32>, vector<128x128xf32>, vector<8x128xf32> -> vector<8x128xf32>
      %c0_20 = arith.constant 0 : index
      %c0_21 = arith.constant 0 : index
      %23 = vector.load %arg6[%c0_20, %c0_21] : memref<1x128xf32, #tpu.memory_space<vmem>>, vector<1x128xf32>
      %24 = vector.broadcast %23 : vector<1x128xf32> to vector<8x128xf32>
      %25 = arith.addf %22, %24 : vector<8x128xf32>
      %c0_22 = arith.constant 0 : index
      %c0_23 = arith.constant 0 : index
      %26 = vector.load %arg7[%c0_22, %c0_23] : memref<8x128xf32, #tpu.memory_space<vmem>>, vector<8x128xf32>
      tpu.vector_store %arg7[%c0_22, %c0_23], %25 {strides = array<i32>} : memref<8x128xf32, #tpu.memory_space<vmem>>, vector<8x128xf32>,
    } else {
    }
    return
  }
  func.func @transform_0(%arg0: i32, %arg1: i32) -> (i32, i32, i32) {
    %c0_i32 = arith.constant 0 : i32
    %c0_i32_0 = arith.constant 0 : i32
    return %arg0, %arg1, %c0_i32 : i32, i32, i32
  }
  func.func @transform_1(%arg0: i32, %arg1: i32) -> (i32, i32) {
    %c0_i32 = arith.constant 0 : i32
    %c0_i32_0 = arith.constant 0 : i32
    %c0_i32_1 = arith.constant 0 : i32
    return %c0_i32, %c0_i32_0 : i32, i32
  }
  func.func @transform_2(%arg0: i32, %arg1: i32) -> (i32, i32) {
    %c0_i32 = arith.constant 0 : i32
    %c0_i32_0 = arith.constant 0 : i32
    %c0_i32_1 = arith.constant 0 : i32
    return %c0_i32, %c0_i32_0 : i32, i32
  }
  func.func @transform_3(%arg0: i32, %arg1: i32) -> (i32, i32) {
    %c0_i32 = arith.constant 0 : i32
    %c0_i32_0 = arith.constant 0 : i32
    %c0_i32_1 = arith.constant 0 : i32
    return %c0_i32, %c0_i32_0 : i32, i32
  }
  func.func @transform_4(%arg0: i32, %arg1: i32) -> (i32, i32) {
    %c0_i32 = arith.constant 0 : i32
    %c0_i32_0 = arith.constant 0 : i32
    %c0_i32_1 = arith.constant 0 : i32
    return %c0_i32, %c0_i32_0 : i32, i32
  }
  func.func @transform_5(%arg0: i32, %arg1: i32) -> (i32, i32) {
    %c0_i32 = arith.constant 0 : i32
    %c0_i32_0 = arith.constant 0 : i32
    return %arg0, %c0_i32 : i32, i32
  }
}

module attributes {stable_mosaic.version = 11 : i64} {
  func.func @_nic_encoder_kernel(%arg0: i32, %arg1: i32, %arg2: memref<8x256x36xbf16, #tpu.memory_space<vmem>>, %arg3: memref<36x128xbf16, #tpu.memory_space<vmem>>, %arg4: memref<1x128xf32, #tpu.memory_space<vmem>>, %arg5: memref<128x128xf32, #tpu.memory_space<vmem>>, %arg6: memref<1x128xf32, #tpu.memory_space<vmem>>, %arg7: memref<8x128xf32, #tpu.memory_space<vmem>>, %arg8: memref<8x128xf32, #tpu.memory_space<vmem>>) attributes {dimension_semantics = [#tpu.dimension_semantics<parallel>, #tpu.dimension_semantics<arbitrary>], iteration_bounds = array<i64: 1, 1>, scalar_prefetch = 0 : i64, scratch_operands = 1 : i64, tpu.core_type = #tpu.core_type<tc>, window_params = [{transform_indices = @transform_0, window_bounds = array<i64: 8, 256, 36>}, {pipeline_mode = #tpu.pipeline_mode<synchronous>, transform_indices = @transform_1, window_bounds = array<i64: 36, 128>}, {pipeline_mode = #tpu.pipeline_mode<synchronous>, transform_indices = @transform_2, window_bounds = array<i64: 1, 128>}, {pipeline_mode = #tpu.pipeline_mode<synchronous>, transform_indices = @transform_3, window_bounds = array<i64: 128, 128>}, {pipeline_mode = #tpu.pipeline_mode<synchronous>, transform_indices = @transform_4, window_bounds = array<i64: 1, 128>}, {transform_indices = @transform_5, window_bounds = array<i64: 8, 128>}]} {
    %c0_i32 = arith.constant 0 : i32
    %0 = arith.cmpi eq, %arg1, %c0_i32 : i32
    %1 = arith.extui %0 : i1 to i32
    %c0_i32_0 = arith.constant 0 : i32
    %2 = arith.cmpi ne, %1, %c0_i32_0 : i32
    scf.if %2 {
      %cst_15 = arith.constant 0.000000e+00 : f32
      %20 = vector.broadcast %cst_15 : f32 to vector<8x128xf32>
      %c0_16 = arith.constant 0 : index
      %c0_17 = arith.constant 0 : index
      %21 = vector.load %arg8[%c0_16, %c0_17] : memref<8x128xf32, #tpu.memory_space<vmem>>, vector<8x128xf32>
      tpu.vector_store %arg8[%c0_16, %c0_17], %20 {strides = array<i32>} : memref<8x128xf32, #tpu.memory_space<vmem>>, vector<8x128xf32>,
    } else {
    }
    %c0 = arith.constant 0 : index
    %c0_1 = arith.constant 0 : index
    %c0_2 = arith.constant 0 : index
    %3 = vector.load %arg2[%c0, %c0_1, %c0_2] : memref<8x256x36xbf16, #tpu.memory_space<vmem>>, vector<8x256x36xbf16>
    %4 = vector.shape_cast %3 : vector<8x256x36xbf16> to vector<2048x36xbf16>
    %c0_3 = arith.constant 0 : index
    %c0_4 = arith.constant 0 : index
    %5 = vector.load %arg3[%c0_3, %c0_4] : memref<36x128xbf16, #tpu.memory_space<vmem>>, vector<36x128xbf16>
    %cst = arith.constant dense<0.000000e+00> : vector<2048x128xf32>
    %6 = tpu.matmul %4, %5, %cst {dimension_numbers = #tpu.dot_dimension_numbers<[1], [0], [0], [1], [0, 0, 1, 1], [], []>} : vector<2048x36xbf16>, vector<36x128xbf16>, vector<2048x128xf32> -> vector<2048x128xf32>
    %c0_5 = arith.constant 0 : index
    %c0_6 = arith.constant 0 : index
    %7 = vector.load %arg4[%c0_5, %c0_6] : memref<1x128xf32, #tpu.memory_space<vmem>>, vector<1x128xf32>
    %8 = vector.broadcast %7 : vector<1x128xf32> to vector<2048x128xf32>
    %9 = arith.addf %6, %8 : vector<2048x128xf32>
    %cst_7 = arith.constant 0.000000e+00 : f32
    %10 = vector.broadcast %cst_7 : f32 to vector<2048x128xf32>
    %11 = arith.maximumf %9, %10 : vector<2048x128xf32>
    %c0_8 = arith.constant 0 : index
    %c0_9 = arith.constant 0 : index
    %12 = vector.load %arg8[%c0_8, %c0_9] : memref<8x128xf32, #tpu.memory_space<vmem>>, vector<8x128xf32>
    %13 = vector.shape_cast %11 : vector<2048x128xf32> to vector<8x256x128xf32>
    %cst_10 = arith.constant dense<0.000000e+00> : vector<8x128xf32>
    %14 = vector.multi_reduction <add>, %13, %cst_10 [1] : vector<8x256x128xf32> to vector<8x128xf32>
    %15 = arith.addf %12, %14 : vector<8x128xf32>
    %c0_11 = arith.constant 0 : index
    %c0_12 = arith.constant 0 : index
    %16 = vector.load %arg8[%c0_11, %c0_12] : memref<8x128xf32, #tpu.memory_space<vmem>>, vector<8x128xf32>
    tpu.vector_store %arg8[%c0_11, %c0_12], %15 {strides = array<i32>} : memref<8x128xf32, #tpu.memory_space<vmem>>, vector<8x128xf32>,
    %c0_i32_13 = arith.constant 0 : i32
    %17 = arith.cmpi eq, %arg1, %c0_i32_13 : i32
    %18 = arith.extui %17 : i1 to i32
    %c0_i32_14 = arith.constant 0 : i32
    %19 = arith.cmpi ne, %18, %c0_i32_14 : i32
    scf.if %19 {
      %c0_15 = arith.constant 0 : index
      %c0_16 = arith.constant 0 : index
      %20 = vector.load %arg8[%c0_15, %c0_16] : memref<8x128xf32, #tpu.memory_space<vmem>>, vector<8x128xf32>
      %c0_17 = arith.constant 0 : index
      %c0_18 = arith.constant 0 : index
      %21 = vector.load %arg5[%c0_17, %c0_18] : memref<128x128xf32, #tpu.memory_space<vmem>>, vector<128x128xf32>
      %cst_19 = arith.constant dense<0.000000e+00> : vector<8x128xf32>
      %22 = tpu.matmul %20, %21, %cst_19 {dimension_numbers = #tpu.dot_dimension_numbers<[1], [0], [0], [1], [0, 0, 1, 1], [], []>} : vector<8x128xf32>, vector<128x128xf32>, vector<8x128xf32> -> vector<8x128xf32>
      %c0_20 = arith.constant 0 : index
      %c0_21 = arith.constant 0 : index
      %23 = vector.load %arg6[%c0_20, %c0_21] : memref<1x128xf32, #tpu.memory_space<vmem>>, vector<1x128xf32>
      %24 = vector.broadcast %23 : vector<1x128xf32> to vector<8x128xf32>
      %25 = arith.addf %22, %24 : vector<8x128xf32>
      %c0_22 = arith.constant 0 : index
      %c0_23 = arith.constant 0 : index
      %26 = vector.load %arg7[%c0_22, %c0_23] : memref<8x128xf32, #tpu.memory_space<vmem>>, vector<8x128xf32>
      tpu.vector_store %arg7[%c0_22, %c0_23], %25 {strides = array<i32>} : memref<8x128xf32, #tpu.memory_space<vmem>>, vector<8x128xf32>,
    } else {
    }
    return
  }
  func.func @transform_0(%arg0: i32, %arg1: i32) -> (i32, i32, i32) {
    %c0_i32 = arith.constant 0 : i32
    %c0_i32_0 = arith.constant 0 : i32
    return %arg0, %arg1, %c0_i32 : i32, i32, i32
  }
  func.func @transform_1(%arg0: i32, %arg1: i32) -> (i32, i32) {
    %c0_i32 = arith.constant 0 : i32
    %c0_i32_0 = arith.constant 0 : i32
    %c0_i32_1 = arith.constant 0 : i32
    return %c0_i32, %c0_i32_0 : i32, i32
  }
  func.func @transform_2(%arg0: i32, %arg1: i32) -> (i32, i32) {
    %c0_i32 = arith.constant 0 : i32
    %c0_i32_0 = arith.constant 0 : i32
    %c0_i32_1 = arith.constant 0 : i32
    return %c0_i32, %c0_i32_0 : i32, i32
  }
  func.func @transform_3(%arg0: i32, %arg1: i32) -> (i32, i32) {
    %c0_i32 = arith.constant 0 : i32
    %c0_i32_0 = arith.constant 0 : i32
    %c0_i32_1 = arith.constant 0 : i32
    return %c0_i32, %c0_i32_0 : i32, i32
  }
  func.func @transform_4(%arg0: i32, %arg1: i32) -> (i32, i32) {
    %c0_i32 = arith.constant 0 : i32
    %c0_i32_0 = arith.constant 0 : i32
    %c0_i32_1 = arith.constant 0 : i32
    return %c0_i32, %c0_i32_0 : i32, i32
  }
  func.func @transform_5(%arg0: i32, %arg1: i32) -> (i32, i32) {
    %c0_i32 = arith.constant 0 : i32
    %c0_i32_0 = arith.constant 0 : i32
    return %arg0, %c0_i32 : i32, i32
  }
}

</mosaic_0001>

<llo_original>
// kernel: tpu_custom_call.1
$region0: #{tpu_custom_call.1}
  #allocation0 [shape = 'u32[]', space=smem, size = 0x4, offset = 0x4, fixed_abs, tag = 'smem constant byte address 0x4 - core index']
  #allocation1 [shape = 'u32[144,128]{1,0:T(1,128)}', space=vmem, size = 0x12000, scoped, tag = 'internal scratch']
  #allocation2 [shape = 'f32[8,128]{1,0:T(8,128)}', space=vmem, size = 0x1000, scoped, tag = 'scratch operand']
  %s0 = inlined_call_operand.vmem [shape: bf16[8,256,36], index: 0, kind: input, shape index: {}]
  %s1 = inlined_call_operand.vmem [shape: bf16[36,128], index: 1, kind: input, shape index: {}]
  %s2 = inlined_call_operand.vmem [shape: f32[1,128], index: 2, kind: input, shape index: {}]
  %s3 = inlined_call_operand.vmem [shape: f32[128,128], index: 3, kind: input, shape index: {}]
  %s4 = inlined_call_operand.vmem [shape: f32[1,128], index: 4, kind: input, shape index: {}]
  %s5 = inlined_call_operand.hbm [shape: f32[8,128], index: 5, kind: output, shape index: {}]
  %s6 = sld [smem:[#allocation0]]
  $region38: #{tpu_custom_call.1} parent=0
    _
  %s8 = ssub.s32 1, %s6
  %s9 = scalar_select 0, %s8, %s6
  $region1: #{tpu_custom_call.1} parent=0
    #allocation3 [shape = 'u8[4096]{0}', space=vmem, size = 0x1000, scoped, tag = 'output window, operand 0, single buffered']
    #allocation4 [shape = 's32[1]{0}', space=sflag, size = 0x4, scoped, tag = 'scoped memory for tpu_custom_call.1']
    %10 = vsyncpa [#allocation4], 0
    // Predicated region
    $region2: #{tpu_custom_call.1} parent=1 // pred_check
      _
    $region3: #{tpu_custom_call.1} parent=1 // pred_check_branch
      %12 = sbr.rel (0) target = $region5
    $region4: #{tpu_custom_call.1} parent=1 // pred_region
      _
    $region5: #{tpu_custom_call.1} parent=1 // pred_fallthru
      _
    // Predicated region
    $region6: #{tpu_custom_call.1} parent=1 // pred_check
      _
    $region7: #{tpu_custom_call.1} parent=1 // pred_check_branch
      %14 = sbr.rel (0) target = $region9
    $region8: #{tpu_custom_call.1} parent=1 // pred_region
      _
    $region9: #{tpu_custom_call.1} parent=1 // pred_fallthru
      _
    // Predicated region
    $region10: #{tpu_custom_call.1} parent=1 // pred_check
      _
    $region11: #{tpu_custom_call.1} parent=1 // pred_check_branch
      %16 = sbr.rel (0) target = $region13
    $region12: #{tpu_custom_call.1} parent=1 // pred_region
      _
    $region13: #{tpu_custom_call.1} parent=1 // pred_fallthru
      _
    // Predicated region
    $region14: #{tpu_custom_call.1} parent=1 // pred_check
      _
    $region15: #{tpu_custom_call.1} parent=1 // pred_check_branch
      %18 = sbr.rel (0) target = $region17
    $region16: #{tpu_custom_call.1} parent=1 // pred_region
      _
    $region17: #{tpu_custom_call.1} parent=1 // pred_fallthru
      _
    // Predicated region
    $region18: #{tpu_custom_call.1} parent=1 // pred_check
      _
    $region19: #{tpu_custom_call.1} parent=1 // pred_check_branch
      %20 = sbr.rel (0) target = $region21
    $region20: #{tpu_custom_call.1} parent=1 // pred_region
      _
    $region21: #{tpu_custom_call.1} parent=1 // pred_fallthru
      _
    %p22 = scmp.eq.s32.totalorder 0, 0
    // Predicated region
    $region22: #{tpu_custom_call.1} parent=1 // pred_check
      %p23 = pneg %p22
    $region23: #{tpu_custom_call.1} parent=1 // pred_check_branch
      %25 = sbr.rel (%p23) target = $region25
    $region24: #{tpu_custom_call.1} parent=1 // pred_region
      %26 = vst [vmem:[#allocation2] sm:$0xff] 0.0
    $region25: #{tpu_custom_call.1} parent=1 // pred_fallthru
      _
    %v27 = vld [vmem:[%s0] sm:$0xf]
    %v28 = vld [vmem:[%s0 + $0x4] sm:$0xf]
    %v29 = vld [vmem:[%s0 + $0x8] sm:$0xf]
    %v30 = vld [vmem:[%s0 + $0xc] sm:$0xf]
    %v31 = vld [vmem:[%s0 + $0x10] sm:$0xf]
    %v32 = vld [vmem:[%s0 + $0x14] sm:$0xf]
    %v33 = vld [vmem:[%s0 + $0x18] sm:$0xf]
    %v34 = vld [vmem:[%s0 + $0x1c] sm:$0xf]
    %v35 = vld [vmem:[%s0 + $0x20] sm:$0xf]
    %v36 = vld [vmem:[%s0 + $0x24] sm:$0xf]
    %v37 = vld [vmem:[%s0 + $0x28] sm:$0xf]
    %v38 = vld [vmem:[%s0 + $0x2c] sm:$0xf]
    %v39 = vld [vmem:[%s0 + $0x30] sm:$0xf]
    %v40 = vld [vmem:[%s0 + $0x34] sm:$0xf]
    %v41 = vld [vmem:[%s0 + $0x38] sm:$0xf]
    %v42 = vld [vmem:[%s0 + $0x3c] sm:$0xf]
    %v43 = vld [vmem:[%s0 + $0x40] sm:$0xf]
    %v44 = vld [vmem:[%s0 + $0x44] sm:$0xf]
    %v45 = vld [vmem:[%s0 + $0x48] sm:$0xf]
    %v46 = vld [vmem:[%s0 + $0x4c] sm:$0xf]
    %v47 = vld [vmem:[%s0 + $0x50] sm:$0xf]
    %v48 = vld [vmem:[%s0 + $0x54] sm:$0xf]
    %v49 = vld [vmem:[%s0 + $0x58] sm:$0xf]
    %v50 = vld [vmem:[%s0 + $0x5c] sm:$0xf]
    %v51 = vld [vmem:[%s0 + $0x60] sm:$0xf]
    %v52 = vld [vmem:[%s0 + $0x64] sm:$0xf]
    %v53 = vld [vmem:[%s0 + $0x68] sm:$0xf]
    %v54 = vld [vmem:[%s0 + $0x6c] sm:$0xf]
    %v55 = vld [vmem:[%s0 + $0x70] sm:$0xf]
    %v56 = vld [vmem:[%s0 + $0x74] sm:$0xf]
    %v57 = vld [vmem:[%s0 + $0x78] sm:$0xf]
    %v58 = vld [vmem:[%s0 + $0x7c] sm:$0xf]
    %v59 = vld [vmem:[%s0 + $0x80] sm:$0xf]
    %v60 = vld [vmem:[%s0 + $0x84] sm:$0xf]
    %v61 = vld [vmem:[%s0 + $0x88] sm:$0xf]
    %v62 = vld [vmem:[%s0 + $0x8c] sm:$0xf]
    %v63 = vld [vmem:[%s0 + $0x90] sm:$0xf]
    %v64 = vld [vmem:[%s0 + $0x94] sm:$0xf]
    %v65 = vld [vmem:[%s0 + $0x98] sm:$0xf]
    %v66 = vld [vmem:[%s0 + $0x9c] sm:$0xf]
    %v67 = vld [vmem:[%s0 + $0xa0] sm:$0xf]
    %v68 = vld [vmem:[%s0 + $0xa4] sm:$0xf]
    %v69 = vld [vmem:[%s0 + $0xa8] sm:$0xf]
    %v70 = vld [vmem:[%s0 + $0xac] sm:$0xf]
    %v71 = vld [vmem:[%s0 + $0xb0] sm:$0xf]
    %v72 = vld [vmem:[%s0 + $0xb4] sm:$0xf]
    %v73 = vld [vmem:[%s0 + $0xb8] sm:$0xf]
    %v74 = vld [vmem:[%s0 + $0xbc] sm:$0xf]
    %v75 = vld [vmem:[%s0 + $0xc0] sm:$0xf]
    %v76 = vld [vmem:[%s0 + $0xc4] sm:$0xf]
    %v77 = vld [vmem:[%s0 + $0xc8] sm:$0xf]
    %v78 = vld [vmem:[%s0 + $0xcc] sm:$0xf]
    %v79 = vld [vmem:[%s0 + $0xd0] sm:$0xf]
    %v80 = vld [vmem:[%s0 + $0xd4] sm:$0xf]
    %v81 = vld [vmem:[%s0 + $0xd8] sm:$0xf]
    %v82 = vld [vmem:[%s0 + $0xdc] sm:$0xf]
    %v83 = vld [vmem:[%s0 + $0xe0] sm:$0xf]
    %v84 = vld [vmem:[%s0 + $0xe4] sm:$0xf]
    %v85 = vld [vmem:[%s0 + $0xe8] sm:$0xf]
    %v86 = vld [vmem:[%s0 + $0xec] sm:$0xf]
    %v87 = vld [vmem:[%s0 + $0xf0] sm:$0xf]
    %v88 = vld [vmem:[%s0 + $0xf4] sm:$0xf]
    %v89 = vld [vmem:[%s0 + $0xf8] sm:$0xf]
    %v90 = vld [vmem:[%s0 + $0xfc] sm:$0xf]
    %v91 = vld [vmem:[%s0 + $0x100] sm:$0xf]
    %v92 = vld [vmem:[%s0 + $0x104] sm:$0xf]
    %v93 = vld [vmem:[%s0 + $0x108] sm:$0xf]
    %v94 = vld [vmem:[%s0 + $0x10c] sm:$0xf]
    %v95 = vld [vmem:[%s0 + $0x110] sm:$0xf]
    %v96 = vld [vmem:[%s0 + $0x114] sm:$0xf]
    %v97 = vld [vmem:[%s0 + $0x118] sm:$0xf]
    %v98 = vld [vmem:[%s0 + $0x11c] sm:$0xf]
    %v99 = vld [vmem:[%s0 + $0x120] sm:$0xf]
    %v100 = vld [vmem:[%s0 + $0x124] sm:$0xf]
    %v101 = vld [vmem:[%s0 + $0x128] sm:$0xf]
    %v102 = vld [vmem:[%s0 + $0x12c] sm:$0xf]
    %v103 = vld [vmem:[%s0 + $0x130] sm:$0xf]
    %v104 = vld [vmem:[%s0 + $0x134] sm:$0xf]
    %v105 = vld [vmem:[%s0 + $0x138] sm:$0xf]
    %v106 = vld [vmem:[%s0 + $0x13c] sm:$0xf]
    %v107 = vld [vmem:[%s0 + $0x140] sm:$0xf]
    %v108 = vld [vmem:[%s0 + $0x144] sm:$0xf]
    %v109 = vld [vmem:[%s0 + $0x148] sm:$0xf]
    %v110 = vld [vmem:[%s0 + $0x14c] sm:$0xf]
    %v111 = vld [vmem:[%s0 + $0x150] sm:$0xf]
    %v112 = vld [vmem:[%s0 + $0x154] sm:$0xf]
    %v113 = vld [vmem:[%s0 + $0x158] sm:$0xf]
    %v114 = vld [vmem:[%s0 + $0x15c] sm:$0xf]
    %v115 = vld [vmem:[%s0 + $0x160] sm:$0xf]
    %v116 = vld [vmem:[%s0 + $0x164] sm:$0xf]
    %v117 = vld [vmem:[%s0 + $0x168] sm:$0xf]
    %v118 = vld [vmem:[%s0 + $0x16c] sm:$0xf]
    %v119 = vld [vmem:[%s0 + $0x170] sm:$0xf]
    %v120 = vld [vmem:[%s0 + $0x174] sm:$0xf]
    %v121 = vld [vmem:[%s0 + $0x178] sm:$0xf]
    %v122 = vld [vmem:[%s0 + $0x17c] sm:$0xf]
    %v123 = vld [vmem:[%s0 + $0x180] sm:$0xf]
    %v124 = vld [vmem:[%s0 + $0x184] sm:$0xf]
    %v125 = vld [vmem:[%s0 + $0x188] sm:$0xf]
    %v126 = vld [vmem:[%s0 + $0x18c] sm:$0xf]
    %v127 = vld [vmem:[%s0 + $0x190] sm:$0xf]
    %v128 = vld [vmem:[%s0 + $0x194] sm:$0xf]
    %v129 = vld [vmem:[%s0 + $0x198] sm:$0xf]
    %v130 = vld [vmem:[%s0 + $0x19c] sm:$0xf]
    %v131 = vld [vmem:[%s0 + $0x1a0] sm:$0xf]
    %v132 = vld [vmem:[%s0 + $0x1a4] sm:$0xf]
    %v133 = vld [vmem:[%s0 + $0x1a8] sm:$0xf]
    %v134 = vld [vmem:[%s0 + $0x1ac] sm:$0xf]
    %v135 = vld [vmem:[%s0 + $0x1b0] sm:$0xf]
    %v136 = vld [vmem:[%s0 + $0x1b4] sm:$0xf]
    %v137 = vld [vmem:[%s0 + $0x1b8] sm:$0xf]
    %v138 = vld [vmem:[%s0 + $0x1bc] sm:$0xf]
    %v139 = vld [vmem:[%s0 + $0x1c0] sm:$0xf]
    %v140 = vld [vmem:[%s0 + $0x1c4] sm:$0xf]
    %v141 = vld [vmem:[%s0 + $0x1c8] sm:$0xf]
    %v142 = vld [vmem:[%s0 + $0x1cc] sm:$0xf]
    %v143 = vld [vmem:[%s0 + $0x1d0] sm:$0xf]
    %v144 = vld [vmem:[%s0 + $0x1d4] sm:$0xf]
    %v145 = vld [vmem:[%s0 + $0x1d8] sm:$0xf]
    %v146 = vld [vmem:[%s0 + $0x1dc] sm:$0xf]
    %v147 = vld [vmem:[%s0 + $0x1e0] sm:$0xf]
    %v148 = vld [vmem:[%s0 + $0x1e4] sm:$0xf]
    %v149 = vld [vmem:[%s0 + $0x1e8] sm:$0xf]
    %v150 = vld [vmem:[%s0 + $0x1ec] sm:$0xf]
    %v151 = vld [vmem:[%s0 + $0x1f0] sm:$0xf]
    %v152 = vld [vmem:[%s0 + $0x1f4] sm:$0xf]
    %v153 = vld [vmem:[%s0 + $0x1f8] sm:$0xf]
    %v154 = vld [vmem:[%s0 + $0x1fc] sm:$0xf]
    %v155 = vld [vmem:[%s0 + $0x200] sm:$0xf]
    %v156 = vld [vmem:[%s0 + $0x204] sm:$0xf]
    %v157 = vld [vmem:[%s0 + $0x208] sm:$0xf]
    %v158 = vld [vmem:[%s0 + $0x20c] sm:$0xf]
    %v159 = vld [vmem:[%s0 + $0x210] sm:$0xf]
    %v160 = vld [vmem:[%s0 + $0x214] sm:$0xf]
    %v161 = vld [vmem:[%s0 + $0x218] sm:$0xf]
    %v162 = vld [vmem:[%s0 + $0x21c] sm:$0xf]
    %v163 = vld [vmem:[%s0 + $0x220] sm:$0xf]
    %v164 = vld [vmem:[%s0 + $0x224] sm:$0xf]
    %v165 = vld [vmem:[%s0 + $0x228] sm:$0xf]
    %v166 = vld [vmem:[%s0 + $0x22c] sm:$0xf]
    %v167 = vld [vmem:[%s0 + $0x230] sm:$0xf]
    %v168 = vld [vmem:[%s0 + $0x234] sm:$0xf]
    %v169 = vld [vmem:[%s0 + $0x238] sm:$0xf]
    %v170 = vld [vmem:[%s0 + $0x23c] sm:$0xf]
    %v171 = vld [vmem:[%s0 + $0x240] sm:$0xf]
    %v172 = vld [vmem:[%s0 + $0x244] sm:$0xf]
    %v173 = vld [vmem:[%s0 + $0x248] sm:$0xf]
    %v174 = vld [vmem:[%s0 + $0x24c] sm:$0xf]
    %v175 = vld [vmem:[%s0 + $0x250] sm:$0xf]
    %v176 = vld [vmem:[%s0 + $0x254] sm:$0xf]
    %v177 = vld [vmem:[%s0 + $0x258] sm:$0xf]
    %v178 = vld [vmem:[%s0 + $0x25c] sm:$0xf]
    %v179 = vld [vmem:[%s0 + $0x260] sm:$0xf]
    %v180 = vld [vmem:[%s0 + $0x264] sm:$0xf]
    %v181 = vld [vmem:[%s0 + $0x268] sm:$0xf]
    %v182 = vld [vmem:[%s0 + $0x26c] sm:$0xf]
    %v183 = vld [vmem:[%s0 + $0x270] sm:$0xf]
    %v184 = vld [vmem:[%s0 + $0x274] sm:$0xf]
    %v185 = vld [vmem:[%s0 + $0x278] sm:$0xf]
    %v186 = vld [vmem:[%s0 + $0x27c] sm:$0xf]
    %v187 = vld [vmem:[%s0 + $0x280] sm:$0xf]
    %v188 = vld [vmem:[%s0 + $0x284] sm:$0xf]
    %v189 = vld [vmem:[%s0 + $0x288] sm:$0xf]
    %v190 = vld [vmem:[%s0 + $0x28c] sm:$0xf]
    %v191 = vld [vmem:[%s0 + $0x290] sm:$0xf]
    %v192 = vld [vmem:[%s0 + $0x294] sm:$0xf]
    %v193 = vld [vmem:[%s0 + $0x298] sm:$0xf]
    %v194 = vld [vmem:[%s0 + $0x29c] sm:$0xf]
    %v195 = vld [vmem:[%s0 + $0x2a0] sm:$0xf]
    %v196 = vld [vmem:[%s0 + $0x2a4] sm:$0xf]
    %v197 = vld [vmem:[%s0 + $0x2a8] sm:$0xf]
    %v198 = vld [vmem:[%s0 + $0x2ac] sm:$0xf]
    %v199 = vld [vmem:[%s0 + $0x2b0] sm:$0xf]
    %v200 = vld [vmem:[%s0 + $0x2b4] sm:$0xf]
    %v201 = vld [vmem:[%s0 + $0x2b8] sm:$0xf]
    %v202 = vld [vmem:[%s0 + $0x2bc] sm:$0xf]
    %v203 = vld [vmem:[%s0 + $0x2c0] sm:$0xf]
    %v204 = vld [vmem:[%s0 + $0x2c4] sm:$0xf]
    %v205 = vld [vmem:[%s0 + $0x2c8] sm:$0xf]
    %v206 = vld [vmem:[%s0 + $0x2cc] sm:$0xf]
    %v207 = vld [vmem:[%s0 + $0x2d0] sm:$0xf]
    %v208 = vld [vmem:[%s0 + $0x2d4] sm:$0xf]
    %v209 = vld [vmem:[%s0 + $0x2d8] sm:$0xf]
    %v210 = vld [vmem:[%s0 + $0x2dc] sm:$0xf]
    %v211 = vld [vmem:[%s0 + $0x2e0] sm:$0xf]
    %v212 = vld [vmem:[%s0 + $0x2e4] sm:$0xf]
    %v213 = vld [vmem:[%s0 + $0x2e8] sm:$0xf]
    %v214 = vld [vmem:[%s0 + $0x2ec] sm:$0xf]
    %v215 = vld [vmem:[%s0 + $0x2f0] sm:$0xf]
    %v216 = vld [vmem:[%s0 + $0x2f4] sm:$0xf]
    %v217 = vld [vmem:[%s0 + $0x2f8] sm:$0xf]
    %v218 = vld [vmem:[%s0 + $0x2fc] sm:$0xf]
    %v219 = vld [vmem:[%s0 + $0x300] sm:$0xf]
    %v220 = vld [vmem:[%s0 + $0x304] sm:$0xf]
    %v221 = vld [vmem:[%s0 + $0x308] sm:$0xf]
    %v222 = vld [vmem:[%s0 + $0x30c] sm:$0xf]
    %v223 = vld [vmem:[%s0 + $0x310] sm:$0xf]
    %v224 = vld [vmem:[%s0 + $0x314] sm:$0xf]
    %v225 = vld [vmem:[%s0 + $0x318] sm:$0xf]
    %v226 = vld [vmem:[%s0 + $0x31c] sm:$0xf]
    %v227 = vld [vmem:[%s0 + $0x320] sm:$0xf]
    %v228 = vld [vmem:[%s0 + $0x324] sm:$0xf]
    %v229 = vld [vmem:[%s0 + $0x328] sm:$0xf]
    %v230 = vld [vmem:[%s0 + $0x32c] sm:$0xf]
    %v231 = vld [vmem:[%s0 + $0x330] sm:$0xf]
    %v232 = vld [vmem:[%s0 + $0x334] sm:$0xf]
    %v233 = vld [vmem:[%s0 + $0x338] sm:$0xf]
    %v234 = vld [vmem:[%s0 + $0x33c] sm:$0xf]
    %v235 = vld [vmem:[%s0 + $0x340] sm:$0xf]
    %v236 = vld [vmem:[%s0 + $0x344] sm:$0xf]
    %v237 = vld [vmem:[%s0 + $0x348] sm:$0xf]
    %v238 = vld [vmem:[%s0 + $0x34c] sm:$0xf]
    %v239 = vld [vmem:[%s0 + $0x350] sm:$0xf]
    %v240 = vld [vmem:[%s0 + $0x354] sm:$0xf]
    %v241 = vld [vmem:[%s0 + $0x358] sm:$0xf]
    %v242 = vld [vmem:[%s0 + $0x35c] sm:$0xf]
    %v243 = vld [vmem:[%s0 + $0x360] sm:$0xf]
    %v244 = vld [vmem:[%s0 + $0x364] sm:$0xf]
    %v245 = vld [vmem:[%s0 + $0x368] sm:$0xf]
    %v246 = vld [vmem:[%s0 + $0x36c] sm:$0xf]
    %v247 = vld [vmem:[%s0 + $0x370] sm:$0xf]
    %v248 = vld [vmem:[%s0 + $0x374] sm:$0xf]
    %v249 = vld [vmem:[%s0 + $0x378] sm:$0xf]
    %v250 = vld [vmem:[%s0 + $0x37c] sm:$0xf]
    %v251 = vld [vmem:[%s0 + $0x380] sm:$0xf]
    %v252 = vld [vmem:[%s0 + $0x384] sm:$0xf]
    %v253 = vld [vmem:[%s0 + $0x388] sm:$0xf]
    %v254 = vld [vmem:[%s0 + $0x38c] sm:$0xf]
    %v255 = vld [vmem:[%s0 + $0x390] sm:$0xf]
    %v256 = vld [vmem:[%s0 + $0x394] sm:$0xf]
    %v257 = vld [vmem:[%s0 + $0x398] sm:$0xf]
    %v258 = vld [vmem:[%s0 + $0x39c] sm:$0xf]
    %v259 = vld [vmem:[%s0 + $0x3a0] sm:$0xf]
    %v260 = vld [vmem:[%s0 + $0x3a4] sm:$0xf]
    %v261 = vld [vmem:[%s0 + $0x3a8] sm:$0xf]
    %v262 = vld [vmem:[%s0 + $0x3ac] sm:$0xf]
    %v263 = vld [vmem:[%s0 + $0x3b0] sm:$0xf]
    %v264 = vld [vmem:[%s0 + $0x3b4] sm:$0xf]
    %v265 = vld [vmem:[%s0 + $0x3b8] sm:$0xf]
    %v266 = vld [vmem:[%s0 + $0x3bc] sm:$0xf]
    %v267 = vld [vmem:[%s0 + $0x3c0] sm:$0xf]
    %v268 = vld [vmem:[%s0 + $0x3c4] sm:$0xf]
    %v269 = vld [vmem:[%s0 + $0x3c8] sm:$0xf]
    %v270 = vld [vmem:[%s0 + $0x3cc] sm:$0xf]
    %v271 = vld [vmem:[%s0 + $0x3d0] sm:$0xf]
    %v272 = vld [vmem:[%s0 + $0x3d4] sm:$0xf]
    %v273 = vld [vmem:[%s0 + $0x3d8] sm:$0xf]
    %v274 = vld [vmem:[%s0 + $0x3dc] sm:$0xf]
    %v275 = vld [vmem:[%s0 + $0x3e0] sm:$0xf]
    %v276 = vld [vmem:[%s0 + $0x3e4] sm:$0xf]
    %v277 = vld [vmem:[%s0 + $0x3e8] sm:$0xf]
    %v278 = vld [vmem:[%s0 + $0x3ec] sm:$0xf]
    %v279 = vld [vmem:[%s0 + $0x3f0] sm:$0xf]
    %v280 = vld [vmem:[%s0 + $0x3f4] sm:$0xf]
    %v281 = vld [vmem:[%s0 + $0x3f8] sm:$0xf]
    %v282 = vld [vmem:[%s0 + $0x3fc] sm:$0xf]
    %v283 = vld [vmem:[%s1] sm:$0xf]
    %v284 = vld [vmem:[%s1 + $0x4] sm:$0xf]
    %v285 = vld [vmem:[%s1 + $0x8] sm:$0xf]
    %v286 = vld [vmem:[%s1 + $0xc] sm:$0xf]
    %v287 = vld [vmem:[%s1 + $0x10] sm:$0x3]
    %v288 = vld [vmem:[%s2] sm:$0x1]
    %v290 = vlaneseq
    %v291 = vshrl.u32 %v290, 7
    %v292 = vsub.s32 0, %v291
    %v293 = vrot.slane %v288, %v292
    %v551 = vunpack.c.l.b16 %v27
    %v552 = vunpack.c.l.b16 %v28
    %v553 = vunpack.c.l.b16 %v29
    %v554 = vunpack.c.l.b16 %v30
    %v555 = vunpack.c.l.b16 %v31
    %v556 = vunpack.c.l.b16 %v32
    %v557 = vunpack.c.l.b16 %v33
    %v558 = vunpack.c.l.b16 %v34
    %v559 = vunpack.c.l.b16 %v35
    %v560 = vunpack.c.l.b16 %v36
    %v561 = vunpack.c.l.b16 %v37
    %v562 = vunpack.c.l.b16 %v38
    %v563 = vunpack.c.l.b16 %v39
    %v564 = vunpack.c.l.b16 %v40
    %v565 = vunpack.c.l.b16 %v41
    %v566 = vunpack.c.l.b16 %v42
    %v567 = vunpack.c.l.b16 %v43
    %v568 = vunpack.c.l.b16 %v44
    %v569 = vunpack.c.l.b16 %v45
    %v570 = vunpack.c.l.b16 %v46
    %v571 = vunpack.c.l.b16 %v47
    %v572 = vunpack.c.l.b16 %v48
    %v573 = vunpack.c.l.b16 %v49
    %v574 = vunpack.c.l.b16 %v50
    %v575 = vunpack.c.l.b16 %v51
    %v576 = vunpack.c.l.b16 %v52
    %v577 = vunpack.c.l.b16 %v53
    %v578 = vunpack.c.l.b16 %v54
    %v579 = vunpack.c.l.b16 %v55
    %v580 = vunpack.c.l.b16 %v56
    %v581 = vunpack.c.l.b16 %v57
    %v582 = vunpack.c.l.b16 %v58
    %v583 = vunpack.c.l.b16 %v59
    %v584 = vunpack.c.l.b16 %v60
    %v585 = vunpack.c.l.b16 %v61
    %v586 = vunpack.c.l.b16 %v62
    %v587 = vunpack.c.l.b16 %v63
    %v588 = vunpack.c.l.b16 %v64
    %v589 = vunpack.c.l.b16 %v65
    %v590 = vunpack.c.l.b16 %v66
    %v591 = vunpack.c.l.b16 %v67
    %v592 = vunpack.c.l.b16 %v68
    %v593 = vunpack.c.l.b16 %v69
    %v594 = vunpack.c.l.b16 %v70
    %v595 = vunpack.c.l.b16 %v71
    %v596 = vunpack.c.l.b16 %v72
    %v597 = vunpack.c.l.b16 %v73
    %v598 = vunpack.c.l.b16 %v74
    %v599 = vunpack.c.l.b16 %v75
    %v600 = vunpack.c.l.b16 %v76
    %v601 = vunpack.c.l.b16 %v77
    %v602 = vunpack.c.l.b16 %v78
    %v603 = vunpack.c.l.b16 %v79
    %v604 = vunpack.c.l.b16 %v80
    %v605 = vunpack.c.l.b16 %v81
    %v606 = vunpack.c.l.b16 %v82
    %v607 = vunpack.c.l.b16 %v83
    %v608 = vunpack.c.l.b16 %v84
    %v609 = vunpack.c.l.b16 %v85
    %v610 = vunpack.c.l.b16 %v86
    %v611 = vunpack.c.l.b16 %v87
    %v612 = vunpack.c.l.b16 %v88
    %v613 = vunpack.c.l.b16 %v89
    %v614 = vunpack.c.l.b16 %v90
    %v615 = vunpack.c.l.b16 %v91
    %v616 = vunpack.c.l.b16 %v92
    %v617 = vunpack.c.l.b16 %v93
    %v618 = vunpack.c.l.b16 %v94
    %v619 = vunpack.c.l.b16 %v95
    %v620 = vunpack.c.l.b16 %v96
    %v621 = vunpack.c.l.b16 %v97
    %v622 = vunpack.c.l.b16 %v98
    %v623 = vunpack.c.l.b16 %v99
    %v624 = vunpack.c.l.b16 %v100
    %v625 = vunpack.c.l.b16 %v101
    %v626 = vunpack.c.l.b16 %v102
    %v627 = vunpack.c.l.b16 %v103
    %v628 = vunpack.c.l.b16 %v104
    %v629 = vunpack.c.l.b16 %v105
    %v630 = vunpack.c.l.b16 %v106
    %v631 = vunpack.c.l.b16 %v107
    %v632 = vunpack.c.l.b16 %v108
    %v633 = vunpack.c.l.b16 %v109
    %v634 = vunpack.c.l.b16 %v110
    %v635 = vunpack.c.l.b16 %v111
    %v636 = vunpack.c.l.b16 %v112
    %v637 = vunpack.c.l.b16 %v113
    %v638 = vunpack.c.l.b16 %v114
    %v639 = vunpack.c.l.b16 %v115
    %v640 = vunpack.c.l.b16 %v116
    %v641 = vunpack.c.l.b16 %v117
    %v642 = vunpack.c.l.b16 %v118
    %v643 = vunpack.c.l.b16 %v119
    %v644 = vunpack.c.l.b16 %v120
    %v645 = vunpack.c.l.b16 %v121
    %v646 = vunpack.c.l.b16 %v122
    %v647 = vunpack.c.l.b16 %v123
    %v648 = vunpack.c.l.b16 %v124
    %v649 = vunpack.c.l.b16 %v125
    %v650 = vunpack.c.l.b16 %v126
    %v651 = vunpack.c.l.b16 %v127
    %v652 = vunpack.c.l.b16 %v128
    %v653 = vunpack.c.l.b16 %v129
    %v654 = vunpack.c.l.b16 %v130
    %v655 = vunpack.c.l.b16 %v131
    %v656 = vunpack.c.l.b16 %v132
    %v657 = vunpack.c.l.b16 %v133
    %v658 = vunpack.c.l.b16 %v134
    %v659 = vunpack.c.l.b16 %v135
    %v660 = vunpack.c.l.b16 %v136
    %v661 = vunpack.c.l.b16 %v137
    %v662 = vunpack.c.l.b16 %v138
    %v663 = vunpack.c.l.b16 %v139
    %v664 = vunpack.c.l.b16 %v140
    %v665 = vunpack.c.l.b16 %v141
    %v666 = vunpack.c.l.b16 %v142
    %v667 = vunpack.c.l.b16 %v143
    %v668 = vunpack.c.l.b16 %v144
    %v669 = vunpack.c.l.b16 %v145
    %v670 = vunpack.c.l.b16 %v146
    %v671 = vunpack.c.l.b16 %v147
    %v672 = vunpack.c.l.b16 %v148
    %v673 = vunpack.c.l.b16 %v149
    %v674 = vunpack.c.l.b16 %v150
    %v675 = vunpack.c.l.b16 %v151
    %v676 = vunpack.c.l.b16 %v152
    %v677 = vunpack.c.l.b16 %v153
    %v678 = vunpack.c.l.b16 %v154
    %v679 = vunpack.c.l.b16 %v155
    %v680 = vunpack.c.l.b16 %v156
    %v681 = vunpack.c.l.b16 %v157
    %v682 = vunpack.c.l.b16 %v158
    %v683 = vunpack.c.l.b16 %v159
    %v684 = vunpack.c.l.b16 %v160
    %v685 = vunpack.c.l.b16 %v161
    %v686 = vunpack.c.l.b16 %v162
    %v687 = vunpack.c.l.b16 %v163
    %v688 = vunpack.c.l.b16 %v164
    %v689 = vunpack.c.l.b16 %v165
    %v690 = vunpack.c.l.b16 %v166
    %v691 = vunpack.c.l.b16 %v167
    %v692 = vunpack.c.l.b16 %v168
    %v693 = vunpack.c.l.b16 %v169
    %v694 = vunpack.c.l.b16 %v170
    %v695 = vunpack.c.l.b16 %v171
    %v696 = vunpack.c.l.b16 %v172
    %v697 = vunpack.c.l.b16 %v173
    %v698 = vunpack.c.l.b16 %v174
    %v699 = vunpack.c.l.b16 %v175
    %v700 = vunpack.c.l.b16 %v176
    %v701 = vunpack.c.l.b16 %v177
    %v702 = vunpack.c.l.b16 %v178
    %v703 = vunpack.c.l.b16 %v179
    %v704 = vunpack.c.l.b16 %v180
    %v705 = vunpack.c.l.b16 %v181
    %v706 = vunpack.c.l.b16 %v182
    %v707 = vunpack.c.l.b16 %v183
    %v708 = vunpack.c.l.b16 %v184
    %v709 = vunpack.c.l.b16 %v185
    %v710 = vunpack.c.l.b16 %v186
    %v711 = vunpack.c.l.b16 %v187
    %v712 = vunpack.c.l.b16 %v188
    %v713 = vunpack.c.l.b16 %v189
    %v714 = vunpack.c.l.b16 %v190
    %v715 = vunpack.c.l.b16 %v191
    %v716 = vunpack.c.l.b16 %v192
    %v717 = vunpack.c.l.b16 %v193
    %v718 = vunpack.c.l.b16 %v194
    %v719 = vunpack.c.l.b16 %v195
    %v720 = vunpack.c.l.b16 %v196
    %v721 = vunpack.c.l.b16 %v197
    %v722 = vunpack.c.l.b16 %v198
    %v723 = vunpack.c.l.b16 %v199
    %v724 = vunpack.c.l.b16 %v200
    %v725 = vunpack.c.l.b16 %v201
    %v726 = vunpack.c.l.b16 %v202
    %v727 = vunpack.c.l.b16 %v203
    %v728 = vunpack.c.l.b16 %v204
    %v729 = vunpack.c.l.b16 %v205
    %v730 = vunpack.c.l.b16 %v206
    %v731 = vunpack.c.l.b16 %v207
    %v732 = vunpack.c.l.b16 %v208
    %v733 = vunpack.c.l.b16 %v209
    %v734 = vunpack.c.l.b16 %v210
    %v735 = vunpack.c.l.b16 %v211
    %v736 = vunpack.c.l.b16 %v212
    %v737 = vunpack.c.l.b16 %v213
    %v738 = vunpack.c.l.b16 %v214
    %v739 = vunpack.c.l.b16 %v215
    %v740 = vunpack.c.l.b16 %v216
    %v741 = vunpack.c.l.b16 %v217
    %v742 = vunpack.c.l.b16 %v218
    %v743 = vunpack.c.l.b16 %v219
    %v744 = vunpack.c.l.b16 %v220
    %v745 = vunpack.c.l.b16 %v221
    %v746 = vunpack.c.l.b16 %v222
    %v747 = vunpack.c.l.b16 %v223
    %v748 = vunpack.c.l.b16 %v224
    %v749 = vunpack.c.l.b16 %v225
    %v750 = vunpack.c.l.b16 %v226
    %v751 = vunpack.c.l.b16 %v227
    %v752 = vunpack.c.l.b16 %v228
    %v753 = vunpack.c.l.b16 %v229
    %v754 = vunpack.c.l.b16 %v230
    %v755 = vunpack.c.l.b16 %v231
    %v756 = vunpack.c.l.b16 %v232
    %v757 = vunpack.c.l.b16 %v233
    %v758 = vunpack.c.l.b16 %v234
    %v759 = vunpack.c.l.b16 %v235
    %v760 = vunpack.c.l.b16 %v236
    %v761 = vunpack.c.l.b16 %v237
    %v762 = vunpack.c.l.b16 %v238
    %v763 = vunpack.c.l.b16 %v239
    %v764 = vunpack.c.l.b16 %v240
    %v765 = vunpack.c.l.b16 %v241
    %v766 = vunpack.c.l.b16 %v242
    %v767 = vunpack.c.l.b16 %v243
    %v768 = vunpack.c.l.b16 %v244
    %v769 = vunpack.c.l.b16 %v245
    %v770 = vunpack.c.l.b16 %v246
    %v771 = vunpack.c.l.b16 %v247
    %v772 = vunpack.c.l.b16 %v248
    %v773 = vunpack.c.l.b16 %v249
    %v774 = vunpack.c.l.b16 %v250
    %v775 = vunpack.c.l.b16 %v251
    %v776 = vunpack.c.l.b16 %v252
    %v777 = vunpack.c.l.b16 %v253
    %v778 = vunpack.c.l.b16 %v254
    %v779 = vunpack.c.l.b16 %v255
    %v780 = vunpack.c.l.b16 %v256
    %v781 = vunpack.c.l.b16 %v257
    %v782 = vunpack.c.l.b16 %v258
    %v783 = vunpack.c.l.b16 %v259
    %v784 = vunpack.c.l.b16 %v260
    %v785 = vunpack.c.l.b16 %v261
    %v786 = vunpack.c.l.b16 %v262
    %v787 = vunpack.c.l.b16 %v263
    %v788 = vunpack.c.l.b16 %v264
    %v789 = vunpack.c.l.b16 %v265
    %v790 = vunpack.c.l.b16 %v266
    %v791 = vunpack.c.l.b16 %v267
    %v792 = vunpack.c.l.b16 %v268
    %v793 = vunpack.c.l.b16 %v269
    %v794 = vunpack.c.l.b16 %v270
    %v795 = vunpack.c.l.b16 %v271
    %v796 = vunpack.c.l.b16 %v272
    %v797 = vunpack.c.l.b16 %v273
    %v798 = vunpack.c.l.b16 %v274
    %v799 = vunpack.c.l.b16 %v275
    %v800 = vunpack.c.l.b16 %v276
    %v801 = vunpack.c.l.b16 %v277
    %v802 = vunpack.c.l.b16 %v278
    %v803 = vunpack.c.l.b16 %v279
    %v804 = vunpack.c.l.b16 %v280
    %v805 = vunpack.c.l.b16 %v281
    %v806 = vunpack.c.l.b16 %v282
    %v807 = vpack.c.b16 %v552, %v551
    %v808 = vpack.c.b16 %v554, %v553
    %v809 = vpack.c.b16 %v556, %v555
    %v810 = vpack.c.b16 %v558, %v557
    %v811 = vpack.c.b16 %v560, %v559
    %v812 = vpack.c.b16 %v562, %v561
    %v813 = vpack.c.b16 %v564, %v563
    %v814 = vpack.c.b16 %v566, %v565
    %v815 = vpack.c.b16 %v568, %v567
    %v816 = vpack.c.b16 %v570, %v569
    %v817 = vpack.c.b16 %v572, %v571
    %v818 = vpack.c.b16 %v574, %v573
    %v819 = vpack.c.b16 %v576, %v575
    %v820 = vpack.c.b16 %v578, %v577
    %v821 = vpack.c.b16 %v580, %v579
    %v822 = vpack.c.b16 %v582, %v581
    %v823 = vpack.c.b16 %v584, %v583
    %v824 = vpack.c.b16 %v586, %v585
    %v825 = vpack.c.b16 %v588, %v587
    %v826 = vpack.c.b16 %v590, %v589
    %v827 = vpack.c.b16 %v592, %v591
    %v828 = vpack.c.b16 %v594, %v593
    %v829 = vpack.c.b16 %v596, %v595
    %v830 = vpack.c.b16 %v598, %v597
    %v831 = vpack.c.b16 %v600, %v599
    %v832 = vpack.c.b16 %v602, %v601
    %v833 = vpack.c.b16 %v604, %v603
    %v834 = vpack.c.b16 %v606, %v605
    %v835 = vpack.c.b16 %v608, %v607
    %v836 = vpack.c.b16 %v610, %v609
    %v837 = vpack.c.b16 %v612, %v611
    %v838 = vpack.c.b16 %v614, %v613
    %v839 = vpack.c.b16 %v616, %v615
    %v840 = vpack.c.b16 %v618, %v617
    %v841 = vpack.c.b16 %v620, %v619
    %v842 = vpack.c.b16 %v622, %v621
    %v843 = vpack.c.b16 %v624, %v623
    %v844 = vpack.c.b16 %v626, %v625
    %v845 = vpack.c.b16 %v628, %v627
    %v846 = vpack.c.b16 %v630, %v629
    %v847 = vpack.c.b16 %v632, %v631
    %v848 = vpack.c.b16 %v634, %v633
    %v849 = vpack.c.b16 %v636, %v635
    %v850 = vpack.c.b16 %v638, %v637
    %v851 = vpack.c.b16 %v640, %v639
    %v852 = vpack.c.b16 %v642, %v641
    %v853 = vpack.c.b16 %v644, %v643
    %v854 = vpack.c.b16 %v646, %v645
    %v855 = vpack.c.b16 %v648, %v647
    %v856 = vpack.c.b16 %v650, %v649
    %v857 = vpack.c.b16 %v652, %v651
    %v858 = vpack.c.b16 %v654, %v653
    %v859 = vpack.c.b16 %v656, %v655
    %v860 = vpack.c.b16 %v658, %v657
    %v861 = vpack.c.b16 %v660, %v659
    %v862 = vpack.c.b16 %v662, %v661
    %v863 = vpack.c.b16 %v664, %v663
    %v864 = vpack.c.b16 %v666, %v665
    %v865 = vpack.c.b16 %v668, %v667
    %v866 = vpack.c.b16 %v670, %v669
    %v867 = vpack.c.b16 %v672, %v671
    %v868 = vpack.c.b16 %v674, %v673
    %v869 = vpack.c.b16 %v676, %v675
    %v870 = vpack.c.b16 %v678, %v677
    %v871 = vpack.c.b16 %v680, %v679
    %v872 = vpack.c.b16 %v682, %v681
    %v873 = vpack.c.b16 %v684, %v683
    %v874 = vpack.c.b16 %v686, %v685
    %v875 = vpack.c.b16 %v688, %v687
    %v876 = vpack.c.b16 %v690, %v689
    %v877 = vpack.c.b16 %v692, %v691
    %v878 = vpack.c.b16 %v694, %v693
    %v879 = vpack.c.b16 %v696, %v695
    %v880 = vpack.c.b16 %v698, %v697
    %v881 = vpack.c.b16 %v700, %v699
    %v882 = vpack.c.b16 %v702, %v701
    %v883 = vpack.c.b16 %v704, %v703
    %v884 = vpack.c.b16 %v706, %v705
    %v885 = vpack.c.b16 %v708, %v707
    %v886 = vpack.c.b16 %v710, %v709
    %v887 = vpack.c.b16 %v712, %v711
    %v888 = vpack.c.b16 %v714, %v713
    %v889 = vpack.c.b16 %v716, %v715
    %v890 = vpack.c.b16 %v718, %v717
    %v891 = vpack.c.b16 %v720, %v719
    %v892 = vpack.c.b16 %v722, %v721
    %v893 = vpack.c.b16 %v724, %v723
    %v894 = vpack.c.b16 %v726, %v725
    %v895 = vpack.c.b16 %v728, %v727
    %v896 = vpack.c.b16 %v730, %v729
    %v897 = vpack.c.b16 %v732, %v731
    %v898 = vpack.c.b16 %v734, %v733
    %v899 = vpack.c.b16 %v736, %v735
    %v900 = vpack.c.b16 %v738, %v737
    %v901 = vpack.c.b16 %v740, %v739
    %v902 = vpack.c.b16 %v742, %v741
    %v903 = vpack.c.b16 %v744, %v743
    %v904 = vpack.c.b16 %v746, %v745
    %v905 = vpack.c.b16 %v748, %v747
    %v906 = vpack.c.b16 %v750, %v749
    %v907 = vpack.c.b16 %v752, %v751
    %v908 = vpack.c.b16 %v754, %v753
    %v909 = vpack.c.b16 %v756, %v755
    %v910 = vpack.c.b16 %v758, %v757
    %v911 = vpack.c.b16 %v760, %v759
    %v912 = vpack.c.b16 %v762, %v761
    %v913 = vpack.c.b16 %v764, %v763
    %v914 = vpack.c.b16 %v766, %v765
    %v915 = vpack.c.b16 %v768, %v767
    %v916 = vpack.c.b16 %v770, %v769
    %v917 = vpack.c.b16 %v772, %v771
    %v918 = vpack.c.b16 %v774, %v773
    %v919 = vpack.c.b16 %v776, %v775
    %v920 = vpack.c.b16 %v778, %v777
    %v921 = vpack.c.b16 %v780, %v779
    %v922 = vpack.c.b16 %v782, %v781
    %v923 = vpack.c.b16 %v784, %v783
    %v924 = vpack.c.b16 %v786, %v785
    %v925 = vpack.c.b16 %v788, %v787
    %v926 = vpack.c.b16 %v790, %v789
    %v927 = vpack.c.b16 %v792, %v791
    %v928 = vpack.c.b16 %v794, %v793
    %v929 = vpack.c.b16 %v796, %v795
    %v930 = vpack.c.b16 %v798, %v797
    %v931 = vpack.c.b16 %v800, %v799
    %v932 = vpack.c.b16 %v802, %v801
    %v933 = vpack.c.b16 %v804, %v803
    %v934 = vpack.c.b16 %v806, %v805
    %v940 = vunpack.c.l.b16 %v283
    %v941 = vunpack.c.l.b16 %v284
    %v942 = vunpack.c.l.b16 %v285
    %v943 = vunpack.c.l.b16 %v286
    %v944 = vunpack.c.l.b16 %v287
    %v945 = vpack.c.b16 %v941, %v940
    %v946 = vpack.c.b16 %v943, %v942
    %v947 = vpack.c.b16 %v944, %v944
    %vm950 = vcmask 293888
    %v952 = vsel %vm950, %v807, 0
    %v955 = vsel %vm950, %v808, 0
    %v958 = vsel %vm950, %v809, 0
    %v961 = vsel %vm950, %v810, 0
    %v964 = vsel %vm950, %v811, 0
    %v967 = vsel %vm950, %v812, 0
    %v970 = vsel %vm950, %v813, 0
    %v973 = vsel %vm950, %v814, 0
    %v976 = vsel %vm950, %v815, 0
    %v979 = vsel %vm950, %v816, 0
    %v982 = vsel %vm950, %v817, 0
    %v985 = vsel %vm950, %v818, 0
    %v988 = vsel %vm950, %v819, 0
    %v991 = vsel %vm950, %v820, 0
    %v994 = vsel %vm950, %v821, 0
    %v997 = vsel %vm950, %v822, 0
    %v1000 = vsel %vm950, %v823, 0
    %v1003 = vsel %vm950, %v824, 0
    %v1006 = vsel %vm950, %v825, 0
    %v1009 = vsel %vm950, %v826, 0
    %v1012 = vsel %vm950, %v827, 0
    %v1015 = vsel %vm950, %v828, 0
    %v1018 = vsel %vm950, %v829, 0
    %v1021 = vsel %vm950, %v830, 0
    %v1024 = vsel %vm950, %v831, 0
    %v1027 = vsel %vm950, %v832, 0
    %v1030 = vsel %vm950, %v833, 0
    %v1033 = vsel %vm950, %v834, 0
    %v1036 = vsel %vm950, %v835, 0
    %v1039 = vsel %vm950, %v836, 0
    %v1042 = vsel %vm950, %v837, 0
    %v1045 = vsel %vm950, %v838, 0
    %v1048 = vsel %vm950, %v839, 0
    %v1051 = vsel %vm950, %v840, 0
    %v1054 = vsel %vm950, %v841, 0
    %v1057 = vsel %vm950, %v842, 0
    %v1060 = vsel %vm950, %v843, 0
    %v1063 = vsel %vm950, %v844, 0
    %v1066 = vsel %vm950, %v845, 0
    %v1069 = vsel %vm950, %v846, 0
    %v1072 = vsel %vm950, %v847, 0
    %v1075 = vsel %vm950, %v848, 0
    %v1078 = vsel %vm950, %v849, 0
    %v1081 = vsel %vm950, %v850, 0
    %v1084 = vsel %vm950, %v851, 0
    %v1087 = vsel %vm950, %v852, 0
    %v1090 = vsel %vm950, %v853, 0
    %v1093 = vsel %vm950, %v854, 0
    %v1096 = vsel %vm950, %v855, 0
    %v1099 = vsel %vm950, %v856, 0
    %v1102 = vsel %vm950, %v857, 0
    %v1105 = vsel %vm950, %v858, 0
    %v1108 = vsel %vm950, %v859, 0
    %v1111 = vsel %vm950, %v860, 0
    %v1114 = vsel %vm950, %v861, 0
    %v1117 = vsel %vm950, %v862, 0
    %v1120 = vsel %vm950, %v863, 0
    %v1123 = vsel %vm950, %v864, 0
    %v1126 = vsel %vm950, %v865, 0
    %v1129 = vsel %vm950, %v866, 0
    %v1132 = vsel %vm950, %v867, 0
    %v1135 = vsel %vm950, %v868, 0
    %v1138 = vsel %vm950, %v869, 0
    %v1141 = vsel %vm950, %v870, 0
    %v1144 = vsel %vm950, %v871, 0
    %v1147 = vsel %vm950, %v872, 0
    %v1150 = vsel %vm950, %v873, 0
    %v1153 = vsel %vm950, %v874, 0
    %v1156 = vsel %vm950, %v875, 0
    %v1159 = vsel %vm950, %v876, 0
    %v1162 = vsel %vm950, %v877, 0
    %v1165 = vsel %vm950, %v878, 0
    %v1168 = vsel %vm950, %v879, 0
    %v1171 = vsel %vm950, %v880, 0
    %v1174 = vsel %vm950, %v881, 0
    %v1177 = vsel %vm950, %v882, 0
    %v1180 = vsel %vm950, %v883, 0
    %v1183 = vsel %vm950, %v884, 0
    %v1186 = vsel %vm950, %v885, 0
    %v1189 = vsel %vm950, %v886, 0
    %v1192 = vsel %vm950, %v887, 0
    %v1195 = vsel %vm950, %v888, 0
    %v1198 = vsel %vm950, %v889, 0
    %v1201 = vsel %vm950, %v890, 0
    %v1204 = vsel %vm950, %v891, 0
    %v1207 = vsel %vm950, %v892, 0
    %v1210 = vsel %vm950, %v893, 0
    %v1213 = vsel %vm950, %v894, 0
    %v1216 = vsel %vm950, %v895, 0
    %v1219 = vsel %vm950, %v896, 0
    %v1222 = vsel %vm950, %v897, 0
    %v1225 = vsel %vm950, %v898, 0
    %v1228 = vsel %vm950, %v899, 0
    %v1231 = vsel %vm950, %v900, 0
    %v1234 = vsel %vm950, %v901, 0
    %v1237 = vsel %vm950, %v902, 0
    %v1240 = vsel %vm950, %v903, 0
    %v1243 = vsel %vm950, %v904, 0
    %v1246 = vsel %vm950, %v905, 0
    %v1249 = vsel %vm950, %v906, 0
    %v1252 = vsel %vm950, %v907, 0
    %v1255 = vsel %vm950, %v908, 0
    %v1258 = vsel %vm950, %v909, 0
    %v1261 = vsel %vm950, %v910, 0
    %v1264 = vsel %vm950, %v911, 0
    %v1267 = vsel %vm950, %v912, 0
    %v1270 = vsel %vm950, %v913, 0
    %v1273 = vsel %vm950, %v914, 0
    %v1276 = vsel %vm950, %v915, 0
    %v1279 = vsel %vm950, %v916, 0
    %v1282 = vsel %vm950, %v917, 0
    %v1285 = vsel %vm950, %v918, 0
    %v1288 = vsel %vm950, %v919, 0
    %v1291 = vsel %vm950, %v920, 0
    %v1294 = vsel %vm950, %v921, 0
    %v1297 = vsel %vm950, %v922, 0
    %v1300 = vsel %vm950, %v923, 0
    %v1303 = vsel %vm950, %v924, 0
    %v1306 = vsel %vm950, %v925, 0
    %v1309 = vsel %vm950, %v926, 0
    %v1312 = vsel %vm950, %v927, 0
    %v1315 = vsel %vm950, %v928, 0
    %v1318 = vsel %vm950, %v929, 0
    %v1321 = vsel %vm950, %v930, 0
    %v1324 = vsel %vm950, %v931, 0
    %v1327 = vsel %vm950, %v932, 0
    %v1330 = vsel %vm950, %v933, 0
    %v1333 = vsel %vm950, %v934, 0
    %vm1335 = vcmask 1041408
    %v1337 = vsel %vm1335, %v947, 0
    %1339 = vmatprep.subr.bf16.mxu0 0
    %1340 = vmatpush1.bf16.msra.mxu0 0
    %1341 = vmatprep.subr.bf16.mxu0 0
    %1342 = vmatpush1.bf16.msra.mxu0 0
    %1343 = vmatprep.subr.bf16.mxu0 0
    %1344 = vmatpush1.bf16.msra.mxu0 0
    %1345 = vmatprep.subr.bf16.mxu0 0
    %1346 = vmatpush1.bf16.msra.mxu0 0
    %1347 = vmatprep.subr.bf16.mxu0 0
    %1348 = vmatpush1.bf16.msra.mxu0 0
    %1349 = vmatprep.subr.bf16.mxu0 0
    %1350 = vmatpush1.bf16.msra.mxu0 %v1337
    %1351 = vmatprep.subr.bf16.mxu0 0
    %1352 = vmatpush1.bf16.msra.mxu0 %v946
    %1353 = vmatprep.subr.bf16.mxu0 0
    %1354 = vmatpush1.bf16.msra.mxu0 %v945
    %1355 = vmatprep.subr.bf16.mxu0 0
    %1356 = vmatpush2.bf16.msra.mxu0 0
    %1357 = vmatprep.subr.bf16.mxu0 0
    %1358 = vmatpush2.bf16.msra.mxu0 0
    %1359 = vmatprep.subr.bf16.mxu0 0
    %1360 = vmatpush2.bf16.msra.mxu0 0
    %1361 = vmatprep.subr.bf16.mxu0 0
    %1362 = vmatpush2.bf16.msra.mxu0 0
    %1363 = vmatprep.subr.bf16.mxu0 0
    %1364 = vmatpush2.bf16.msra.mxu0 0
    %1365 = vmatprep.subr.bf16.mxu0 0
    %1366 = vmatpush2.bf16.msra.mxu0 0
    %1367 = vmatprep.subr.bf16.mxu0 0
    %1368 = vmatpush2.bf16.msra.mxu0 0
    %1369 = vmatprep.subr.bf16.mxu0 0
    %1370 = vmatpush2.bf16.msra.mxu0 0
    %1371 = vmatprep.mubr.bf16.mxu0 0
    %1372 = vmatmul.mubr.bf16.gmra.mxu0 %v952
    %v1373 = vpop.f32.mrf.mxu0
    %v1374 = vadd.f32 %v293, %v1373
    %v1375 = vpop.f32.mrf.mxu0
    %v1376 = vpop.f32.mrf.mxu0
    %v1377 = vadd.f32 %v293, %v1376
    %v1378 = vpop.f32.mrf.mxu0
    %1379 = vmatprep.mubr.bf16.mxu0 0
    %1380 = vmatmul.mubr.bf16.gmra.mxu0 %v955
    %v1381 = vpop.f32.mrf.mxu0
    %v1382 = vadd.f32 %v293, %v1381
    %v1383 = vpop.f32.mrf.mxu0
    %v1384 = vpop.f32.mrf.mxu0
    %v1385 = vadd.f32 %v293, %v1384
    %v1386 = vpop.f32.mrf.mxu0
    %1387 = vmatprep.mubr.bf16.mxu0 0
    %1388 = vmatmul.mubr.bf16.gmra.mxu0 %v958
    %v1389 = vpop.f32.mrf.mxu0
    %v1390 = vadd.f32 %v293, %v1389
    %v1391 = vpop.f32.mrf.mxu0
    %v1392 = vpop.f32.mrf.mxu0
    %v1393 = vadd.f32 %v293, %v1392
    %v1394 = vpop.f32.mrf.mxu0
    %1395 = vmatprep.mubr.bf16.mxu0 0
    %1396 = vmatmul.mubr.bf16.gmra.mxu0 %v961
    %v1397 = vpop.f32.mrf.mxu0
    %v1398 = vadd.f32 %v293, %v1397
    %v1399 = vpop.f32.mrf.mxu0
    %v1400 = vpop.f32.mrf.mxu0
    %v1401 = vadd.f32 %v293, %v1400
    %v1402 = vpop.f32.mrf.mxu0
    %1403 = vmatprep.mubr.bf16.mxu0 0
    %1404 = vmatmul.mubr.bf16.gmra.mxu0 %v964
    %v1405 = vpop.f32.mrf.mxu0
    %v1406 = vadd.f32 %v293, %v1405
    %v1407 = vpop.f32.mrf.mxu0
    %v1408 = vpop.f32.mrf.mxu0
    %v1409 = vadd.f32 %v293, %v1408
    %v1410 = vpop.f32.mrf.mxu0
    %1411 = vmatprep.mubr.bf16.mxu0 0
    %1412 = vmatmul.mubr.bf16.gmra.mxu0 %v967
    %v1413 = vpop.f32.mrf.mxu0
    %v1414 = vadd.f32 %v293, %v1413
    %v1415 = vpop.f32.mrf.mxu0
    %v1416 = vpop.f32.mrf.mxu0
    %v1417 = vadd.f32 %v293, %v1416
    %v1418 = vpop.f32.mrf.mxu0
    %1419 = vmatprep.mubr.bf16.mxu0 0
    %1420 = vmatmul.mubr.bf16.gmra.mxu0 %v970
    %v1421 = vpop.f32.mrf.mxu0
    %v1422 = vadd.f32 %v293, %v1421
    %v1423 = vpop.f32.mrf.mxu0
    %v1424 = vpop.f32.mrf.mxu0
    %v1425 = vadd.f32 %v293, %v1424
    %v1426 = vpop.f32.mrf.mxu0
    %1427 = vmatprep.mubr.bf16.mxu0 0
    %1428 = vmatmul.mubr.bf16.gmra.mxu0 %v973
    %v1429 = vpop.f32.mrf.mxu0
    %v1430 = vadd.f32 %v293, %v1429
    %v1431 = vpop.f32.mrf.mxu0
    %v1432 = vpop.f32.mrf.mxu0
    %v1433 = vadd.f32 %v293, %v1432
    %v1434 = vpop.f32.mrf.mxu0
    %1435 = vmatprep.mubr.bf16.mxu0 0
    %1436 = vmatmul.mubr.bf16.gmra.mxu0 %v976
    %v1437 = vpop.f32.mrf.mxu0
    %v1438 = vadd.f32 %v293, %v1437
    %v1439 = vpop.f32.mrf.mxu0
    %v1440 = vpop.f32.mrf.mxu0
    %v1441 = vadd.f32 %v293, %v1440
    %v1442 = vpop.f32.mrf.mxu0
    %1443 = vmatprep.mubr.bf16.mxu0 0
    %1444 = vmatmul.mubr.bf16.gmra.mxu0 %v979
    %v1445 = vpop.f32.mrf.mxu0
    %v1446 = vadd.f32 %v293, %v1445
    %v1447 = vpop.f32.mrf.mxu0
    %v1448 = vpop.f32.mrf.mxu0
    %v1449 = vadd.f32 %v293, %v1448
    %v1450 = vpop.f32.mrf.mxu0
    %1451 = vmatprep.mubr.bf16.mxu0 0
    %1452 = vmatmul.mubr.bf16.gmra.mxu0 %v982
    %v1453 = vpop.f32.mrf.mxu0
    %v1454 = vadd.f32 %v293, %v1453
    %v1455 = vpop.f32.mrf.mxu0
    %v1456 = vpop.f32.mrf.mxu0
    %v1457 = vadd.f32 %v293, %v1456
    %v1458 = vpop.f32.mrf.mxu0
    %1459 = vmatprep.mubr.bf16.mxu0 0
    %1460 = vmatmul.mubr.bf16.gmra.mxu0 %v985
    %v1461 = vpop.f32.mrf.mxu0
    %v1462 = vadd.f32 %v293, %v1461
    %v1463 = vpop.f32.mrf.mxu0
    %v1464 = vpop.f32.mrf.mxu0
    %v1465 = vadd.f32 %v293, %v1464
    %v1466 = vpop.f32.mrf.mxu0
    %1467 = vmatprep.mubr.bf16.mxu0 0
    %1468 = vmatmul.mubr.bf16.gmra.mxu0 %v988
    %v1469 = vpop.f32.mrf.mxu0
    %v1470 = vadd.f32 %v293, %v1469
    %v1471 = vpop.f32.mrf.mxu0
    %v1472 = vpop.f32.mrf.mxu0
    %v1473 = vadd.f32 %v293, %v1472
    %v1474 = vpop.f32.mrf.mxu0
    %1475 = vmatprep.mubr.bf16.mxu0 0
    %1476 = vmatmul.mubr.bf16.gmra.mxu0 %v991
    %v1477 = vpop.f32.mrf.mxu0
    %v1478 = vadd.f32 %v293, %v1477
    %v1479 = vpop.f32.mrf.mxu0
    %v1480 = vpop.f32.mrf.mxu0
    %v1481 = vadd.f32 %v293, %v1480
    %v1482 = vpop.f32.mrf.mxu0
    %1483 = vmatprep.mubr.bf16.mxu0 0
    %1484 = vmatmul.mubr.bf16.gmra.mxu0 %v994
    %v1485 = vpop.f32.mrf.mxu0
    %v1486 = vadd.f32 %v293, %v1485
    %v1487 = vpop.f32.mrf.mxu0
    %v1488 = vpop.f32.mrf.mxu0
    %v1489 = vadd.f32 %v293, %v1488
    %v1490 = vpop.f32.mrf.mxu0
    %1491 = vmatprep.mubr.bf16.mxu0 0
    %1492 = vmatmul.mubr.bf16.gmra.mxu0 %v997
    %v1493 = vpop.f32.mrf.mxu0
    %v1494 = vadd.f32 %v293, %v1493
    %v1495 = vpop.f32.mrf.mxu0
    %v1496 = vpop.f32.mrf.mxu0
    %v1497 = vadd.f32 %v293, %v1496
    %v1498 = vpop.f32.mrf.mxu0
    %1499 = vmatprep.mubr.bf16.mxu0 0
    %1500 = vmatmul.mubr.bf16.gmra.mxu0 %v1000
    %v1501 = vpop.f32.mrf.mxu0
    %v1502 = vadd.f32 %v293, %v1501
    %v1503 = vpop.f32.mrf.mxu0
    %v1504 = vpop.f32.mrf.mxu0
    %v1505 = vadd.f32 %v293, %v1504
    %v1506 = vpop.f32.mrf.mxu0
    %1507 = vmatprep.mubr.bf16.mxu0 0
    %1508 = vmatmul.mubr.bf16.gmra.mxu0 %v1003
    %v1509 = vpop.f32.mrf.mxu0
    %v1510 = vadd.f32 %v293, %v1509
    %v1511 = vpop.f32.mrf.mxu0
    %v1512 = vpop.f32.mrf.mxu0
    %v1513 = vadd.f32 %v293, %v1512
    %v1514 = vpop.f32.mrf.mxu0
    %1515 = vmatprep.mubr.bf16.mxu0 0
    %1516 = vmatmul.mubr.bf16.gmra.mxu0 %v1006
    %v1517 = vpop.f32.mrf.mxu0
    %v1518 = vadd.f32 %v293, %v1517
    %v1519 = vpop.f32.mrf.mxu0
    %v1520 = vpop.f32.mrf.mxu0
    %v1521 = vadd.f32 %v293, %v1520
    %v1522 = vpop.f32.mrf.mxu0
    %1523 = vmatprep.mubr.bf16.mxu0 0
    %1524 = vmatmul.mubr.bf16.gmra.mxu0 %v1009
    %v1525 = vpop.f32.mrf.mxu0
    %v1526 = vadd.f32 %v293, %v1525
    %v1527 = vpop.f32.mrf.mxu0
    %v1528 = vpop.f32.mrf.mxu0
    %v1529 = vadd.f32 %v293, %v1528
    %v1530 = vpop.f32.mrf.mxu0
    %1531 = vmatprep.mubr.bf16.mxu0 0
    %1532 = vmatmul.mubr.bf16.gmra.mxu0 %v1012
    %v1533 = vpop.f32.mrf.mxu0
    %v1534 = vadd.f32 %v293, %v1533
    %v1535 = vpop.f32.mrf.mxu0
    %v1536 = vpop.f32.mrf.mxu0
    %v1537 = vadd.f32 %v293, %v1536
    %v1538 = vpop.f32.mrf.mxu0
    %1539 = vmatprep.mubr.bf16.mxu0 0
    %1540 = vmatmul.mubr.bf16.gmra.mxu0 %v1015
    %v1541 = vpop.f32.mrf.mxu0
    %v1542 = vadd.f32 %v293, %v1541
    %v1543 = vpop.f32.mrf.mxu0
    %v1544 = vpop.f32.mrf.mxu0
    %v1545 = vadd.f32 %v293, %v1544
    %v1546 = vpop.f32.mrf.mxu0
    %1547 = vmatprep.mubr.bf16.mxu0 0
    %1548 = vmatmul.mubr.bf16.gmra.mxu0 %v1018
    %v1549 = vpop.f32.mrf.mxu0
    %v1550 = vadd.f32 %v293, %v1549
    %v1551 = vpop.f32.mrf.mxu0
    %v1552 = vpop.f32.mrf.mxu0
    %v1553 = vadd.f32 %v293, %v1552
    %v1554 = vpop.f32.mrf.mxu0
    %1555 = vmatprep.mubr.bf16.mxu0 0
    %1556 = vmatmul.mubr.bf16.gmra.mxu0 %v1021
    %v1557 = vpop.f32.mrf.mxu0
    %v1558 = vadd.f32 %v293, %v1557
    %v1559 = vpop.f32.mrf.mxu0
    %v1560 = vpop.f32.mrf.mxu0
    %v1561 = vadd.f32 %v293, %v1560
    %v1562 = vpop.f32.mrf.mxu0
    %1563 = vmatprep.mubr.bf16.mxu0 0
    %1564 = vmatmul.mubr.bf16.gmra.mxu0 %v1024
    %v1565 = vpop.f32.mrf.mxu0
    %v1566 = vadd.f32 %v293, %v1565
    %v1567 = vpop.f32.mrf.mxu0
    %v1568 = vpop.f32.mrf.mxu0
    %v1569 = vadd.f32 %v293, %v1568
    %v1570 = vpop.f32.mrf.mxu0
    %1571 = vmatprep.mubr.bf16.mxu0 0
    %1572 = vmatmul.mubr.bf16.gmra.mxu0 %v1027
    %v1573 = vpop.f32.mrf.mxu0
    %v1574 = vadd.f32 %v293, %v1573
    %v1575 = vpop.f32.mrf.mxu0
    %v1576 = vpop.f32.mrf.mxu0
    %v1577 = vadd.f32 %v293, %v1576
    %v1578 = vpop.f32.mrf.mxu0
    %1579 = vmatprep.mubr.bf16.mxu0 0
    %1580 = vmatmul.mubr.bf16.gmra.mxu0 %v1030
    %v1581 = vpop.f32.mrf.mxu0
    %v1582 = vadd.f32 %v293, %v1581
    %v1583 = vpop.f32.mrf.mxu0
    %v1584 = vpop.f32.mrf.mxu0
    %v1585 = vadd.f32 %v293, %v1584
    %v1586 = vpop.f32.mrf.mxu0
    %1587 = vmatprep.mubr.bf16.mxu0 0
    %1588 = vmatmul.mubr.bf16.gmra.mxu0 %v1033
    %v1589 = vpop.f32.mrf.mxu0
    %v1590 = vadd.f32 %v293, %v1589
    %v1591 = vpop.f32.mrf.mxu0
    %v1592 = vpop.f32.mrf.mxu0
    %v1593 = vadd.f32 %v293, %v1592
    %v1594 = vpop.f32.mrf.mxu0
    %1595 = vmatprep.mubr.bf16.mxu0 0
    %1596 = vmatmul.mubr.bf16.gmra.mxu0 %v1036
    %v1597 = vpop.f32.mrf.mxu0
    %v1598 = vadd.f32 %v293, %v1597
    %v1599 = vpop.f32.mrf.mxu0
    %v1600 = vpop.f32.mrf.mxu0
    %v1601 = vadd.f32 %v293, %v1600
    %v1602 = vpop.f32.mrf.mxu0
    %1603 = vmatprep.mubr.bf16.mxu0 0
    %1604 = vmatmul.mubr.bf16.gmra.mxu0 %v1039
    %v1605 = vpop.f32.mrf.mxu0
    %v1606 = vadd.f32 %v293, %v1605
    %v1607 = vpop.f32.mrf.mxu0
    %v1608 = vpop.f32.mrf.mxu0
    %v1609 = vadd.f32 %v293, %v1608
    %v1610 = vpop.f32.mrf.mxu0
    %1611 = vmatprep.mubr.bf16.mxu0 0
    %1612 = vmatmul.mubr.bf16.gmra.mxu0 %v1042
    %v1613 = vpop.f32.mrf.mxu0
    %v1614 = vadd.f32 %v293, %v1613
    %v1615 = vpop.f32.mrf.mxu0
    %v1616 = vpop.f32.mrf.mxu0
    %v1617 = vadd.f32 %v293, %v1616
    %v1618 = vpop.f32.mrf.mxu0
    %1619 = vmatprep.mubr.bf16.mxu0 0
    %1620 = vmatmul.mubr.bf16.gmra.mxu0 %v1045
    %v1621 = vpop.f32.mrf.mxu0
    %v1622 = vadd.f32 %v293, %v1621
    %v1623 = vpop.f32.mrf.mxu0
    %v1624 = vpop.f32.mrf.mxu0
    %v1625 = vadd.f32 %v293, %v1624
    %v1626 = vpop.f32.mrf.mxu0
    %1627 = vmatprep.mubr.bf16.mxu0 0
    %1628 = vmatmul.mubr.bf16.gmra.mxu0 %v1048
    %v1629 = vpop.f32.mrf.mxu0
    %v1630 = vadd.f32 %v293, %v1629
    %v1631 = vpop.f32.mrf.mxu0
    %v1632 = vpop.f32.mrf.mxu0
    %v1633 = vadd.f32 %v293, %v1632
    %v1634 = vpop.f32.mrf.mxu0
    %1635 = vmatprep.mubr.bf16.mxu0 0
    %1636 = vmatmul.mubr.bf16.gmra.mxu0 %v1051
    %v1637 = vpop.f32.mrf.mxu0
    %v1638 = vadd.f32 %v293, %v1637
    %v1639 = vpop.f32.mrf.mxu0
    %v1640 = vpop.f32.mrf.mxu0
    %v1641 = vadd.f32 %v293, %v1640
    %v1642 = vpop.f32.mrf.mxu0
    %1643 = vmatprep.mubr.bf16.mxu0 0
    %1644 = vmatmul.mubr.bf16.gmra.mxu0 %v1054
    %v1645 = vpop.f32.mrf.mxu0
    %v1646 = vadd.f32 %v293, %v1645
    %v1647 = vpop.f32.mrf.mxu0
    %v1648 = vpop.f32.mrf.mxu0
    %v1649 = vadd.f32 %v293, %v1648
    %v1650 = vpop.f32.mrf.mxu0
    %1651 = vmatprep.mubr.bf16.mxu0 0
    %1652 = vmatmul.mubr.bf16.gmra.mxu0 %v1057
    %v1653 = vpop.f32.mrf.mxu0
    %v1654 = vadd.f32 %v293, %v1653
    %v1655 = vpop.f32.mrf.mxu0
    %v1656 = vpop.f32.mrf.mxu0
    %v1657 = vadd.f32 %v293, %v1656
    %v1658 = vpop.f32.mrf.mxu0
    %1659 = vmatprep.mubr.bf16.mxu0 0
    %1660 = vmatmul.mubr.bf16.gmra.mxu0 %v1060
    %v1661 = vpop.f32.mrf.mxu0
    %v1662 = vadd.f32 %v293, %v1661
    %v1663 = vpop.f32.mrf.mxu0
    %v1664 = vpop.f32.mrf.mxu0
    %v1665 = vadd.f32 %v293, %v1664
    %v1666 = vpop.f32.mrf.mxu0
    %1667 = vmatprep.mubr.bf16.mxu0 0
    %1668 = vmatmul.mubr.bf16.gmra.mxu0 %v1063
    %v1669 = vpop.f32.mrf.mxu0
    %v1670 = vadd.f32 %v293, %v1669
    %v1671 = vpop.f32.mrf.mxu0
    %v1672 = vpop.f32.mrf.mxu0
    %v1673 = vadd.f32 %v293, %v1672
    %v1674 = vpop.f32.mrf.mxu0
    %1675 = vmatprep.mubr.bf16.mxu0 0
    %1676 = vmatmul.mubr.bf16.gmra.mxu0 %v1066
    %v1677 = vpop.f32.mrf.mxu0
    %v1678 = vadd.f32 %v293, %v1677
    %v1679 = vpop.f32.mrf.mxu0
    %v1680 = vpop.f32.mrf.mxu0
    %v1681 = vadd.f32 %v293, %v1680
    %v1682 = vpop.f32.mrf.mxu0
    %1683 = vmatprep.mubr.bf16.mxu0 0
    %1684 = vmatmul.mubr.bf16.gmra.mxu0 %v1069
    %v1685 = vpop.f32.mrf.mxu0
    %v1686 = vadd.f32 %v293, %v1685
    %v1687 = vpop.f32.mrf.mxu0
    %v1688 = vpop.f32.mrf.mxu0
    %v1689 = vadd.f32 %v293, %v1688
    %v1690 = vpop.f32.mrf.mxu0
    %1691 = vmatprep.mubr.bf16.mxu0 0
    %1692 = vmatmul.mubr.bf16.gmra.mxu0 %v1072
    %v1693 = vpop.f32.mrf.mxu0
    %v1694 = vadd.f32 %v293, %v1693
    %v1695 = vpop.f32.mrf.mxu0
    %v1696 = vpop.f32.mrf.mxu0
    %v1697 = vadd.f32 %v293, %v1696
    %v1698 = vpop.f32.mrf.mxu0
    %1699 = vmatprep.mubr.bf16.mxu0 0
    %1700 = vmatmul.mubr.bf16.gmra.mxu0 %v1075
    %v1701 = vpop.f32.mrf.mxu0
    %v1702 = vadd.f32 %v293, %v1701
    %v1703 = vpop.f32.mrf.mxu0
    %v1704 = vpop.f32.mrf.mxu0
    %v1705 = vadd.f32 %v293, %v1704
    %v1706 = vpop.f32.mrf.mxu0
    %1707 = vmatprep.mubr.bf16.mxu0 0
    %1708 = vmatmul.mubr.bf16.gmra.mxu0 %v1078
    %v1709 = vpop.f32.mrf.mxu0
    %v1710 = vadd.f32 %v293, %v1709
    %v1711 = vpop.f32.mrf.mxu0
    %v1712 = vpop.f32.mrf.mxu0
    %v1713 = vadd.f32 %v293, %v1712
    %v1714 = vpop.f32.mrf.mxu0
    %1715 = vmatprep.mubr.bf16.mxu0 0
    %1716 = vmatmul.mubr.bf16.gmra.mxu0 %v1081
    %v1717 = vpop.f32.mrf.mxu0
    %v1718 = vadd.f32 %v293, %v1717
    %v1719 = vpop.f32.mrf.mxu0
    %v1720 = vpop.f32.mrf.mxu0
    %v1721 = vadd.f32 %v293, %v1720
    %v1722 = vpop.f32.mrf.mxu0
    %1723 = vmatprep.mubr.bf16.mxu0 0
    %1724 = vmatmul.mubr.bf16.gmra.mxu0 %v1084
    %v1725 = vpop.f32.mrf.mxu0
    %v1726 = vadd.f32 %v293, %v1725
    %v1727 = vpop.f32.mrf.mxu0
    %v1728 = vpop.f32.mrf.mxu0
    %v1729 = vadd.f32 %v293, %v1728
    %v1730 = vpop.f32.mrf.mxu0
    %1731 = vmatprep.mubr.bf16.mxu0 0
    %1732 = vmatmul.mubr.bf16.gmra.mxu0 %v1087
    %v1733 = vpop.f32.mrf.mxu0
    %v1734 = vadd.f32 %v293, %v1733
    %v1735 = vpop.f32.mrf.mxu0
    %v1736 = vpop.f32.mrf.mxu0
    %v1737 = vadd.f32 %v293, %v1736
    %v1738 = vpop.f32.mrf.mxu0
    %1739 = vmatprep.mubr.bf16.mxu0 0
    %1740 = vmatmul.mubr.bf16.gmra.mxu0 %v1090
    %v1741 = vpop.f32.mrf.mxu0
    %v1742 = vadd.f32 %v293, %v1741
    %v1743 = vpop.f32.mrf.mxu0
    %v1744 = vpop.f32.mrf.mxu0
    %v1745 = vadd.f32 %v293, %v1744
    %v1746 = vpop.f32.mrf.mxu0
    %1747 = vmatprep.mubr.bf16.mxu0 0
    %1748 = vmatmul.mubr.bf16.gmra.mxu0 %v1093
    %v1749 = vpop.f32.mrf.mxu0
    %v1750 = vadd.f32 %v293, %v1749
    %v1751 = vpop.f32.mrf.mxu0
    %v1752 = vpop.f32.mrf.mxu0
    %v1753 = vadd.f32 %v293, %v1752
    %v1754 = vpop.f32.mrf.mxu0
    %1755 = vmatprep.mubr.bf16.mxu0 0
    %1756 = vmatmul.mubr.bf16.gmra.mxu0 %v1096
    %v1757 = vpop.f32.mrf.mxu0
    %v1758 = vadd.f32 %v293, %v1757
    %v1759 = vpop.f32.mrf.mxu0
    %v1760 = vpop.f32.mrf.mxu0
    %v1761 = vadd.f32 %v293, %v1760
    %v1762 = vpop.f32.mrf.mxu0
    %1763 = vmatprep.mubr.bf16.mxu0 0
    %1764 = vmatmul.mubr.bf16.gmra.mxu0 %v1099
    %v1765 = vpop.f32.mrf.mxu0
    %v1766 = vadd.f32 %v293, %v1765
    %v1767 = vpop.f32.mrf.mxu0
    %v1768 = vpop.f32.mrf.mxu0
    %v1769 = vadd.f32 %v293, %v1768
    %v1770 = vpop.f32.mrf.mxu0
    %1771 = vmatprep.mubr.bf16.mxu0 0
    %1772 = vmatmul.mubr.bf16.gmra.mxu0 %v1102
    %v1773 = vpop.f32.mrf.mxu0
    %v1774 = vadd.f32 %v293, %v1773
    %v1775 = vpop.f32.mrf.mxu0
    %v1776 = vpop.f32.mrf.mxu0
    %v1777 = vadd.f32 %v293, %v1776
    %v1778 = vpop.f32.mrf.mxu0
    %1779 = vmatprep.mubr.bf16.mxu0 0
    %1780 = vmatmul.mubr.bf16.gmra.mxu0 %v1105
    %v1781 = vpop.f32.mrf.mxu0
    %v1782 = vadd.f32 %v293, %v1781
    %v1783 = vpop.f32.mrf.mxu0
    %v1784 = vpop.f32.mrf.mxu0
    %v1785 = vadd.f32 %v293, %v1784
    %v1786 = vpop.f32.mrf.mxu0
    %1787 = vmatprep.mubr.bf16.mxu0 0
    %1788 = vmatmul.mubr.bf16.gmra.mxu0 %v1108
    %v1789 = vpop.f32.mrf.mxu0
    %v1790 = vadd.f32 %v293, %v1789
    %v1791 = vpop.f32.mrf.mxu0
    %v1792 = vpop.f32.mrf.mxu0
    %v1793 = vadd.f32 %v293, %v1792
    %v1794 = vpop.f32.mrf.mxu0
    %1795 = vmatprep.mubr.bf16.mxu0 0
    %1796 = vmatmul.mubr.bf16.gmra.mxu0 %v1111
    %v1797 = vpop.f32.mrf.mxu0
    %v1798 = vadd.f32 %v293, %v1797
    %v1799 = vpop.f32.mrf.mxu0
    %v1800 = vpop.f32.mrf.mxu0
    %v1801 = vadd.f32 %v293, %v1800
    %v1802 = vpop.f32.mrf.mxu0
    %1803 = vmatprep.mubr.bf16.mxu0 0
    %1804 = vmatmul.mubr.bf16.gmra.mxu0 %v1114
    %v1805 = vpop.f32.mrf.mxu0
    %v1806 = vadd.f32 %v293, %v1805
    %v1807 = vpop.f32.mrf.mxu0
    %v1808 = vpop.f32.mrf.mxu0
    %v1809 = vadd.f32 %v293, %v1808
    %v1810 = vpop.f32.mrf.mxu0
    %1811 = vmatprep.mubr.bf16.mxu0 0
    %1812 = vmatmul.mubr.bf16.gmra.mxu0 %v1117
    %v1813 = vpop.f32.mrf.mxu0
    %v1814 = vadd.f32 %v293, %v1813
    %v1815 = vpop.f32.mrf.mxu0
    %v1816 = vpop.f32.mrf.mxu0
    %v1817 = vadd.f32 %v293, %v1816
    %v1818 = vpop.f32.mrf.mxu0
    %1819 = vmatprep.mubr.bf16.mxu0 0
    %1820 = vmatmul.mubr.bf16.gmra.mxu0 %v1120
    %v1821 = vpop.f32.mrf.mxu0
    %v1822 = vadd.f32 %v293, %v1821
    %v1823 = vpop.f32.mrf.mxu0
    %v1824 = vpop.f32.mrf.mxu0
    %v1825 = vadd.f32 %v293, %v1824
    %v1826 = vpop.f32.mrf.mxu0
    %1827 = vmatprep.mubr.bf16.mxu0 0
    %1828 = vmatmul.mubr.bf16.gmra.mxu0 %v1123
    %v1829 = vpop.f32.mrf.mxu0
    %v1830 = vadd.f32 %v293, %v1829
    %v1831 = vpop.f32.mrf.mxu0
    %v1832 = vpop.f32.mrf.mxu0
    %v1833 = vadd.f32 %v293, %v1832
    %v1834 = vpop.f32.mrf.mxu0
    %1835 = vmatprep.mubr.bf16.mxu0 0
    %1836 = vmatmul.mubr.bf16.gmra.mxu0 %v1126
    %v1837 = vpop.f32.mrf.mxu0
    %v1838 = vadd.f32 %v293, %v1837
    %v1839 = vpop.f32.mrf.mxu0
    %v1840 = vpop.f32.mrf.mxu0
    %v1841 = vadd.f32 %v293, %v1840
    %v1842 = vpop.f32.mrf.mxu0
    %1843 = vmatprep.mubr.bf16.mxu0 0
    %1844 = vmatmul.mubr.bf16.gmra.mxu0 %v1129
    %v1845 = vpop.f32.mrf.mxu0
    %v1846 = vadd.f32 %v293, %v1845
    %v1847 = vpop.f32.mrf.mxu0
    %v1848 = vpop.f32.mrf.mxu0
    %v1849 = vadd.f32 %v293, %v1848
    %v1850 = vpop.f32.mrf.mxu0
    %1851 = vmatprep.mubr.bf16.mxu0 0
    %1852 = vmatmul.mubr.bf16.gmra.mxu0 %v1132
    %v1853 = vpop.f32.mrf.mxu0
    %v1854 = vadd.f32 %v293, %v1853
    %v1855 = vpop.f32.mrf.mxu0
    %v1856 = vpop.f32.mrf.mxu0
    %v1857 = vadd.f32 %v293, %v1856
    %v1858 = vpop.f32.mrf.mxu0
    %1859 = vmatprep.mubr.bf16.mxu0 0
    %1860 = vmatmul.mubr.bf16.gmra.mxu0 %v1135
    %v1861 = vpop.f32.mrf.mxu0
    %v1862 = vadd.f32 %v293, %v1861
    %v1863 = vpop.f32.mrf.mxu0
    %v1864 = vpop.f32.mrf.mxu0
    %v1865 = vadd.f32 %v293, %v1864
    %v1866 = vpop.f32.mrf.mxu0
    %1867 = vmatprep.mubr.bf16.mxu0 0
    %1868 = vmatmul.mubr.bf16.gmra.mxu0 %v1138
    %v1869 = vpop.f32.mrf.mxu0
    %v1870 = vadd.f32 %v293, %v1869
    %v1871 = vpop.f32.mrf.mxu0
    %v1872 = vpop.f32.mrf.mxu0
    %v1873 = vadd.f32 %v293, %v1872
    %v1874 = vpop.f32.mrf.mxu0
    %1875 = vmatprep.mubr.bf16.mxu0 0
    %1876 = vmatmul.mubr.bf16.gmra.mxu0 %v1141
    %v1877 = vpop.f32.mrf.mxu0
    %v1878 = vadd.f32 %v293, %v1877
    %v1879 = vpop.f32.mrf.mxu0
    %v1880 = vpop.f32.mrf.mxu0
    %v1881 = vadd.f32 %v293, %v1880
    %v1882 = vpop.f32.mrf.mxu0
    %1883 = vmatprep.mubr.bf16.mxu0 0
    %1884 = vmatmul.mubr.bf16.gmra.mxu0 %v1144
    %v1885 = vpop.f32.mrf.mxu0
    %v1886 = vadd.f32 %v293, %v1885
    %v1887 = vpop.f32.mrf.mxu0
    %v1888 = vpop.f32.mrf.mxu0
    %v1889 = vadd.f32 %v293, %v1888
    %v1890 = vpop.f32.mrf.mxu0
    %1891 = vmatprep.mubr.bf16.mxu0 0
    %1892 = vmatmul.mubr.bf16.gmra.mxu0 %v1147
    %v1893 = vpop.f32.mrf.mxu0
    %v1894 = vadd.f32 %v293, %v1893
    %v1895 = vpop.f32.mrf.mxu0
    %v1896 = vpop.f32.mrf.mxu0
    %v1897 = vadd.f32 %v293, %v1896
    %v1898 = vpop.f32.mrf.mxu0
    %1899 = vmatprep.mubr.bf16.mxu0 0
    %1900 = vmatmul.mubr.bf16.gmra.mxu0 %v1150
    %v1901 = vpop.f32.mrf.mxu0
    %v1902 = vadd.f32 %v293, %v1901
    %v1903 = vpop.f32.mrf.mxu0
    %v1904 = vpop.f32.mrf.mxu0
    %v1905 = vadd.f32 %v293, %v1904
    %v1906 = vpop.f32.mrf.mxu0
    %1907 = vmatprep.mubr.bf16.mxu0 0
    %1908 = vmatmul.mubr.bf16.gmra.mxu0 %v1153
    %v1909 = vpop.f32.mrf.mxu0
    %v1910 = vadd.f32 %v293, %v1909
    %v1911 = vpop.f32.mrf.mxu0
    %v1912 = vpop.f32.mrf.mxu0
    %v1913 = vadd.f32 %v293, %v1912
    %v1914 = vpop.f32.mrf.mxu0
    %1915 = vmatprep.mubr.bf16.mxu0 0
    %1916 = vmatmul.mubr.bf16.gmra.mxu0 %v1156
    %v1917 = vpop.f32.mrf.mxu0
    %v1918 = vadd.f32 %v293, %v1917
    %v1919 = vpop.f32.mrf.mxu0
    %v1920 = vpop.f32.mrf.mxu0
    %v1921 = vadd.f32 %v293, %v1920
    %v1922 = vpop.f32.mrf.mxu0
    %1923 = vmatprep.mubr.bf16.mxu0 0
    %1924 = vmatmul.mubr.bf16.gmra.mxu0 %v1159
    %v1925 = vpop.f32.mrf.mxu0
    %v1926 = vadd.f32 %v293, %v1925
    %v1927 = vpop.f32.mrf.mxu0
    %v1928 = vpop.f32.mrf.mxu0
    %v1929 = vadd.f32 %v293, %v1928
    %v1930 = vpop.f32.mrf.mxu0
    %1931 = vmatprep.mubr.bf16.mxu0 0
    %1932 = vmatmul.mubr.bf16.gmra.mxu0 %v1162
    %v1933 = vpop.f32.mrf.mxu0
    %v1934 = vadd.f32 %v293, %v1933
    %v1935 = vpop.f32.mrf.mxu0
    %v1936 = vpop.f32.mrf.mxu0
    %v1937 = vadd.f32 %v293, %v1936
    %v1938 = vpop.f32.mrf.mxu0
    %1939 = vmatprep.mubr.bf16.mxu0 0
    %1940 = vmatmul.mubr.bf16.gmra.mxu0 %v1165
    %v1941 = vpop.f32.mrf.mxu0
    %v1942 = vadd.f32 %v293, %v1941
    %v1943 = vpop.f32.mrf.mxu0
    %v1944 = vpop.f32.mrf.mxu0
    %v1945 = vadd.f32 %v293, %v1944
    %v1946 = vpop.f32.mrf.mxu0
    %1947 = vmatprep.mubr.bf16.mxu0 0
    %1948 = vmatmul.mubr.bf16.gmra.mxu0 %v1168
    %v1949 = vpop.f32.mrf.mxu0
    %v1950 = vadd.f32 %v293, %v1949
    %v1951 = vpop.f32.mrf.mxu0
    %v1952 = vpop.f32.mrf.mxu0
    %v1953 = vadd.f32 %v293, %v1952
    %v1954 = vpop.f32.mrf.mxu0
    %1955 = vmatprep.mubr.bf16.mxu0 0
    %1956 = vmatmul.mubr.bf16.gmra.mxu0 %v1171
    %v1957 = vpop.f32.mrf.mxu0
    %v1958 = vadd.f32 %v293, %v1957
    %v1959 = vpop.f32.mrf.mxu0
    %v1960 = vpop.f32.mrf.mxu0
    %v1961 = vadd.f32 %v293, %v1960
    %v1962 = vpop.f32.mrf.mxu0
    %1963 = vmatprep.mubr.bf16.mxu0 0
    %1964 = vmatmul.mubr.bf16.gmra.mxu0 %v1174
    %v1965 = vpop.f32.mrf.mxu0
    %v1966 = vadd.f32 %v293, %v1965
    %v1967 = vpop.f32.mrf.mxu0
    %v1968 = vpop.f32.mrf.mxu0
    %v1969 = vadd.f32 %v293, %v1968
    %v1970 = vpop.f32.mrf.mxu0
    %1971 = vmatprep.mubr.bf16.mxu0 0
    %1972 = vmatmul.mubr.bf16.gmra.mxu0 %v1177
    %v1973 = vpop.f32.mrf.mxu0
    %v1974 = vadd.f32 %v293, %v1973
    %v1975 = vpop.f32.mrf.mxu0
    %v1976 = vpop.f32.mrf.mxu0
    %v1977 = vadd.f32 %v293, %v1976
    %v1978 = vpop.f32.mrf.mxu0
    %1979 = vmatprep.mubr.bf16.mxu0 0
    %1980 = vmatmul.mubr.bf16.gmra.mxu0 %v1180
    %v1981 = vpop.f32.mrf.mxu0
    %v1982 = vadd.f32 %v293, %v1981
    %v1983 = vpop.f32.mrf.mxu0
    %v1984 = vpop.f32.mrf.mxu0
    %v1985 = vadd.f32 %v293, %v1984
    %v1986 = vpop.f32.mrf.mxu0
    %1987 = vmatprep.mubr.bf16.mxu0 0
    %1988 = vmatmul.mubr.bf16.gmra.mxu0 %v1183
    %v1989 = vpop.f32.mrf.mxu0
    %v1990 = vadd.f32 %v293, %v1989
    %v1991 = vpop.f32.mrf.mxu0
    %v1992 = vpop.f32.mrf.mxu0
    %v1993 = vadd.f32 %v293, %v1992
    %v1994 = vpop.f32.mrf.mxu0
    %1995 = vmatprep.mubr.bf16.mxu0 0
    %1996 = vmatmul.mubr.bf16.gmra.mxu0 %v1186
    %v1997 = vpop.f32.mrf.mxu0
    %v1998 = vadd.f32 %v293, %v1997
    %v1999 = vpop.f32.mrf.mxu0
    %v2000 = vpop.f32.mrf.mxu0
    %v2001 = vadd.f32 %v293, %v2000
    %v2002 = vpop.f32.mrf.mxu0
    %2003 = vmatprep.mubr.bf16.mxu0 0
    %2004 = vmatmul.mubr.bf16.gmra.mxu0 %v1189
    %v2005 = vpop.f32.mrf.mxu0
    %v2006 = vadd.f32 %v293, %v2005
    %v2007 = vpop.f32.mrf.mxu0
    %v2008 = vpop.f32.mrf.mxu0
    %v2009 = vadd.f32 %v293, %v2008
    %v2010 = vpop.f32.mrf.mxu0
    %2011 = vmatprep.mubr.bf16.mxu0 0
    %2012 = vmatmul.mubr.bf16.gmra.mxu0 %v1192
    %v2013 = vpop.f32.mrf.mxu0
    %v2014 = vadd.f32 %v293, %v2013
    %v2015 = vpop.f32.mrf.mxu0
    %v2016 = vpop.f32.mrf.mxu0
    %v2017 = vadd.f32 %v293, %v2016
    %v2018 = vpop.f32.mrf.mxu0
    %2019 = vmatprep.mubr.bf16.mxu0 0
    %2020 = vmatmul.mubr.bf16.gmra.mxu0 %v1195
    %v2021 = vpop.f32.mrf.mxu0
    %v2022 = vadd.f32 %v293, %v2021
    %v2023 = vpop.f32.mrf.mxu0
    %v2024 = vpop.f32.mrf.mxu0
    %v2025 = vadd.f32 %v293, %v2024
    %v2026 = vpop.f32.mrf.mxu0
    %2027 = vmatprep.mubr.bf16.mxu0 0
    %2028 = vmatmul.mubr.bf16.gmra.mxu0 %v1198
    %v2029 = vpop.f32.mrf.mxu0
    %v2030 = vadd.f32 %v293, %v2029
    %v2031 = vpop.f32.mrf.mxu0
    %v2032 = vpop.f32.mrf.mxu0
    %v2033 = vadd.f32 %v293, %v2032
    %v2034 = vpop.f32.mrf.mxu0
    %2035 = vmatprep.mubr.bf16.mxu0 0
    %2036 = vmatmul.mubr.bf16.gmra.mxu0 %v1201
    %v2037 = vpop.f32.mrf.mxu0
    %v2038 = vadd.f32 %v293, %v2037
    %v2039 = vpop.f32.mrf.mxu0
    %v2040 = vpop.f32.mrf.mxu0
    %v2041 = vadd.f32 %v293, %v2040
    %v2042 = vpop.f32.mrf.mxu0
    %2043 = vmatprep.mubr.bf16.mxu0 0
    %2044 = vmatmul.mubr.bf16.gmra.mxu0 %v1204
    %v2045 = vpop.f32.mrf.mxu0
    %v2046 = vadd.f32 %v293, %v2045
    %v2047 = vpop.f32.mrf.mxu0
    %v2048 = vpop.f32.mrf.mxu0
    %v2049 = vadd.f32 %v293, %v2048
    %v2050 = vpop.f32.mrf.mxu0
    %2051 = vmatprep.mubr.bf16.mxu0 0
    %2052 = vmatmul.mubr.bf16.gmra.mxu0 %v1207
    %v2053 = vpop.f32.mrf.mxu0
    %v2054 = vadd.f32 %v293, %v2053
    %v2055 = vpop.f32.mrf.mxu0
    %v2056 = vpop.f32.mrf.mxu0
    %v2057 = vadd.f32 %v293, %v2056
    %v2058 = vpop.f32.mrf.mxu0
    %2059 = vmatprep.mubr.bf16.mxu0 0
    %2060 = vmatmul.mubr.bf16.gmra.mxu0 %v1210
    %v2061 = vpop.f32.mrf.mxu0
    %v2062 = vadd.f32 %v293, %v2061
    %v2063 = vpop.f32.mrf.mxu0
    %v2064 = vpop.f32.mrf.mxu0
    %v2065 = vadd.f32 %v293, %v2064
    %v2066 = vpop.f32.mrf.mxu0
    %2067 = vmatprep.mubr.bf16.mxu0 0
    %2068 = vmatmul.mubr.bf16.gmra.mxu0 %v1213
    %v2069 = vpop.f32.mrf.mxu0
    %v2070 = vadd.f32 %v293, %v2069
    %v2071 = vpop.f32.mrf.mxu0
    %v2072 = vpop.f32.mrf.mxu0
    %v2073 = vadd.f32 %v293, %v2072
    %v2074 = vpop.f32.mrf.mxu0
    %2075 = vmatprep.mubr.bf16.mxu0 0
    %2076 = vmatmul.mubr.bf16.gmra.mxu0 %v1216
    %v2077 = vpop.f32.mrf.mxu0
    %v2078 = vadd.f32 %v293, %v2077
    %v2079 = vpop.f32.mrf.mxu0
    %v2080 = vpop.f32.mrf.mxu0
    %v2081 = vadd.f32 %v293, %v2080
    %v2082 = vpop.f32.mrf.mxu0
    %2083 = vmatprep.mubr.bf16.mxu0 0
    %2084 = vmatmul.mubr.bf16.gmra.mxu0 %v1219
    %v2085 = vpop.f32.mrf.mxu0
    %v2086 = vadd.f32 %v293, %v2085
    %v2087 = vpop.f32.mrf.mxu0
    %v2088 = vpop.f32.mrf.mxu0
    %v2089 = vadd.f32 %v293, %v2088
    %v2090 = vpop.f32.mrf.mxu0
    %2091 = vmatprep.mubr.bf16.mxu0 0
    %2092 = vmatmul.mubr.bf16.gmra.mxu0 %v1222
    %v2093 = vpop.f32.mrf.mxu0
    %v2094 = vadd.f32 %v293, %v2093
    %v2095 = vpop.f32.mrf.mxu0
    %v2096 = vpop.f32.mrf.mxu0
    %v2097 = vadd.f32 %v293, %v2096
    %v2098 = vpop.f32.mrf.mxu0
    %2099 = vmatprep.mubr.bf16.mxu0 0
    %2100 = vmatmul.mubr.bf16.gmra.mxu0 %v1225
    %v2101 = vpop.f32.mrf.mxu0
    %v2102 = vadd.f32 %v293, %v2101
    %v2103 = vpop.f32.mrf.mxu0
    %v2104 = vpop.f32.mrf.mxu0
    %v2105 = vadd.f32 %v293, %v2104
    %v2106 = vpop.f32.mrf.mxu0
    %2107 = vmatprep.mubr.bf16.mxu0 0
    %2108 = vmatmul.mubr.bf16.gmra.mxu0 %v1228
    %v2109 = vpop.f32.mrf.mxu0
    %v2110 = vadd.f32 %v293, %v2109
    %v2111 = vpop.f32.mrf.mxu0
    %v2112 = vpop.f32.mrf.mxu0
    %v2113 = vadd.f32 %v293, %v2112
    %v2114 = vpop.f32.mrf.mxu0
    %2115 = vmatprep.mubr.bf16.mxu0 0
    %2116 = vmatmul.mubr.bf16.gmra.mxu0 %v1231
    %v2117 = vpop.f32.mrf.mxu0
    %v2118 = vadd.f32 %v293, %v2117
    %v2119 = vpop.f32.mrf.mxu0
    %v2120 = vpop.f32.mrf.mxu0
    %v2121 = vadd.f32 %v293, %v2120
    %v2122 = vpop.f32.mrf.mxu0
    %2123 = vmatprep.mubr.bf16.mxu0 0
    %2124 = vmatmul.mubr.bf16.gmra.mxu0 %v1234
    %v2125 = vpop.f32.mrf.mxu0
    %v2126 = vadd.f32 %v293, %v2125
    %v2127 = vpop.f32.mrf.mxu0
    %v2128 = vpop.f32.mrf.mxu0
    %v2129 = vadd.f32 %v293, %v2128
    %v2130 = vpop.f32.mrf.mxu0
    %2131 = vmatprep.mubr.bf16.mxu0 0
    %2132 = vmatmul.mubr.bf16.gmra.mxu0 %v1237
    %v2133 = vpop.f32.mrf.mxu0
    %v2134 = vadd.f32 %v293, %v2133
    %v2135 = vpop.f32.mrf.mxu0
    %v2136 = vpop.f32.mrf.mxu0
    %v2137 = vadd.f32 %v293, %v2136
    %v2138 = vpop.f32.mrf.mxu0
    %2139 = vmatprep.mubr.bf16.mxu0 0
    %2140 = vmatmul.mubr.bf16.gmra.mxu0 %v1240
    %v2141 = vpop.f32.mrf.mxu0
    %v2142 = vadd.f32 %v293, %v2141
    %v2143 = vpop.f32.mrf.mxu0
    %v2144 = vpop.f32.mrf.mxu0
    %v2145 = vadd.f32 %v293, %v2144
    %v2146 = vpop.f32.mrf.mxu0
    %2147 = vmatprep.mubr.bf16.mxu0 0
    %2148 = vmatmul.mubr.bf16.gmra.mxu0 %v1243
    %v2149 = vpop.f32.mrf.mxu0
    %v2150 = vadd.f32 %v293, %v2149
    %v2151 = vpop.f32.mrf.mxu0
    %v2152 = vpop.f32.mrf.mxu0
    %v2153 = vadd.f32 %v293, %v2152
    %v2154 = vpop.f32.mrf.mxu0
    %2155 = vmatprep.mubr.bf16.mxu0 0
    %2156 = vmatmul.mubr.bf16.gmra.mxu0 %v1246
    %v2157 = vpop.f32.mrf.mxu0
    %v2158 = vadd.f32 %v293, %v2157
    %v2159 = vpop.f32.mrf.mxu0
    %v2160 = vpop.f32.mrf.mxu0
    %v2161 = vadd.f32 %v293, %v2160
    %v2162 = vpop.f32.mrf.mxu0
    %2163 = vmatprep.mubr.bf16.mxu0 0
    %2164 = vmatmul.mubr.bf16.gmra.mxu0 %v1249
    %v2165 = vpop.f32.mrf.mxu0
    %v2166 = vadd.f32 %v293, %v2165
    %v2167 = vpop.f32.mrf.mxu0
    %v2168 = vpop.f32.mrf.mxu0
    %v2169 = vadd.f32 %v293, %v2168
    %v2170 = vpop.f32.mrf.mxu0
    %2171 = vmatprep.mubr.bf16.mxu0 0
    %2172 = vmatmul.mubr.bf16.gmra.mxu0 %v1252
    %v2173 = vpop.f32.mrf.mxu0
    %v2174 = vadd.f32 %v293, %v2173
    %v2175 = vpop.f32.mrf.mxu0
    %v2176 = vpop.f32.mrf.mxu0
    %v2177 = vadd.f32 %v293, %v2176
    %v2178 = vpop.f32.mrf.mxu0
    %2179 = vmatprep.mubr.bf16.mxu0 0
    %2180 = vmatmul.mubr.bf16.gmra.mxu0 %v1255
    %v2181 = vpop.f32.mrf.mxu0
    %v2182 = vadd.f32 %v293, %v2181
    %v2183 = vpop.f32.mrf.mxu0
    %v2184 = vpop.f32.mrf.mxu0
    %v2185 = vadd.f32 %v293, %v2184
    %v2186 = vpop.f32.mrf.mxu0
    %2187 = vmatprep.mubr.bf16.mxu0 0
    %2188 = vmatmul.mubr.bf16.gmra.mxu0 %v1258
    %v2189 = vpop.f32.mrf.mxu0
    %v2190 = vadd.f32 %v293, %v2189
    %v2191 = vpop.f32.mrf.mxu0
    %v2192 = vpop.f32.mrf.mxu0
    %v2193 = vadd.f32 %v293, %v2192
    %v2194 = vpop.f32.mrf.mxu0
    %2195 = vmatprep.mubr.bf16.mxu0 0
    %2196 = vmatmul.mubr.bf16.gmra.mxu0 %v1261
    %v2197 = vpop.f32.mrf.mxu0
    %v2198 = vadd.f32 %v293, %v2197
    %v2199 = vpop.f32.mrf.mxu0
    %v2200 = vpop.f32.mrf.mxu0
    %v2201 = vadd.f32 %v293, %v2200
    %v2202 = vpop.f32.mrf.mxu0
    %2203 = vmatprep.mubr.bf16.mxu0 0
    %2204 = vmatmul.mubr.bf16.gmra.mxu0 %v1264
    %v2205 = vpop.f32.mrf.mxu0
    %v2206 = vadd.f32 %v293, %v2205
    %v2207 = vpop.f32.mrf.mxu0
    %v2208 = vpop.f32.mrf.mxu0
    %v2209 = vadd.f32 %v293, %v2208
    %v2210 = vpop.f32.mrf.mxu0
    %2211 = vmatprep.mubr.bf16.mxu0 0
    %2212 = vmatmul.mubr.bf16.gmra.mxu0 %v1267
    %v2213 = vpop.f32.mrf.mxu0
    %v2214 = vadd.f32 %v293, %v2213
    %v2215 = vpop.f32.mrf.mxu0
    %v2216 = vpop.f32.mrf.mxu0
    %v2217 = vadd.f32 %v293, %v2216
    %v2218 = vpop.f32.mrf.mxu0
    %2219 = vmatprep.mubr.bf16.mxu0 0
    %2220 = vmatmul.mubr.bf16.gmra.mxu0 %v1270
    %v2221 = vpop.f32.mrf.mxu0
    %v2222 = vadd.f32 %v293, %v2221
    %v2223 = vpop.f32.mrf.mxu0
    %v2224 = vpop.f32.mrf.mxu0
    %v2225 = vadd.f32 %v293, %v2224
    %v2226 = vpop.f32.mrf.mxu0
    %2227 = vmatprep.mubr.bf16.mxu0 0
    %2228 = vmatmul.mubr.bf16.gmra.mxu0 %v1273
    %v2229 = vpop.f32.mrf.mxu0
    %v2230 = vadd.f32 %v293, %v2229
    %v2231 = vpop.f32.mrf.mxu0
    %v2232 = vpop.f32.mrf.mxu0
    %v2233 = vadd.f32 %v293, %v2232
    %v2234 = vpop.f32.mrf.mxu0
    %2235 = vmatprep.mubr.bf16.mxu0 0
    %2236 = vmatmul.mubr.bf16.gmra.mxu0 %v1276
    %v2237 = vpop.f32.mrf.mxu0
    %v2238 = vadd.f32 %v293, %v2237
    %v2239 = vpop.f32.mrf.mxu0
    %v2240 = vpop.f32.mrf.mxu0
    %v2241 = vadd.f32 %v293, %v2240
    %v2242 = vpop.f32.mrf.mxu0
    %2243 = vmatprep.mubr.bf16.mxu0 0
    %2244 = vmatmul.mubr.bf16.gmra.mxu0 %v1279
    %v2245 = vpop.f32.mrf.mxu0
    %v2246 = vadd.f32 %v293, %v2245
    %v2247 = vpop.f32.mrf.mxu0
    %v2248 = vpop.f32.mrf.mxu0
    %v2249 = vadd.f32 %v293, %v2248
    %v2250 = vpop.f32.mrf.mxu0
    %2251 = vmatprep.mubr.bf16.mxu0 0
    %2252 = vmatmul.mubr.bf16.gmra.mxu0 %v1282
    %v2253 = vpop.f32.mrf.mxu0
    %v2254 = vadd.f32 %v293, %v2253
    %v2255 = vpop.f32.mrf.mxu0
    %v2256 = vpop.f32.mrf.mxu0
    %v2257 = vadd.f32 %v293, %v2256
    %v2258 = vpop.f32.mrf.mxu0
    %2259 = vmatprep.mubr.bf16.mxu0 0
    %2260 = vmatmul.mubr.bf16.gmra.mxu0 %v1285
    %v2261 = vpop.f32.mrf.mxu0
    %v2262 = vadd.f32 %v293, %v2261
    %v2263 = vpop.f32.mrf.mxu0
    %v2264 = vpop.f32.mrf.mxu0
    %v2265 = vadd.f32 %v293, %v2264
    %v2266 = vpop.f32.mrf.mxu0
    %2267 = vmatprep.mubr.bf16.mxu0 0
    %2268 = vmatmul.mubr.bf16.gmra.mxu0 %v1288
    %v2269 = vpop.f32.mrf.mxu0
    %v2270 = vadd.f32 %v293, %v2269
    %v2271 = vpop.f32.mrf.mxu0
    %v2272 = vpop.f32.mrf.mxu0
    %v2273 = vadd.f32 %v293, %v2272
    %v2274 = vpop.f32.mrf.mxu0
    %2275 = vmatprep.mubr.bf16.mxu0 0
    %2276 = vmatmul.mubr.bf16.gmra.mxu0 %v1291
    %v2277 = vpop.f32.mrf.mxu0
    %v2278 = vadd.f32 %v293, %v2277
    %v2279 = vpop.f32.mrf.mxu0
    %v2280 = vpop.f32.mrf.mxu0
    %v2281 = vadd.f32 %v293, %v2280
    %v2282 = vpop.f32.mrf.mxu0
    %2283 = vmatprep.mubr.bf16.mxu0 0
    %2284 = vmatmul.mubr.bf16.gmra.mxu0 %v1294
    %v2285 = vpop.f32.mrf.mxu0
    %v2286 = vadd.f32 %v293, %v2285
    %v2287 = vpop.f32.mrf.mxu0
    %v2288 = vpop.f32.mrf.mxu0
    %v2289 = vadd.f32 %v293, %v2288
    %v2290 = vpop.f32.mrf.mxu0
    %2291 = vmatprep.mubr.bf16.mxu0 0
    %2292 = vmatmul.mubr.bf16.gmra.mxu0 %v1297
    %v2293 = vpop.f32.mrf.mxu0
    %v2294 = vadd.f32 %v293, %v2293
    %v2295 = vpop.f32.mrf.mxu0
    %v2296 = vpop.f32.mrf.mxu0
    %v2297 = vadd.f32 %v293, %v2296
    %v2298 = vpop.f32.mrf.mxu0
    %2299 = vmatprep.mubr.bf16.mxu0 0
    %2300 = vmatmul.mubr.bf16.gmra.mxu0 %v1300
    %v2301 = vpop.f32.mrf.mxu0
    %v2302 = vadd.f32 %v293, %v2301
    %v2303 = vpop.f32.mrf.mxu0
    %v2304 = vpop.f32.mrf.mxu0
    %v2305 = vadd.f32 %v293, %v2304
    %v2306 = vpop.f32.mrf.mxu0
    %2307 = vmatprep.mubr.bf16.mxu0 0
    %2308 = vmatmul.mubr.bf16.gmra.mxu0 %v1303
    %v2309 = vpop.f32.mrf.mxu0
    %v2310 = vadd.f32 %v293, %v2309
    %v2311 = vpop.f32.mrf.mxu0
    %v2312 = vpop.f32.mrf.mxu0
    %v2313 = vadd.f32 %v293, %v2312
    %v2314 = vpop.f32.mrf.mxu0
    %2315 = vmatprep.mubr.bf16.mxu0 0
    %2316 = vmatmul.mubr.bf16.gmra.mxu0 %v1306
    %v2317 = vpop.f32.mrf.mxu0
    %v2318 = vadd.f32 %v293, %v2317
    %v2319 = vpop.f32.mrf.mxu0
    %v2320 = vpop.f32.mrf.mxu0
    %v2321 = vadd.f32 %v293, %v2320
    %v2322 = vpop.f32.mrf.mxu0
    %2323 = vmatprep.mubr.bf16.mxu0 0
    %2324 = vmatmul.mubr.bf16.gmra.mxu0 %v1309
    %v2325 = vpop.f32.mrf.mxu0
    %v2326 = vadd.f32 %v293, %v2325
    %v2327 = vpop.f32.mrf.mxu0
    %v2328 = vpop.f32.mrf.mxu0
    %v2329 = vadd.f32 %v293, %v2328
    %v2330 = vpop.f32.mrf.mxu0
    %2331 = vmatprep.mubr.bf16.mxu0 0
    %2332 = vmatmul.mubr.bf16.gmra.mxu0 %v1312
    %v2333 = vpop.f32.mrf.mxu0
    %v2334 = vadd.f32 %v293, %v2333
    %v2335 = vpop.f32.mrf.mxu0
    %v2336 = vpop.f32.mrf.mxu0
    %v2337 = vadd.f32 %v293, %v2336
    %v2338 = vpop.f32.mrf.mxu0
    %2339 = vmatprep.mubr.bf16.mxu0 0
    %2340 = vmatmul.mubr.bf16.gmra.mxu0 %v1315
    %v2341 = vpop.f32.mrf.mxu0
    %v2342 = vadd.f32 %v293, %v2341
    %v2343 = vpop.f32.mrf.mxu0
    %v2344 = vpop.f32.mrf.mxu0
    %v2345 = vadd.f32 %v293, %v2344
    %v2346 = vpop.f32.mrf.mxu0
    %2347 = vmatprep.mubr.bf16.mxu0 0
    %2348 = vmatmul.mubr.bf16.gmra.mxu0 %v1318
    %v2349 = vpop.f32.mrf.mxu0
    %v2350 = vadd.f32 %v293, %v2349
    %v2351 = vpop.f32.mrf.mxu0
    %v2352 = vpop.f32.mrf.mxu0
    %v2353 = vadd.f32 %v293, %v2352
    %v2354 = vpop.f32.mrf.mxu0
    %2355 = vmatprep.mubr.bf16.mxu0 0
    %2356 = vmatmul.mubr.bf16.gmra.mxu0 %v1321
    %v2357 = vpop.f32.mrf.mxu0
    %v2358 = vadd.f32 %v293, %v2357
    %v2359 = vpop.f32.mrf.mxu0
    %v2360 = vpop.f32.mrf.mxu0
    %v2361 = vadd.f32 %v293, %v2360
    %v2362 = vpop.f32.mrf.mxu0
    %2363 = vmatprep.mubr.bf16.mxu0 0
    %2364 = vmatmul.mubr.bf16.gmra.mxu0 %v1324
    %v2365 = vpop.f32.mrf.mxu0
    %v2366 = vadd.f32 %v293, %v2365
    %v2367 = vpop.f32.mrf.mxu0
    %v2368 = vpop.f32.mrf.mxu0
    %v2369 = vadd.f32 %v293, %v2368
    %v2370 = vpop.f32.mrf.mxu0
    %2371 = vmatprep.mubr.bf16.mxu0 0
    %2372 = vmatmul.mubr.bf16.gmra.mxu0 %v1327
    %v2373 = vpop.f32.mrf.mxu0
    %v2374 = vadd.f32 %v293, %v2373
    %v2375 = vpop.f32.mrf.mxu0
    %v2376 = vpop.f32.mrf.mxu0
    %v2377 = vadd.f32 %v293, %v2376
    %v2378 = vpop.f32.mrf.mxu0
    %2379 = vmatprep.mubr.bf16.mxu0 0
    %2380 = vmatmul.mubr.bf16.gmra.mxu0 %v1330
    %v2381 = vpop.f32.mrf.mxu0
    %v2382 = vadd.f32 %v293, %v2381
    %v2383 = vpop.f32.mrf.mxu0
    %v2384 = vpop.f32.mrf.mxu0
    %v2385 = vadd.f32 %v293, %v2384
    %v2386 = vpop.f32.mrf.mxu0
    %2387 = vmatprep.mubr.bf16.mxu0 0
    %2388 = vmatmul.mubr.bf16.gmra.mxu0 %v1333
    %v2389 = vpop.f32.mrf.mxu0
    %v2390 = vadd.f32 %v293, %v2389
    %v2391 = vpop.f32.mrf.mxu0
    %v2392 = vpop.f32.mrf.mxu0
    %v2393 = vadd.f32 %v293, %v2392
    %v2394 = vpop.f32.mrf.mxu0
    %2395 = vdwg.mxu0
    %v2396 = vmax.f32 %v1374, 0.0
    %v2397 = vmax.f32 %v1377, 0.0
    %v2398 = vmax.f32 %v1382, 0.0
    %v2399 = vmax.f32 %v1385, 0.0
    %v2400 = vmax.f32 %v1390, 0.0
    %v2401 = vmax.f32 %v1393, 0.0
    %v2402 = vmax.f32 %v1398, 0.0
    %v2403 = vmax.f32 %v1401, 0.0
    %v2404 = vmax.f32 %v1406, 0.0
    %v2405 = vmax.f32 %v1409, 0.0
    %v2406 = vmax.f32 %v1414, 0.0
    %v2407 = vmax.f32 %v1417, 0.0
    %v2408 = vmax.f32 %v1422, 0.0
    %v2409 = vmax.f32 %v1425, 0.0
    %v2410 = vmax.f32 %v1430, 0.0
    %v2411 = vmax.f32 %v1433, 0.0
    %v2412 = vmax.f32 %v1438, 0.0
    %v2413 = vmax.f32 %v1441, 0.0
    %v2414 = vmax.f32 %v1446, 0.0
    %v2415 = vmax.f32 %v1449, 0.0
    %v2416 = vmax.f32 %v1454, 0.0
    %v2417 = vmax.f32 %v1457, 0.0
    %v2418 = vmax.f32 %v1462, 0.0
    %v2419 = vmax.f32 %v1465, 0.0
    %v2420 = vmax.f32 %v1470, 0.0
    %v2421 = vmax.f32 %v1473, 0.0
    %v2422 = vmax.f32 %v1478, 0.0
    %v2423 = vmax.f32 %v1481, 0.0
    %v2424 = vmax.f32 %v1486, 0.0
    %v2425 = vmax.f32 %v1489, 0.0
    %v2426 = vmax.f32 %v1494, 0.0
    %v2427 = vmax.f32 %v1497, 0.0
    %v2428 = vmax.f32 %v1502, 0.0
    %v2429 = vmax.f32 %v1505, 0.0
    %v2430 = vmax.f32 %v1510, 0.0
    %v2431 = vmax.f32 %v1513, 0.0
    %v2432 = vmax.f32 %v1518, 0.0
    %v2433 = vmax.f32 %v1521, 0.0
    %v2434 = vmax.f32 %v1526, 0.0
    %v2435 = vmax.f32 %v1529, 0.0
    %v2436 = vmax.f32 %v1534, 0.0
    %v2437 = vmax.f32 %v1537, 0.0
    %v2438 = vmax.f32 %v1542, 0.0
    %v2439 = vmax.f32 %v1545, 0.0
    %v2440 = vmax.f32 %v1550, 0.0
    %v2441 = vmax.f32 %v1553, 0.0
    %v2442 = vmax.f32 %v1558, 0.0
    %v2443 = vmax.f32 %v1561, 0.0
    %v2444 = vmax.f32 %v1566, 0.0
    %v2445 = vmax.f32 %v1569, 0.0
    %v2446 = vmax.f32 %v1574, 0.0
    %v2447 = vmax.f32 %v1577, 0.0
    %v2448 = vmax.f32 %v1582, 0.0
    %v2449 = vmax.f32 %v1585, 0.0
    %v2450 = vmax.f32 %v1590, 0.0
    %v2451 = vmax.f32 %v1593, 0.0
    %v2452 = vmax.f32 %v1598, 0.0
    %v2453 = vmax.f32 %v1601, 0.0
    %v2454 = vmax.f32 %v1606, 0.0
    %v2455 = vmax.f32 %v1609, 0.0
    %v2456 = vmax.f32 %v1614, 0.0
    %v2457 = vmax.f32 %v1617, 0.0
    %v2458 = vmax.f32 %v1622, 0.0
    %v2459 = vmax.f32 %v1625, 0.0
    %v2460 = vmax.f32 %v1630, 0.0
    %v2461 = vmax.f32 %v1633, 0.0
    %v2462 = vmax.f32 %v1638, 0.0
    %v2463 = vmax.f32 %v1641, 0.0
    %v2464 = vmax.f32 %v1646, 0.0
    %v2465 = vmax.f32 %v1649, 0.0
    %v2466 = vmax.f32 %v1654, 0.0
    %v2467 = vmax.f32 %v1657, 0.0
    %v2468 = vmax.f32 %v1662, 0.0
    %v2469 = vmax.f32 %v1665, 0.0
    %v2470 = vmax.f32 %v1670, 0.0
    %v2471 = vmax.f32 %v1673, 0.0
    %v2472 = vmax.f32 %v1678, 0.0
    %v2473 = vmax.f32 %v1681, 0.0
    %v2474 = vmax.f32 %v1686, 0.0
    %v2475 = vmax.f32 %v1689, 0.0
    %v2476 = vmax.f32 %v1694, 0.0
    %v2477 = vmax.f32 %v1697, 0.0
    %v2478 = vmax.f32 %v1702, 0.0
    %v2479 = vmax.f32 %v1705, 0.0
    %v2480 = vmax.f32 %v1710, 0.0
    %v2481 = vmax.f32 %v1713, 0.0
    %v2482 = vmax.f32 %v1718, 0.0
    %v2483 = vmax.f32 %v1721, 0.0
    %v2484 = vmax.f32 %v1726, 0.0
    %v2485 = vmax.f32 %v1729, 0.0
    %v2486 = vmax.f32 %v1734, 0.0
    %v2487 = vmax.f32 %v1737, 0.0
    %v2488 = vmax.f32 %v1742, 0.0
    %v2489 = vmax.f32 %v1745, 0.0
    %v2490 = vmax.f32 %v1750, 0.0
    %v2491 = vmax.f32 %v1753, 0.0
    %v2492 = vmax.f32 %v1758, 0.0
    %v2493 = vmax.f32 %v1761, 0.0
    %v2494 = vmax.f32 %v1766, 0.0
    %v2495 = vmax.f32 %v1769, 0.0
    %v2496 = vmax.f32 %v1774, 0.0
    %v2497 = vmax.f32 %v1777, 0.0
    %v2498 = vmax.f32 %v1782, 0.0
    %v2499 = vmax.f32 %v1785, 0.0
    %v2500 = vmax.f32 %v1790, 0.0
    %v2501 = vmax.f32 %v1793, 0.0
    %v2502 = vmax.f32 %v1798, 0.0
    %v2503 = vmax.f32 %v1801, 0.0
    %v2504 = vmax.f32 %v1806, 0.0
    %v2505 = vmax.f32 %v1809, 0.0
    %v2506 = vmax.f32 %v1814, 0.0
    %v2507 = vmax.f32 %v1817, 0.0
    %v2508 = vmax.f32 %v1822, 0.0
    %v2509 = vmax.f32 %v1825, 0.0
    %v2510 = vmax.f32 %v1830, 0.0
    %v2511 = vmax.f32 %v1833, 0.0
    %v2512 = vmax.f32 %v1838, 0.0
    %v2513 = vmax.f32 %v1841, 0.0
    %v2514 = vmax.f32 %v1846, 0.0
    %v2515 = vmax.f32 %v1849, 0.0
    %v2516 = vmax.f32 %v1854, 0.0
    %v2517 = vmax.f32 %v1857, 0.0
    %v2518 = vmax.f32 %v1862, 0.0
    %v2519 = vmax.f32 %v1865, 0.0
    %v2520 = vmax.f32 %v1870, 0.0
    %v2521 = vmax.f32 %v1873, 0.0
    %v2522 = vmax.f32 %v1878, 0.0
    %v2523 = vmax.f32 %v1881, 0.0
    %v2524 = vmax.f32 %v1886, 0.0
    %v2525 = vmax.f32 %v1889, 0.0
    %v2526 = vmax.f32 %v1894, 0.0
    %v2527 = vmax.f32 %v1897, 0.0
    %v2528 = vmax.f32 %v1902, 0.0
    %v2529 = vmax.f32 %v1905, 0.0
    %v2530 = vmax.f32 %v1910, 0.0
    %v2531 = vmax.f32 %v1913, 0.0
    %v2532 = vmax.f32 %v1918, 0.0
    %v2533 = vmax.f32 %v1921, 0.0
    %v2534 = vmax.f32 %v1926, 0.0
    %v2535 = vmax.f32 %v1929, 0.0
    %v2536 = vmax.f32 %v1934, 0.0
    %v2537 = vmax.f32 %v1937, 0.0
    %v2538 = vmax.f32 %v1942, 0.0
    %v2539 = vmax.f32 %v1945, 0.0
    %v2540 = vmax.f32 %v1950, 0.0
    %v2541 = vmax.f32 %v1953, 0.0
    %v2542 = vmax.f32 %v1958, 0.0
    %v2543 = vmax.f32 %v1961, 0.0
    %v2544 = vmax.f32 %v1966, 0.0
    %v2545 = vmax.f32 %v1969, 0.0
    %v2546 = vmax.f32 %v1974, 0.0
    %v2547 = vmax.f32 %v1977, 0.0
    %v2548 = vmax.f32 %v1982, 0.0
    %v2549 = vmax.f32 %v1985, 0.0
    %v2550 = vmax.f32 %v1990, 0.0
    %v2551 = vmax.f32 %v1993, 0.0
    %v2552 = vmax.f32 %v1998, 0.0
    %v2553 = vmax.f32 %v2001, 0.0
    %v2554 = vmax.f32 %v2006, 0.0
    %v2555 = vmax.f32 %v2009, 0.0
    %v2556 = vmax.f32 %v2014, 0.0
    %v2557 = vmax.f32 %v2017, 0.0
    %v2558 = vmax.f32 %v2022, 0.0
    %v2559 = vmax.f32 %v2025, 0.0
    %v2560 = vmax.f32 %v2030, 0.0
    %v2561 = vmax.f32 %v2033, 0.0
    %v2562 = vmax.f32 %v2038, 0.0
    %v2563 = vmax.f32 %v2041, 0.0
    %v2564 = vmax.f32 %v2046, 0.0
    %v2565 = vmax.f32 %v2049, 0.0
    %v2566 = vmax.f32 %v2054, 0.0
    %v2567 = vmax.f32 %v2057, 0.0
    %v2568 = vmax.f32 %v2062, 0.0
    %v2569 = vmax.f32 %v2065, 0.0
    %v2570 = vmax.f32 %v2070, 0.0
    %v2571 = vmax.f32 %v2073, 0.0
    %v2572 = vmax.f32 %v2078, 0.0
    %v2573 = vmax.f32 %v2081, 0.0
    %v2574 = vmax.f32 %v2086, 0.0
    %v2575 = vmax.f32 %v2089, 0.0
    %v2576 = vmax.f32 %v2094, 0.0
    %v2577 = vmax.f32 %v2097, 0.0
    %v2578 = vmax.f32 %v2102, 0.0
    %v2579 = vmax.f32 %v2105, 0.0
    %v2580 = vmax.f32 %v2110, 0.0
    %v2581 = vmax.f32 %v2113, 0.0
    %v2582 = vmax.f32 %v2118, 0.0
    %v2583 = vmax.f32 %v2121, 0.0
    %v2584 = vmax.f32 %v2126, 0.0
    %v2585 = vmax.f32 %v2129, 0.0
    %v2586 = vmax.f32 %v2134, 0.0
    %v2587 = vmax.f32 %v2137, 0.0
    %v2588 = vmax.f32 %v2142, 0.0
    %v2589 = vmax.f32 %v2145, 0.0
    %v2590 = vmax.f32 %v2150, 0.0
    %v2591 = vmax.f32 %v2153, 0.0
    %v2592 = vmax.f32 %v2158, 0.0
    %v2593 = vmax.f32 %v2161, 0.0
    %v2594 = vmax.f32 %v2166, 0.0
    %v2595 = vmax.f32 %v2169, 0.0
    %v2596 = vmax.f32 %v2174, 0.0
    %v2597 = vmax.f32 %v2177, 0.0
    %v2598 = vmax.f32 %v2182, 0.0
    %v2599 = vmax.f32 %v2185, 0.0
    %v2600 = vmax.f32 %v2190, 0.0
    %v2601 = vmax.f32 %v2193, 0.0
    %v2602 = vmax.f32 %v2198, 0.0
    %v2603 = vmax.f32 %v2201, 0.0
    %v2604 = vmax.f32 %v2206, 0.0
    %v2605 = vmax.f32 %v2209, 0.0
    %v2606 = vmax.f32 %v2214, 0.0
    %v2607 = vmax.f32 %v2217, 0.0
    %v2608 = vmax.f32 %v2222, 0.0
    %v2609 = vmax.f32 %v2225, 0.0
    %v2610 = vmax.f32 %v2230, 0.0
    %v2611 = vmax.f32 %v2233, 0.0
    %v2612 = vmax.f32 %v2238, 0.0
    %v2613 = vmax.f32 %v2241, 0.0
    %v2614 = vmax.f32 %v2246, 0.0
    %v2615 = vmax.f32 %v2249, 0.0
    %v2616 = vmax.f32 %v2254, 0.0
    %v2617 = vmax.f32 %v2257, 0.0
    %v2618 = vmax.f32 %v2262, 0.0
    %v2619 = vmax.f32 %v2265, 0.0
    %v2620 = vmax.f32 %v2270, 0.0
    %v2621 = vmax.f32 %v2273, 0.0
    %v2622 = vmax.f32 %v2278, 0.0
    %v2623 = vmax.f32 %v2281, 0.0
    %v2624 = vmax.f32 %v2286, 0.0
    %v2625 = vmax.f32 %v2289, 0.0
    %v2626 = vmax.f32 %v2294, 0.0
    %v2627 = vmax.f32 %v2297, 0.0
    %v2628 = vmax.f32 %v2302, 0.0
    %v2629 = vmax.f32 %v2305, 0.0
    %v2630 = vmax.f32 %v2310, 0.0
    %v2631 = vmax.f32 %v2313, 0.0
    %v2632 = vmax.f32 %v2318, 0.0
    %v2633 = vmax.f32 %v2321, 0.0
    %v2634 = vmax.f32 %v2326, 0.0
    %v2635 = vmax.f32 %v2329, 0.0
    %v2636 = vmax.f32 %v2334, 0.0
    %v2637 = vmax.f32 %v2337, 0.0
    %v2638 = vmax.f32 %v2342, 0.0
    %v2639 = vmax.f32 %v2345, 0.0
    %v2640 = vmax.f32 %v2350, 0.0
    %v2641 = vmax.f32 %v2353, 0.0
    %v2642 = vmax.f32 %v2358, 0.0
    %v2643 = vmax.f32 %v2361, 0.0
    %v2644 = vmax.f32 %v2366, 0.0
    %v2645 = vmax.f32 %v2369, 0.0
    %v2646 = vmax.f32 %v2374, 0.0
    %v2647 = vmax.f32 %v2377, 0.0
    %v2648 = vmax.f32 %v2382, 0.0
    %v2649 = vmax.f32 %v2385, 0.0
    %v2650 = vmax.f32 %v2390, 0.0
    %v2651 = vmax.f32 %v2393, 0.0
    %v2652 = vld [vmem:[#allocation2] sm:$0xff]
    %v2653 = vadd.f32 %v2396, %v2397
    %v2654 = vadd.f32 %v2653, %v2398
    %v2655 = vadd.f32 %v2654, %v2399
    %v2656 = vadd.f32 %v2655, %v2400
    %v2657 = vadd.f32 %v2656, %v2401
    %v2658 = vadd.f32 %v2657, %v2402
    %v2659 = vadd.f32 %v2658, %v2403
    %v2660 = vadd.f32 %v2659, %v2404
    %v2661 = vadd.f32 %v2660, %v2405
    %v2662 = vadd.f32 %v2661, %v2406
    %v2663 = vadd.f32 %v2662, %v2407
    %v2664 = vadd.f32 %v2663, %v2408
    %v2665 = vadd.f32 %v2664, %v2409
    %v2666 = vadd.f32 %v2665, %v2410
    %v2667 = vadd.f32 %v2666, %v2411
    %v2668 = vadd.f32 %v2667, %v2412
    %v2669 = vadd.f32 %v2668, %v2413
    %v2670 = vadd.f32 %v2669, %v2414
    %v2671 = vadd.f32 %v2670, %v2415
    %v2672 = vadd.f32 %v2671, %v2416
    %v2673 = vadd.f32 %v2672, %v2417
    %v2674 = vadd.f32 %v2673, %v2418
    %v2675 = vadd.f32 %v2674, %v2419
    %v2676 = vadd.f32 %v2675, %v2420
    %v2677 = vadd.f32 %v2676, %v2421
    %v2678 = vadd.f32 %v2677, %v2422
    %v2679 = vadd.f32 %v2678, %v2423
    %v2680 = vadd.f32 %v2679, %v2424
    %v2681 = vadd.f32 %v2680, %v2425
    %v2682 = vadd.f32 %v2681, %v2426
    %v2683 = vadd.f32 %v2682, %v2427
    %v2684 = vrot.slane %v2683, 4
    %v2685 = vadd.f32 %v2683, %v2684
    %v2686 = vrot.slane %v2685, 2
    %v2687 = vadd.f32 %v2685, %v2686
    %v2688 = vrot.slane %v2687, 1
    %v2689 = vadd.f32 %v2687, %v2688
    %v2690 = vadd.f32 %v2428, %v2429
    %v2691 = vadd.f32 %v2690, %v2430
    %v2692 = vadd.f32 %v2691, %v2431
    %v2693 = vadd.f32 %v2692, %v2432
    %v2694 = vadd.f32 %v2693, %v2433
    %v2695 = vadd.f32 %v2694, %v2434
    %v2696 = vadd.f32 %v2695, %v2435
    %v2697 = vadd.f32 %v2696, %v2436
    %v2698 = vadd.f32 %v2697, %v2437
    %v2699 = vadd.f32 %v2698, %v2438
    %v2700 = vadd.f32 %v2699, %v2439
    %v2701 = vadd.f32 %v2700, %v2440
    %v2702 = vadd.f32 %v2701, %v2441
    %v2703 = vadd.f32 %v2702, %v2442
    %v2704 = vadd.f32 %v2703, %v2443
    %v2705 = vadd.f32 %v2704, %v2444
    %v2706 = vadd.f32 %v2705, %v2445
    %v2707 = vadd.f32 %v2706, %v2446
    %v2708 = vadd.f32 %v2707, %v2447
    %v2709 = vadd.f32 %v2708, %v2448
    %v2710 = vadd.f32 %v2709, %v2449
    %v2711 = vadd.f32 %v2710, %v2450
    %v2712 = vadd.f32 %v2711, %v2451
    %v2713 = vadd.f32 %v2712, %v2452
    %v2714 = vadd.f32 %v2713, %v2453
    %v2715 = vadd.f32 %v2714, %v2454
    %v2716 = vadd.f32 %v2715, %v2455
    %v2717 = vadd.f32 %v2716, %v2456
    %v2718 = vadd.f32 %v2717, %v2457
    %v2719 = vadd.f32 %v2718, %v2458
    %v2720 = vadd.f32 %v2719, %v2459
    %v2721 = vrot.slane %v2720, 4
    %v2722 = vadd.f32 %v2720, %v2721
    %v2723 = vrot.slane %v2722, 2
    %v2724 = vadd.f32 %v2722, %v2723
    %v2725 = vrot.slane %v2724, 1
    %v2726 = vadd.f32 %v2724, %v2725
    %v2727 = vadd.f32 %v2460, %v2461
    %v2728 = vadd.f32 %v2727, %v2462
    %v2729 = vadd.f32 %v2728, %v2463
    %v2730 = vadd.f32 %v2729, %v2464
    %v2731 = vadd.f32 %v2730, %v2465
    %v2732 = vadd.f32 %v2731, %v2466
    %v2733 = vadd.f32 %v2732, %v2467
    %v2734 = vadd.f32 %v2733, %v2468
    %v2735 = vadd.f32 %v2734, %v2469
    %v2736 = vadd.f32 %v2735, %v2470
    %v2737 = vadd.f32 %v2736, %v2471
    %v2738 = vadd.f32 %v2737, %v2472
    %v2739 = vadd.f32 %v2738, %v2473
    %v2740 = vadd.f32 %v2739, %v2474
    %v2741 = vadd.f32 %v2740, %v2475
    %v2742 = vadd.f32 %v2741, %v2476
    %v2743 = vadd.f32 %v2742, %v2477
    %v2744 = vadd.f32 %v2743, %v2478
    %v2745 = vadd.f32 %v2744, %v2479
    %v2746 = vadd.f32 %v2745, %v2480
    %v2747 = vadd.f32 %v2746, %v2481
    %v2748 = vadd.f32 %v2747, %v2482
    %v2749 = vadd.f32 %v2748, %v2483
    %v2750 = vadd.f32 %v2749, %v2484
    %v2751 = vadd.f32 %v2750, %v2485
    %v2752 = vadd.f32 %v2751, %v2486
    %v2753 = vadd.f32 %v2752, %v2487
    %v2754 = vadd.f32 %v2753, %v2488
    %v2755 = vadd.f32 %v2754, %v2489
    %v2756 = vadd.f32 %v2755, %v2490
    %v2757 = vadd.f32 %v2756, %v2491
    %v2758 = vrot.slane %v2757, 4
    %v2759 = vadd.f32 %v2757, %v2758
    %v2760 = vrot.slane %v2759, 2
    %v2761 = vadd.f32 %v2759, %v2760
    %v2762 = vrot.slane %v2761, 1
    %v2763 = vadd.f32 %v2761, %v2762
    %v2764 = vadd.f32 %v2492, %v2493
    %v2765 = vadd.f32 %v2764, %v2494
    %v2766 = vadd.f32 %v2765, %v2495
    %v2767 = vadd.f32 %v2766, %v2496
    %v2768 = vadd.f32 %v2767, %v2497
    %v2769 = vadd.f32 %v2768, %v2498
    %v2770 = vadd.f32 %v2769, %v2499
    %v2771 = vadd.f32 %v2770, %v2500
    %v2772 = vadd.f32 %v2771, %v2501
    %v2773 = vadd.f32 %v2772, %v2502
    %v2774 = vadd.f32 %v2773, %v2503
    %v2775 = vadd.f32 %v2774, %v2504
    %v2776 = vadd.f32 %v2775, %v2505
    %v2777 = vadd.f32 %v2776, %v2506
    %v2778 = vadd.f32 %v2777, %v2507
    %v2779 = vadd.f32 %v2778, %v2508
    %v2780 = vadd.f32 %v2779, %v2509
    %v2781 = vadd.f32 %v2780, %v2510
    %v2782 = vadd.f32 %v2781, %v2511
    %v2783 = vadd.f32 %v2782, %v2512
    %v2784 = vadd.f32 %v2783, %v2513
    %v2785 = vadd.f32 %v2784, %v2514
    %v2786 = vadd.f32 %v2785, %v2515
    %v2787 = vadd.f32 %v2786, %v2516
    %v2788 = vadd.f32 %v2787, %v2517
    %v2789 = vadd.f32 %v2788, %v2518
    %v2790 = vadd.f32 %v2789, %v2519
    %v2791 = vadd.f32 %v2790, %v2520
    %v2792 = vadd.f32 %v2791, %v2521
    %v2793 = vadd.f32 %v2792, %v2522
    %v2794 = vadd.f32 %v2793, %v2523
    %v2795 = vrot.slane %v2794, 4
    %v2796 = vadd.f32 %v2794, %v2795
    %v2797 = vrot.slane %v2796, 2
    %v2798 = vadd.f32 %v2796, %v2797
    %v2799 = vrot.slane %v2798, 1
    %v2800 = vadd.f32 %v2798, %v2799
    %v2801 = vadd.f32 %v2524, %v2525
    %v2802 = vadd.f32 %v2801, %v2526
    %v2803 = vadd.f32 %v2802, %v2527
    %v2804 = vadd.f32 %v2803, %v2528
    %v2805 = vadd.f32 %v2804, %v2529
    %v2806 = vadd.f32 %v2805, %v2530
    %v2807 = vadd.f32 %v2806, %v2531
    %v2808 = vadd.f32 %v2807, %v2532
    %v2809 = vadd.f32 %v2808, %v2533
    %v2810 = vadd.f32 %v2809, %v2534
    %v2811 = vadd.f32 %v2810, %v2535
    %v2812 = vadd.f32 %v2811, %v2536
    %v2813 = vadd.f32 %v2812, %v2537
    %v2814 = vadd.f32 %v2813, %v2538
    %v2815 = vadd.f32 %v2814, %v2539
    %v2816 = vadd.f32 %v2815, %v2540
    %v2817 = vadd.f32 %v2816, %v2541
    %v2818 = vadd.f32 %v2817, %v2542
    %v2819 = vadd.f32 %v2818, %v2543
    %v2820 = vadd.f32 %v2819, %v2544
    %v2821 = vadd.f32 %v2820, %v2545
    %v2822 = vadd.f32 %v2821, %v2546
    %v2823 = vadd.f32 %v2822, %v2547
    %v2824 = vadd.f32 %v2823, %v2548
    %v2825 = vadd.f32 %v2824, %v2549
    %v2826 = vadd.f32 %v2825, %v2550
    %v2827 = vadd.f32 %v2826, %v2551
    %v2828 = vadd.f32 %v2827, %v2552
    %v2829 = vadd.f32 %v2828, %v2553
    %v2830 = vadd.f32 %v2829, %v2554
    %v2831 = vadd.f32 %v2830, %v2555
    %v2832 = vrot.slane %v2831, 4
    %v2833 = vadd.f32 %v2831, %v2832
    %v2834 = vrot.slane %v2833, 2
    %v2835 = vadd.f32 %v2833, %v2834
    %v2836 = vrot.slane %v2835, 1
    %v2837 = vadd.f32 %v2835, %v2836
    %v2838 = vadd.f32 %v2556, %v2557
    %v2839 = vadd.f32 %v2838, %v2558
    %v2840 = vadd.f32 %v2839, %v2559
    %v2841 = vadd.f32 %v2840, %v2560
    %v2842 = vadd.f32 %v2841, %v2561
    %v2843 = vadd.f32 %v2842, %v2562
    %v2844 = vadd.f32 %v2843, %v2563
    %v2845 = vadd.f32 %v2844, %v2564
    %v2846 = vadd.f32 %v2845, %v2565
    %v2847 = vadd.f32 %v2846, %v2566
    %v2848 = vadd.f32 %v2847, %v2567
    %v2849 = vadd.f32 %v2848, %v2568
    %v2850 = vadd.f32 %v2849, %v2569
    %v2851 = vadd.f32 %v2850, %v2570
    %v2852 = vadd.f32 %v2851, %v2571
    %v2853 = vadd.f32 %v2852, %v2572
    %v2854 = vadd.f32 %v2853, %v2573
    %v2855 = vadd.f32 %v2854, %v2574
    %v2856 = vadd.f32 %v2855, %v2575
    %v2857 = vadd.f32 %v2856, %v2576
    %v2858 = vadd.f32 %v2857, %v2577
    %v2859 = vadd.f32 %v2858, %v2578
    %v2860 = vadd.f32 %v2859, %v2579
    %v2861 = vadd.f32 %v2860, %v2580
    %v2862 = vadd.f32 %v2861, %v2581
    %v2863 = vadd.f32 %v2862, %v2582
    %v2864 = vadd.f32 %v2863, %v2583
    %v2865 = vadd.f32 %v2864, %v2584
    %v2866 = vadd.f32 %v2865, %v2585
    %v2867 = vadd.f32 %v2866, %v2586
    %v2868 = vadd.f32 %v2867, %v2587
    %v2869 = vrot.slane %v2868, 4
    %v2870 = vadd.f32 %v2868, %v2869
    %v2871 = vrot.slane %v2870, 2
    %v2872 = vadd.f32 %v2870, %v2871
    %v2873 = vrot.slane %v2872, 1
    %v2874 = vadd.f32 %v2872, %v2873
    %v2875 = vadd.f32 %v2588, %v2589
    %v2876 = vadd.f32 %v2875, %v2590
    %v2877 = vadd.f32 %v2876, %v2591
    %v2878 = vadd.f32 %v2877, %v2592
    %v2879 = vadd.f32 %v2878, %v2593
    %v2880 = vadd.f32 %v2879, %v2594
    %v2881 = vadd.f32 %v2880, %v2595
    %v2882 = vadd.f32 %v2881, %v2596
    %v2883 = vadd.f32 %v2882, %v2597
    %v2884 = vadd.f32 %v2883, %v2598
    %v2885 = vadd.f32 %v2884, %v2599
    %v2886 = vadd.f32 %v2885, %v2600
    %v2887 = vadd.f32 %v2886, %v2601
    %v2888 = vadd.f32 %v2887, %v2602
    %v2889 = vadd.f32 %v2888, %v2603
    %v2890 = vadd.f32 %v2889, %v2604
    %v2891 = vadd.f32 %v2890, %v2605
    %v2892 = vadd.f32 %v2891, %v2606
    %v2893 = vadd.f32 %v2892, %v2607
    %v2894 = vadd.f32 %v2893, %v2608
    %v2895 = vadd.f32 %v2894, %v2609
    %v2896 = vadd.f32 %v2895, %v2610
    %v2897 = vadd.f32 %v2896, %v2611
    %v2898 = vadd.f32 %v2897, %v2612
    %v2899 = vadd.f32 %v2898, %v2613
    %v2900 = vadd.f32 %v2899, %v2614
    %v2901 = vadd.f32 %v2900, %v2615
    %v2902 = vadd.f32 %v2901, %v2616
    %v2903 = vadd.f32 %v2902, %v2617
    %v2904 = vadd.f32 %v2903, %v2618
    %v2905 = vadd.f32 %v2904, %v2619
    %v2906 = vrot.slane %v2905, 4
    %v2907 = vadd.f32 %v2905, %v2906
    %v2908 = vrot.slane %v2907, 2
    %v2909 = vadd.f32 %v2907, %v2908
    %v2910 = vrot.slane %v2909, 1
    %v2911 = vadd.f32 %v2909, %v2910
    %v2912 = vadd.f32 %v2620, %v2621
    %v2913 = vadd.f32 %v2912, %v2622
    %v2914 = vadd.f32 %v2913, %v2623
    %v2915 = vadd.f32 %v2914, %v2624
    %v2916 = vadd.f32 %v2915, %v2625
    %v2917 = vadd.f32 %v2916, %v2626
    %v2918 = vadd.f32 %v2917, %v2627
    %v2919 = vadd.f32 %v2918, %v2628
    %v2920 = vadd.f32 %v2919, %v2629
    %v2921 = vadd.f32 %v2920, %v2630
    %v2922 = vadd.f32 %v2921, %v2631
    %v2923 = vadd.f32 %v2922, %v2632
    %v2924 = vadd.f32 %v2923, %v2633
    %v2925 = vadd.f32 %v2924, %v2634
    %v2926 = vadd.f32 %v2925, %v2635
    %v2927 = vadd.f32 %v2926, %v2636
    %v2928 = vadd.f32 %v2927, %v2637
    %v2929 = vadd.f32 %v2928, %v2638
    %v2930 = vadd.f32 %v2929, %v2639
    %v2931 = vadd.f32 %v2930, %v2640
    %v2932 = vadd.f32 %v2931, %v2641
    %v2933 = vadd.f32 %v2932, %v2642
    %v2934 = vadd.f32 %v2933, %v2643
    %v2935 = vadd.f32 %v2934, %v2644
    %v2936 = vadd.f32 %v2935, %v2645
    %v2937 = vadd.f32 %v2936, %v2646
    %v2938 = vadd.f32 %v2937, %v2647
    %v2939 = vadd.f32 %v2938, %v2648
    %v2940 = vadd.f32 %v2939, %v2649
    %v2941 = vadd.f32 %v2940, %v2650
    %v2942 = vadd.f32 %v2941, %v2651
    %v2943 = vrot.slane %v2942, 4
    %v2944 = vadd.f32 %v2942, %v2943
    %v2945 = vrot.slane %v2944, 2
    %v2946 = vadd.f32 %v2944, %v2945
    %v2947 = vrot.slane %v2946, 1
    %v2948 = vadd.f32 %v2946, %v2947
    %vm2957 = vcmask 1041409
    %v2958 = vsel %vm2957, %v2726, %v2689
    %vm2959 = vcmask 1042434
    %v2960 = vsel %vm2959, %v2763, %v2958
    %vm2961 = vcmask 1043459
    %v2962 = vsel %vm2961, %v2800, %v2960
    %vm2963 = vcmask 1044484
    %v2964 = vsel %vm2963, %v2837, %v2962
    %vm2965 = vcmask 1045509
    %v2966 = vsel %vm2965, %v2874, %v2964
    %vm2967 = vcmask 1046534
    %v2968 = vsel %vm2967, %v2911, %v2966
    %vm2969 = vcmask 1047559
    %v2970 = vsel %vm2969, %v2948, %v2968
    %v2972 = vadd.f32 %v2652, %v2970
    %2973 = vst [vmem:[#allocation2] sm:$0xff] %v2972
    // Predicated region
    $region26: #{tpu_custom_call.1} parent=1 // pred_check
      %p2974 = pneg %p22
    $region27: #{tpu_custom_call.1} parent=1 // pred_check_branch
      %2976 = sbr.rel (%p2974) target = $region29
    $region28: #{tpu_custom_call.1} parent=1 // pred_region
      %v2977 = vld [vmem:[#allocation2] sm:$0xff]
      %v2978 = vld [vmem:[%s3] sm:$0xff]
      %v2979 = vld [vmem:[%s3 + $0x8] sm:$0xff]
      %v2980 = vld [vmem:[%s3 + $0x10] sm:$0xff]
      %v2981 = vld [vmem:[%s3 + $0x18] sm:$0xff]
      %v2982 = vld [vmem:[%s3 + $0x20] sm:$0xff]
      %v2983 = vld [vmem:[%s3 + $0x28] sm:$0xff]
      %v2984 = vld [vmem:[%s3 + $0x30] sm:$0xff]
      %v2985 = vld [vmem:[%s3 + $0x38] sm:$0xff]
      %v2986 = vld [vmem:[%s3 + $0x40] sm:$0xff]
      %v2987 = vld [vmem:[%s3 + $0x48] sm:$0xff]
      %v2988 = vld [vmem:[%s3 + $0x50] sm:$0xff]
      %v2989 = vld [vmem:[%s3 + $0x58] sm:$0xff]
      %v2990 = vld [vmem:[%s3 + $0x60] sm:$0xff]
      %v2991 = vld [vmem:[%s3 + $0x68] sm:$0xff]
      %v2992 = vld [vmem:[%s3 + $0x70] sm:$0xff]
      %v2993 = vld [vmem:[%s3 + $0x78] sm:$0xff]
      %v2994 = vld [vmem:[%s4] sm:$0x1]
      %v2996 = vlaneseq
      %v2997 = vshrl.u32 %v2996, 7
      %v2998 = vsub.s32 0, %v2997
      %v2999 = vrot.slane %v2994, %v2998
      %3001 = vmatprep.subr.mxu0 0.0
      %3002 = vmatpush1.msra.mxu0 %v2993
      %3003 = vmatprep.subr.mxu0 0.0
      %3004 = vmatpush1.msra.mxu0 %v2992
      %3005 = vmatprep.subr.mxu0 0.0
      %3006 = vmatpush1.msra.mxu0 %v2991
      %3007 = vmatprep.subr.mxu0 0.0
      %3008 = vmatpush1.msra.mxu0 %v2990
      %3009 = vmatprep.subr.mxu0 0.0
      %3010 = vmatpush1.msra.mxu0 %v2989
      %3011 = vmatprep.subr.mxu0 0.0
      %3012 = vmatpush1.msra.mxu0 %v2988
      %3013 = vmatprep.subr.mxu0 0.0
      %3014 = vmatpush1.msra.mxu0 %v2987
      %3015 = vmatprep.subr.mxu0 0.0
      %3016 = vmatpush1.msra.mxu0 %v2986
      %3017 = vmatprep.subr.mxu0 0.0
      %3018 = vmatpush1.msra.mxu0 %v2985
      %3019 = vmatprep.subr.mxu0 0.0
      %3020 = vmatpush1.msra.mxu0 %v2984
      %3021 = vmatprep.subr.mxu0 0.0
      %3022 = vmatpush1.msra.mxu0 %v2983
      %3023 = vmatprep.subr.mxu0 0.0
      %3024 = vmatpush1.msra.mxu0 %v2982
      %3025 = vmatprep.subr.mxu0 0.0
      %3026 = vmatpush1.msra.mxu0 %v2981
      %3027 = vmatprep.subr.mxu0 0.0
      %3028 = vmatpush1.msra.mxu0 %v2980
      %3029 = vmatprep.subr.mxu0 0.0
      %3030 = vmatpush1.msra.mxu0 %v2979
      %3031 = vmatprep.subr.mxu0 0.0
      %3032 = vmatpush1.msra.mxu0 %v2978
      %3033 = vmatprep.subr.mxu0 0.0
      %3034 = vmatpush2.msra.mxu0 0.0
      %3035 = vmatprep.subr.mxu0 0.0
      %3036 = vmatpush2.msra.mxu0 0.0
      %3037 = vmatprep.subr.mxu0 0.0
      %3038 = vmatpush2.msra.mxu0 0.0
      %3039 = vmatprep.subr.mxu0 0.0
      %3040 = vmatpush2.msra.mxu0 0.0
      %3041 = vmatprep.subr.mxu0 0.0
      %3042 = vmatpush2.msra.mxu0 0.0
      %3043 = vmatprep.subr.mxu0 0.0
      %3044 = vmatpush2.msra.mxu0 0.0
      %3045 = vmatprep.subr.mxu0 0.0
      %3046 = vmatpush2.msra.mxu0 0.0
      %3047 = vmatprep.subr.mxu0 0.0
      %3048 = vmatpush2.msra.mxu0 0.0
      %3049 = vmatprep.subr.mxu0 0.0
      %3050 = vmatpush2.msra.mxu0 0.0
      %3051 = vmatprep.subr.mxu0 0.0
      %3052 = vmatpush2.msra.mxu0 0.0
      %3053 = vmatprep.subr.mxu0 0.0
      %3054 = vmatpush2.msra.mxu0 0.0
      %3055 = vmatprep.subr.mxu0 0.0
      %3056 = vmatpush2.msra.mxu0 0.0
      %3057 = vmatprep.subr.mxu0 0.0
      %3058 = vmatpush2.msra.mxu0 0.0
      %3059 = vmatprep.subr.mxu0 0.0
      %3060 = vmatpush2.msra.mxu0 0.0
      %3061 = vmatprep.subr.mxu0 0.0
      %3062 = vmatpush2.msra.mxu0 0.0
      %3063 = vmatprep.subr.mxu0 0.0
      %3064 = vmatpush2.msra.mxu0 0.0
      %3065 = vmatprep.mubr.f32.mxu0 0.0
      %3066 = vmatmul.mubr.f32.gmra.mxu0 %v2977
      %v3067 = vpop.f32.mrf.mxu0
      %v3068 = vadd.f32 %v2999, %v3067
      %v3069 = vpop.f32.mrf.mxu0
      %3070 = vdwg.mxu0
      %3071 = vst [vmem:[#allocation3] sm:$0xff] %v3068
    $region29: #{tpu_custom_call.1} parent=1 // pred_fallthru
      _
    // Predicated region
    $region30: #{tpu_custom_call.1} parent=1 // pred_check
      _
    $region31: #{tpu_custom_call.1} parent=1 // pred_check_branch
      %3073 = sbr.rel (0) target = $region33
    $region32: #{tpu_custom_call.1} parent=1 // pred_region
      %s3075 = ssub.s32 128, 128
      %3076 = vsyncadd [#allocation4], %s3075
      %s3078 = sshll.u32 [#allocation3], 4
      %s3079 = int_to_ptr.vmem [resolvable:$true] %s3078
      %3081 = dma.vmem_to_hbm [thread:$0]  %s3079, 128, %s5, [#allocation4]
    $region33: #{tpu_custom_call.1} parent=1 // pred_fallthru
      _
    // Predicated region
    $region34: #{tpu_custom_call.1} parent=1 // pred_check
      _
    $region35: #{tpu_custom_call.1} parent=1 // pred_check_branch
      %3083 = sbr.rel (0) target = $region37
    $region36: #{tpu_custom_call.1} parent=1 // pred_region
      %3084 = dma.done [#allocation4], 128
    $region37: #{tpu_custom_call.1} parent=1 // pred_fallthru
      _
    %3085 = vsyncpa [#allocation4], 1

// kernel: tpu_custom_call.1
$region0: #{tpu_custom_call.1}
  #allocation0 [shape = 'u32[]', space=smem, size = 0x4, offset = 0x4, fixed_abs, tag = 'smem constant byte address 0x4 - core index']
  #allocation1 [shape = 'u32[144,128]{1,0:T(1,128)}', space=vmem, size = 0x12000, scoped, tag = 'internal scratch']
  #allocation2 [shape = 'f32[8,128]{1,0:T(8,128)}', space=vmem, size = 0x1000, scoped, tag = 'scratch operand']
  %s0 = inlined_call_operand.vmem [shape: bf16[8,256,36], index: 0, kind: input, shape index: {}]
  %s1 = inlined_call_operand.vmem [shape: bf16[36,128], index: 1, kind: input, shape index: {}]
  %s2 = inlined_call_operand.vmem [shape: f32[1,128], index: 2, kind: input, shape index: {}]
  %s3 = inlined_call_operand.vmem [shape: f32[128,128], index: 3, kind: input, shape index: {}]
  %s4 = inlined_call_operand.vmem [shape: f32[1,128], index: 4, kind: input, shape index: {}]
  %s5 = inlined_call_operand.hbm [shape: f32[8,128], index: 5, kind: output, shape index: {}]
  %s6 = sld [smem:[#allocation0]]
  $region38: #{tpu_custom_call.1} parent=0
    _
  %s8 = ssub.s32 1, %s6
  %s9 = scalar_select 0, %s8, %s6
  $region1: #{tpu_custom_call.1} parent=0
    #allocation3 [shape = 'u8[4096]{0}', space=vmem, size = 0x1000, scoped, tag = 'output window, operand 0, single buffered']
    #allocation4 [shape = 's32[1]{0}', space=sflag, size = 0x4, scoped, tag = 'scoped memory for tpu_custom_call.1']
    %10 = vsyncpa [#allocation4], 0
    // Predicated region
    $region2: #{tpu_custom_call.1} parent=1 // pred_check
      _
    $region3: #{tpu_custom_call.1} parent=1 // pred_check_branch
      %12 = sbr.rel (0) target = $region5
    $region4: #{tpu_custom_call.1} parent=1 // pred_region
      _
    $region5: #{tpu_custom_call.1} parent=1 // pred_fallthru
      _
    // Predicated region
    $region6: #{tpu_custom_call.1} parent=1 // pred_check
      _
    $region7: #{tpu_custom_call.1} parent=1 // pred_check_branch
      %14 = sbr.rel (0) target = $region9
    $region8: #{tpu_custom_call.1} parent=1 // pred_region
      _
    $region9: #{tpu_custom_call.1} parent=1 // pred_fallthru
      _
    // Predicated region
    $region10: #{tpu_custom_call.1} parent=1 // pred_check
      _
    $region11: #{tpu_custom_call.1} parent=1 // pred_check_branch
      %16 = sbr.rel (0) target = $region13
    $region12: #{tpu_custom_call.1} parent=1 // pred_region
      _
    $region13: #{tpu_custom_call.1} parent=1 // pred_fallthru
      _
    // Predicated region
    $region14: #{tpu_custom_call.1} parent=1 // pred_check
      _
    $region15: #{tpu_custom_call.1} parent=1 // pred_check_branch
      %18 = sbr.rel (0) target = $region17
    $region16: #{tpu_custom_call.1} parent=1 // pred_region
      _
    $region17: #{tpu_custom_call.1} parent=1 // pred_fallthru
      _
    // Predicated region
    $region18: #{tpu_custom_call.1} parent=1 // pred_check
      _
    $region19: #{tpu_custom_call.1} parent=1 // pred_check_branch
      %20 = sbr.rel (0) target = $region21
    $region20: #{tpu_custom_call.1} parent=1 // pred_region
      _
    $region21: #{tpu_custom_call.1} parent=1 // pred_fallthru
      _
    %p22 = scmp.eq.s32.totalorder 0, 0
    // Predicated region
    $region22: #{tpu_custom_call.1} parent=1 // pred_check
      %p23 = pneg %p22
    $region23: #{tpu_custom_call.1} parent=1 // pred_check_branch
      %25 = sbr.rel (%p23) target = $region25
    $region24: #{tpu_custom_call.1} parent=1 // pred_region
      %26 = vst [vmem:[#allocation2] sm:$0xff] 0.0
    $region25: #{tpu_custom_call.1} parent=1 // pred_fallthru
      _
    %v27 = vld [vmem:[%s0] sm:$0xf]
    %v28 = vld [vmem:[%s0 + $0x4] sm:$0xf]
    %v29 = vld [vmem:[%s0 + $0x8] sm:$0xf]
    %v30 = vld [vmem:[%s0 + $0xc] sm:$0xf]
    %v31 = vld [vmem:[%s0 + $0x10] sm:$0xf]
    %v32 = vld [vmem:[%s0 + $0x14] sm:$0xf]
    %v33 = vld [vmem:[%s0 + $0x18] sm:$0xf]
    %v34 = vld [vmem:[%s0 + $0x1c] sm:$0xf]
    %v35 = vld [vmem:[%s0 + $0x20] sm:$0xf]
    %v36 = vld [vmem:[%s0 + $0x24] sm:$0xf]
    %v37 = vld [vmem:[%s0 + $0x28] sm:$0xf]
    %v38 = vld [vmem:[%s0 + $0x2c] sm:$0xf]
    %v39 = vld [vmem:[%s0 + $0x30] sm:$0xf]
    %v40 = vld [vmem:[%s0 + $0x34] sm:$0xf]
    %v41 = vld [vmem:[%s0 + $0x38] sm:$0xf]
    %v42 = vld [vmem:[%s0 + $0x3c] sm:$0xf]
    %v43 = vld [vmem:[%s0 + $0x40] sm:$0xf]
    %v44 = vld [vmem:[%s0 + $0x44] sm:$0xf]
    %v45 = vld [vmem:[%s0 + $0x48] sm:$0xf]
    %v46 = vld [vmem:[%s0 + $0x4c] sm:$0xf]
    %v47 = vld [vmem:[%s0 + $0x50] sm:$0xf]
    %v48 = vld [vmem:[%s0 + $0x54] sm:$0xf]
    %v49 = vld [vmem:[%s0 + $0x58] sm:$0xf]
    %v50 = vld [vmem:[%s0 + $0x5c] sm:$0xf]
    %v51 = vld [vmem:[%s0 + $0x60] sm:$0xf]
    %v52 = vld [vmem:[%s0 + $0x64] sm:$0xf]
    %v53 = vld [vmem:[%s0 + $0x68] sm:$0xf]
    %v54 = vld [vmem:[%s0 + $0x6c] sm:$0xf]
    %v55 = vld [vmem:[%s0 + $0x70] sm:$0xf]
    %v56 = vld [vmem:[%s0 + $0x74] sm:$0xf]
    %v57 = vld [vmem:[%s0 + $0x78] sm:$0xf]
    %v58 = vld [vmem:[%s0 + $0x7c] sm:$0xf]
    %v59 = vld [vmem:[%s0 + $0x80] sm:$0xf]
    %v60 = vld [vmem:[%s0 + $0x84] sm:$0xf]
    %v61 = vld [vmem:[%s0 + $0x88] sm:$0xf]
    %v62 = vld [vmem:[%s0 + $0x8c] sm:$0xf]
    %v63 = vld [vmem:[%s0 + $0x90] sm:$0xf]
    %v64 = vld [vmem:[%s0 + $0x94] sm:$0xf]
    %v65 = vld [vmem:[%s0 + $0x98] sm:$0xf]
    %v66 = vld [vmem:[%s0 + $0x9c] sm:$0xf]
    %v67 = vld [vmem:[%s0 + $0xa0] sm:$0xf]
    %v68 = vld [vmem:[%s0 + $0xa4] sm:$0xf]
    %v69 = vld [vmem:[%s0 + $0xa8] sm:$0xf]
    %v70 = vld [vmem:[%s0 + $0xac] sm:$0xf]
    %v71 = vld [vmem:[%s0 + $0xb0] sm:$0xf]
    %v72 = vld [vmem:[%s0 + $0xb4] sm:$0xf]
    %v73 = vld [vmem:[%s0 + $0xb8] sm:$0xf]
    %v74 = vld [vmem:[%s0 + $0xbc] sm:$0xf]
    %v75 = vld [vmem:[%s0 + $0xc0] sm:$0xf]
    %v76 = vld [vmem:[%s0 + $0xc4] sm:$0xf]
    %v77 = vld [vmem:[%s0 + $0xc8] sm:$0xf]
    %v78 = vld [vmem:[%s0 + $0xcc] sm:$0xf]
    %v79 = vld [vmem:[%s0 + $0xd0] sm:$0xf]
    %v80 = vld [vmem:[%s0 + $0xd4] sm:$0xf]
    %v81 = vld [vmem:[%s0 + $0xd8] sm:$0xf]
    %v82 = vld [vmem:[%s0 + $0xdc] sm:$0xf]
    %v83 = vld [vmem:[%s0 + $0xe0] sm:$0xf]
    %v84 = vld [vmem:[%s0 + $0xe4] sm:$0xf]
    %v85 = vld [vmem:[%s0 + $0xe8] sm:$0xf]
    %v86 = vld [vmem:[%s0 + $0xec] sm:$0xf]
    %v87 = vld [vmem:[%s0 + $0xf0] sm:$0xf]
    %v88 = vld [vmem:[%s0 + $0xf4] sm:$0xf]
    %v89 = vld [vmem:[%s0 + $0xf8] sm:$0xf]
    %v90 = vld [vmem:[%s0 + $0xfc] sm:$0xf]
    %v91 = vld [vmem:[%s0 + $0x100] sm:$0xf]
    %v92 = vld [vmem:[%s0 + $0x104] sm:$0xf]
    %v93 = vld [vmem:[%s0 + $0x108] sm:$0xf]
    %v94 = vld [vmem:[%s0 + $0x10c] sm:$0xf]
    %v95 = vld [vmem:[%s0 + $0x110] sm:$0xf]
    %v96 = vld [vmem:[%s0 + $0x114] sm:$0xf]
    %v97 = vld [vmem:[%s0 + $0x118] sm:$0xf]
    %v98 = vld [vmem:[%s0 + $0x11c] sm:$0xf]
    %v99 = vld [vmem:[%s0 + $0x120] sm:$0xf]
    %v100 = vld [vmem:[%s0 + $0x124] sm:$0xf]
    %v101 = vld [vmem:[%s0 + $0x128] sm:$0xf]
    %v102 = vld [vmem:[%s0 + $0x12c] sm:$0xf]
    %v103 = vld [vmem:[%s0 + $0x130] sm:$0xf]
    %v104 = vld [vmem:[%s0 + $0x134] sm:$0xf]
    %v105 = vld [vmem:[%s0 + $0x138] sm:$0xf]
    %v106 = vld [vmem:[%s0 + $0x13c] sm:$0xf]
    %v107 = vld [vmem:[%s0 + $0x140] sm:$0xf]
    %v108 = vld [vmem:[%s0 + $0x144] sm:$0xf]
    %v109 = vld [vmem:[%s0 + $0x148] sm:$0xf]
    %v110 = vld [vmem:[%s0 + $0x14c] sm:$0xf]
    %v111 = vld [vmem:[%s0 + $0x150] sm:$0xf]
    %v112 = vld [vmem:[%s0 + $0x154] sm:$0xf]
    %v113 = vld [vmem:[%s0 + $0x158] sm:$0xf]
    %v114 = vld [vmem:[%s0 + $0x15c] sm:$0xf]
    %v115 = vld [vmem:[%s0 + $0x160] sm:$0xf]
    %v116 = vld [vmem:[%s0 + $0x164] sm:$0xf]
    %v117 = vld [vmem:[%s0 + $0x168] sm:$0xf]
    %v118 = vld [vmem:[%s0 + $0x16c] sm:$0xf]
    %v119 = vld [vmem:[%s0 + $0x170] sm:$0xf]
    %v120 = vld [vmem:[%s0 + $0x174] sm:$0xf]
    %v121 = vld [vmem:[%s0 + $0x178] sm:$0xf]
    %v122 = vld [vmem:[%s0 + $0x17c] sm:$0xf]
    %v123 = vld [vmem:[%s0 + $0x180] sm:$0xf]
    %v124 = vld [vmem:[%s0 + $0x184] sm:$0xf]
    %v125 = vld [vmem:[%s0 + $0x188] sm:$0xf]
    %v126 = vld [vmem:[%s0 + $0x18c] sm:$0xf]
    %v127 = vld [vmem:[%s0 + $0x190] sm:$0xf]
    %v128 = vld [vmem:[%s0 + $0x194] sm:$0xf]
    %v129 = vld [vmem:[%s0 + $0x198] sm:$0xf]
    %v130 = vld [vmem:[%s0 + $0x19c] sm:$0xf]
    %v131 = vld [vmem:[%s0 + $0x1a0] sm:$0xf]
    %v132 = vld [vmem:[%s0 + $0x1a4] sm:$0xf]
    %v133 = vld [vmem:[%s0 + $0x1a8] sm:$0xf]
    %v134 = vld [vmem:[%s0 + $0x1ac] sm:$0xf]
    %v135 = vld [vmem:[%s0 + $0x1b0] sm:$0xf]
    %v136 = vld [vmem:[%s0 + $0x1b4] sm:$0xf]
    %v137 = vld [vmem:[%s0 + $0x1b8] sm:$0xf]
    %v138 = vld [vmem:[%s0 + $0x1bc] sm:$0xf]
    %v139 = vld [vmem:[%s0 + $0x1c0] sm:$0xf]
    %v140 = vld [vmem:[%s0 + $0x1c4] sm:$0xf]
    %v141 = vld [vmem:[%s0 + $0x1c8] sm:$0xf]
    %v142 = vld [vmem:[%s0 + $0x1cc] sm:$0xf]
    %v143 = vld [vmem:[%s0 + $0x1d0] sm:$0xf]
    %v144 = vld [vmem:[%s0 + $0x1d4] sm:$0xf]
    %v145 = vld [vmem:[%s0 + $0x1d8] sm:$0xf]
    %v146 = vld [vmem:[%s0 + $0x1dc] sm:$0xf]
    %v147 = vld [vmem:[%s0 + $0x1e0] sm:$0xf]
    %v148 = vld [vmem:[%s0 + $0x1e4] sm:$0xf]
    %v149 = vld [vmem:[%s0 + $0x1e8] sm:$0xf]
    %v150 = vld [vmem:[%s0 + $0x1ec] sm:$0xf]
    %v151 = vld [vmem:[%s0 + $0x1f0] sm:$0xf]
    %v152 = vld [vmem:[%s0 + $0x1f4] sm:$0xf]
    %v153 = vld [vmem:[%s0 + $0x1f8] sm:$0xf]
    %v154 = vld [vmem:[%s0 + $0x1fc] sm:$0xf]
    %v155 = vld [vmem:[%s0 + $0x200] sm:$0xf]
    %v156 = vld [vmem:[%s0 + $0x204] sm:$0xf]
    %v157 = vld [vmem:[%s0 + $0x208] sm:$0xf]
    %v158 = vld [vmem:[%s0 + $0x20c] sm:$0xf]
    %v159 = vld [vmem:[%s0 + $0x210] sm:$0xf]
    %v160 = vld [vmem:[%s0 + $0x214] sm:$0xf]
    %v161 = vld [vmem:[%s0 + $0x218] sm:$0xf]
    %v162 = vld [vmem:[%s0 + $0x21c] sm:$0xf]
    %v163 = vld [vmem:[%s0 + $0x220] sm:$0xf]
    %v164 = vld [vmem:[%s0 + $0x224] sm:$0xf]
    %v165 = vld [vmem:[%s0 + $0x228] sm:$0xf]
    %v166 = vld [vmem:[%s0 + $0x22c] sm:$0xf]
    %v167 = vld [vmem:[%s0 + $0x230] sm:$0xf]
    %v168 = vld [vmem:[%s0 + $0x234] sm:$0xf]
    %v169 = vld [vmem:[%s0 + $0x238] sm:$0xf]
    %v170 = vld [vmem:[%s0 + $0x23c] sm:$0xf]
    %v171 = vld [vmem:[%s0 + $0x240] sm:$0xf]
    %v172 = vld [vmem:[%s0 + $0x244] sm:$0xf]
    %v173 = vld [vmem:[%s0 + $0x248] sm:$0xf]
    %v174 = vld [vmem:[%s0 + $0x24c] sm:$0xf]
    %v175 = vld [vmem:[%s0 + $0x250] sm:$0xf]
    %v176 = vld [vmem:[%s0 + $0x254] sm:$0xf]
    %v177 = vld [vmem:[%s0 + $0x258] sm:$0xf]
    %v178 = vld [vmem:[%s0 + $0x25c] sm:$0xf]
    %v179 = vld [vmem:[%s0 + $0x260] sm:$0xf]
    %v180 = vld [vmem:[%s0 + $0x264] sm:$0xf]
    %v181 = vld [vmem:[%s0 + $0x268] sm:$0xf]
    %v182 = vld [vmem:[%s0 + $0x26c] sm:$0xf]
    %v183 = vld [vmem:[%s0 + $0x270] sm:$0xf]
    %v184 = vld [vmem:[%s0 + $0x274] sm:$0xf]
    %v185 = vld [vmem:[%s0 + $0x278] sm:$0xf]
    %v186 = vld [vmem:[%s0 + $0x27c] sm:$0xf]
    %v187 = vld [vmem:[%s0 + $0x280] sm:$0xf]
    %v188 = vld [vmem:[%s0 + $0x284] sm:$0xf]
    %v189 = vld [vmem:[%s0 + $0x288] sm:$0xf]
    %v190 = vld [vmem:[%s0 + $0x28c] sm:$0xf]
    %v191 = vld [vmem:[%s0 + $0x290] sm:$0xf]
    %v192 = vld [vmem:[%s0 + $0x294] sm:$0xf]
    %v193 = vld [vmem:[%s0 + $0x298] sm:$0xf]
    %v194 = vld [vmem:[%s0 + $0x29c] sm:$0xf]
    %v195 = vld [vmem:[%s0 + $0x2a0] sm:$0xf]
    %v196 = vld [vmem:[%s0 + $0x2a4] sm:$0xf]
    %v197 = vld [vmem:[%s0 + $0x2a8] sm:$0xf]
    %v198 = vld [vmem:[%s0 + $0x2ac] sm:$0xf]
    %v199 = vld [vmem:[%s0 + $0x2b0] sm:$0xf]
    %v200 = vld [vmem:[%s0 + $0x2b4] sm:$0xf]
    %v201 = vld [vmem:[%s0 + $0x2b8] sm:$0xf]
    %v202 = vld [vmem:[%s0 + $0x2bc] sm:$0xf]
    %v203 = vld [vmem:[%s0 + $0x2c0] sm:$0xf]
    %v204 = vld [vmem:[%s0 + $0x2c4] sm:$0xf]
    %v205 = vld [vmem:[%s0 + $0x2c8] sm:$0xf]
    %v206 = vld [vmem:[%s0 + $0x2cc] sm:$0xf]
    %v207 = vld [vmem:[%s0 + $0x2d0] sm:$0xf]
    %v208 = vld [vmem:[%s0 + $0x2d4] sm:$0xf]
    %v209 = vld [vmem:[%s0 + $0x2d8] sm:$0xf]
    %v210 = vld [vmem:[%s0 + $0x2dc] sm:$0xf]
    %v211 = vld [vmem:[%s0 + $0x2e0] sm:$0xf]
    %v212 = vld [vmem:[%s0 + $0x2e4] sm:$0xf]
    %v213 = vld [vmem:[%s0 + $0x2e8] sm:$0xf]
    %v214 = vld [vmem:[%s0 + $0x2ec] sm:$0xf]
    %v215 = vld [vmem:[%s0 + $0x2f0] sm:$0xf]
    %v216 = vld [vmem:[%s0 + $0x2f4] sm:$0xf]
    %v217 = vld [vmem:[%s0 + $0x2f8] sm:$0xf]
    %v218 = vld [vmem:[%s0 + $0x2fc] sm:$0xf]
    %v219 = vld [vmem:[%s0 + $0x300] sm:$0xf]
    %v220 = vld [vmem:[%s0 + $0x304] sm:$0xf]
    %v221 = vld [vmem:[%s0 + $0x308] sm:$0xf]
    %v222 = vld [vmem:[%s0 + $0x30c] sm:$0xf]
    %v223 = vld [vmem:[%s0 + $0x310] sm:$0xf]
    %v224 = vld [vmem:[%s0 + $0x314] sm:$0xf]
    %v225 = vld [vmem:[%s0 + $0x318] sm:$0xf]
    %v226 = vld [vmem:[%s0 + $0x31c] sm:$0xf]
    %v227 = vld [vmem:[%s0 + $0x320] sm:$0xf]
    %v228 = vld [vmem:[%s0 + $0x324] sm:$0xf]
    %v229 = vld [vmem:[%s0 + $0x328] sm:$0xf]
    %v230 = vld [vmem:[%s0 + $0x32c] sm:$0xf]
    %v231 = vld [vmem:[%s0 + $0x330] sm:$0xf]
    %v232 = vld [vmem:[%s0 + $0x334] sm:$0xf]
    %v233 = vld [vmem:[%s0 + $0x338] sm:$0xf]
    %v234 = vld [vmem:[%s0 + $0x33c] sm:$0xf]
    %v235 = vld [vmem:[%s0 + $0x340] sm:$0xf]
    %v236 = vld [vmem:[%s0 + $0x344] sm:$0xf]
    %v237 = vld [vmem:[%s0 + $0x348] sm:$0xf]
    %v238 = vld [vmem:[%s0 + $0x34c] sm:$0xf]
    %v239 = vld [vmem:[%s0 + $0x350] sm:$0xf]
    %v240 = vld [vmem:[%s0 + $0x354] sm:$0xf]
    %v241 = vld [vmem:[%s0 + $0x358] sm:$0xf]
    %v242 = vld [vmem:[%s0 + $0x35c] sm:$0xf]
    %v243 = vld [vmem:[%s0 + $0x360] sm:$0xf]
    %v244 = vld [vmem:[%s0 + $0x364] sm:$0xf]
    %v245 = vld [vmem:[%s0 + $0x368] sm:$0xf]
    %v246 = vld [vmem:[%s0 + $0x36c] sm:$0xf]
    %v247 = vld [vmem:[%s0 + $0x370] sm:$0xf]
    %v248 = vld [vmem:[%s0 + $0x374] sm:$0xf]
    %v249 = vld [vmem:[%s0 + $0x378] sm:$0xf]
    %v250 = vld [vmem:[%s0 + $0x37c] sm:$0xf]
    %v251 = vld [vmem:[%s0 + $0x380] sm:$0xf]
    %v252 = vld [vmem:[%s0 + $0x384] sm:$0xf]
    %v253 = vld [vmem:[%s0 + $0x388] sm:$0xf]
    %v254 = vld [vmem:[%s0 + $0x38c] sm:$0xf]
    %v255 = vld [vmem:[%s0 + $0x390] sm:$0xf]
    %v256 = vld [vmem:[%s0 + $0x394] sm:$0xf]
    %v257 = vld [vmem:[%s0 + $0x398] sm:$0xf]
    %v258 = vld [vmem:[%s0 + $0x39c] sm:$0xf]
    %v259 = vld [vmem:[%s0 + $0x3a0] sm:$0xf]
    %v260 = vld [vmem:[%s0 + $0x3a4] sm:$0xf]
    %v261 = vld [vmem:[%s0 + $0x3a8] sm:$0xf]
    %v262 = vld [vmem:[%s0 + $0x3ac] sm:$0xf]
    %v263 = vld [vmem:[%s0 + $0x3b0] sm:$0xf]
    %v264 = vld [vmem:[%s0 + $0x3b4] sm:$0xf]
    %v265 = vld [vmem:[%s0 + $0x3b8] sm:$0xf]
    %v266 = vld [vmem:[%s0 + $0x3bc] sm:$0xf]
    %v267 = vld [vmem:[%s0 + $0x3c0] sm:$0xf]
    %v268 = vld [vmem:[%s0 + $0x3c4] sm:$0xf]
    %v269 = vld [vmem:[%s0 + $0x3c8] sm:$0xf]
    %v270 = vld [vmem:[%s0 + $0x3cc] sm:$0xf]
    %v271 = vld [vmem:[%s0 + $0x3d0] sm:$0xf]
    %v272 = vld [vmem:[%s0 + $0x3d4] sm:$0xf]
    %v273 = vld [vmem:[%s0 + $0x3d8] sm:$0xf]
    %v274 = vld [vmem:[%s0 + $0x3dc] sm:$0xf]
    %v275 = vld [vmem:[%s0 + $0x3e0] sm:$0xf]
    %v276 = vld [vmem:[%s0 + $0x3e4] sm:$0xf]
    %v277 = vld [vmem:[%s0 + $0x3e8] sm:$0xf]
    %v278 = vld [vmem:[%s0 + $0x3ec] sm:$0xf]
    %v279 = vld [vmem:[%s0 + $0x3f0] sm:$0xf]
    %v280 = vld [vmem:[%s0 + $0x3f4] sm:$0xf]
    %v281 = vld [vmem:[%s0 + $0x3f8] sm:$0xf]
    %v282 = vld [vmem:[%s0 + $0x3fc] sm:$0xf]
    %v283 = vld [vmem:[%s1] sm:$0xf]
    %v284 = vld [vmem:[%s1 + $0x4] sm:$0xf]
    %v285 = vld [vmem:[%s1 + $0x8] sm:$0xf]
    %v286 = vld [vmem:[%s1 + $0xc] sm:$0xf]
    %v287 = vld [vmem:[%s1 + $0x10] sm:$0x3]
    %v288 = vld [vmem:[%s2] sm:$0x1]
    %v290 = vlaneseq
    %v291 = vshrl.u32 %v290, 7
    %v292 = vsub.s32 0, %v291
    %v293 = vrot.slane %v288, %v292
    %v551 = vunpack.c.l.b16 %v27
    %v552 = vunpack.c.l.b16 %v28
    %v553 = vunpack.c.l.b16 %v29
    %v554 = vunpack.c.l.b16 %v30
    %v555 = vunpack.c.l.b16 %v31
    %v556 = vunpack.c.l.b16 %v32
    %v557 = vunpack.c.l.b16 %v33
    %v558 = vunpack.c.l.b16 %v34
    %v559 = vunpack.c.l.b16 %v35
    %v560 = vunpack.c.l.b16 %v36
    %v561 = vunpack.c.l.b16 %v37
    %v562 = vunpack.c.l.b16 %v38
    %v563 = vunpack.c.l.b16 %v39
    %v564 = vunpack.c.l.b16 %v40
    %v565 = vunpack.c.l.b16 %v41
    %v566 = vunpack.c.l.b16 %v42
    %v567 = vunpack.c.l.b16 %v43
    %v568 = vunpack.c.l.b16 %v44
    %v569 = vunpack.c.l.b16 %v45
    %v570 = vunpack.c.l.b16 %v46
    %v571 = vunpack.c.l.b16 %v47
    %v572 = vunpack.c.l.b16 %v48
    %v573 = vunpack.c.l.b16 %v49
    %v574 = vunpack.c.l.b16 %v50
    %v575 = vunpack.c.l.b16 %v51
    %v576 = vunpack.c.l.b16 %v52
    %v577 = vunpack.c.l.b16 %v53
    %v578 = vunpack.c.l.b16 %v54
    %v579 = vunpack.c.l.b16 %v55
    %v580 = vunpack.c.l.b16 %v56
    %v581 = vunpack.c.l.b16 %v57
    %v582 = vunpack.c.l.b16 %v58
    %v583 = vunpack.c.l.b16 %v59
    %v584 = vunpack.c.l.b16 %v60
    %v585 = vunpack.c.l.b16 %v61
    %v586 = vunpack.c.l.b16 %v62
    %v587 = vunpack.c.l.b16 %v63
    %v588 = vunpack.c.l.b16 %v64
    %v589 = vunpack.c.l.b16 %v65
    %v590 = vunpack.c.l.b16 %v66
    %v591 = vunpack.c.l.b16 %v67
    %v592 = vunpack.c.l.b16 %v68
    %v593 = vunpack.c.l.b16 %v69
    %v594 = vunpack.c.l.b16 %v70
    %v595 = vunpack.c.l.b16 %v71
    %v596 = vunpack.c.l.b16 %v72
    %v597 = vunpack.c.l.b16 %v73
    %v598 = vunpack.c.l.b16 %v74
    %v599 = vunpack.c.l.b16 %v75
    %v600 = vunpack.c.l.b16 %v76
    %v601 = vunpack.c.l.b16 %v77
    %v602 = vunpack.c.l.b16 %v78
    %v603 = vunpack.c.l.b16 %v79
    %v604 = vunpack.c.l.b16 %v80
    %v605 = vunpack.c.l.b16 %v81
    %v606 = vunpack.c.l.b16 %v82
    %v607 = vunpack.c.l.b16 %v83
    %v608 = vunpack.c.l.b16 %v84
    %v609 = vunpack.c.l.b16 %v85
    %v610 = vunpack.c.l.b16 %v86
    %v611 = vunpack.c.l.b16 %v87
    %v612 = vunpack.c.l.b16 %v88
    %v613 = vunpack.c.l.b16 %v89
    %v614 = vunpack.c.l.b16 %v90
    %v615 = vunpack.c.l.b16 %v91
    %v616 = vunpack.c.l.b16 %v92
    %v617 = vunpack.c.l.b16 %v93
    %v618 = vunpack.c.l.b16 %v94
    %v619 = vunpack.c.l.b16 %v95
    %v620 = vunpack.c.l.b16 %v96
    %v621 = vunpack.c.l.b16 %v97
    %v622 = vunpack.c.l.b16 %v98
    %v623 = vunpack.c.l.b16 %v99
    %v624 = vunpack.c.l.b16 %v100
    %v625 = vunpack.c.l.b16 %v101
    %v626 = vunpack.c.l.b16 %v102
    %v627 = vunpack.c.l.b16 %v103
    %v628 = vunpack.c.l.b16 %v104
    %v629 = vunpack.c.l.b16 %v105
    %v630 = vunpack.c.l.b16 %v106
    %v631 = vunpack.c.l.b16 %v107
    %v632 = vunpack.c.l.b16 %v108
    %v633 = vunpack.c.l.b16 %v109
    %v634 = vunpack.c.l.b16 %v110
    %v635 = vunpack.c.l.b16 %v111
    %v636 = vunpack.c.l.b16 %v112
    %v637 = vunpack.c.l.b16 %v113
    %v638 = vunpack.c.l.b16 %v114
    %v639 = vunpack.c.l.b16 %v115
    %v640 = vunpack.c.l.b16 %v116
    %v641 = vunpack.c.l.b16 %v117
    %v642 = vunpack.c.l.b16 %v118
    %v643 = vunpack.c.l.b16 %v119
    %v644 = vunpack.c.l.b16 %v120
    %v645 = vunpack.c.l.b16 %v121
    %v646 = vunpack.c.l.b16 %v122
    %v647 = vunpack.c.l.b16 %v123
    %v648 = vunpack.c.l.b16 %v124
    %v649 = vunpack.c.l.b16 %v125
    %v650 = vunpack.c.l.b16 %v126
    %v651 = vunpack.c.l.b16 %v127
    %v652 = vunpack.c.l.b16 %v128
    %v653 = vunpack.c.l.b16 %v129
    %v654 = vunpack.c.l.b16 %v130
    %v655 = vunpack.c.l.b16 %v131
    %v656 = vunpack.c.l.b16 %v132
    %v657 = vunpack.c.l.b16 %v133
    %v658 = vunpack.c.l.b16 %v134
    %v659 = vunpack.c.l.b16 %v135
    %v660 = vunpack.c.l.b16 %v136
    %v661 = vunpack.c.l.b16 %v137
    %v662 = vunpack.c.l.b16 %v138
    %v663 = vunpack.c.l.b16 %v139
    %v664 = vunpack.c.l.b16 %v140
    %v665 = vunpack.c.l.b16 %v141
    %v666 = vunpack.c.l.b16 %v142
    %v667 = vunpack.c.l.b16 %v143
    %v668 = vunpack.c.l.b16 %v144
    %v669 = vunpack.c.l.b16 %v145
    %v670 = vunpack.c.l.b16 %v146
    %v671 = vunpack.c.l.b16 %v147
    %v672 = vunpack.c.l.b16 %v148
    %v673 = vunpack.c.l.b16 %v149
    %v674 = vunpack.c.l.b16 %v150
    %v675 = vunpack.c.l.b16 %v151
    %v676 = vunpack.c.l.b16 %v152
    %v677 = vunpack.c.l.b16 %v153
    %v678 = vunpack.c.l.b16 %v154
    %v679 = vunpack.c.l.b16 %v155
    %v680 = vunpack.c.l.b16 %v156
    %v681 = vunpack.c.l.b16 %v157
    %v682 = vunpack.c.l.b16 %v158
    %v683 = vunpack.c.l.b16 %v159
    %v684 = vunpack.c.l.b16 %v160
    %v685 = vunpack.c.l.b16 %v161
    %v686 = vunpack.c.l.b16 %v162
    %v687 = vunpack.c.l.b16 %v163
    %v688 = vunpack.c.l.b16 %v164
    %v689 = vunpack.c.l.b16 %v165
    %v690 = vunpack.c.l.b16 %v166
    %v691 = vunpack.c.l.b16 %v167
    %v692 = vunpack.c.l.b16 %v168
    %v693 = vunpack.c.l.b16 %v169
    %v694 = vunpack.c.l.b16 %v170
    %v695 = vunpack.c.l.b16 %v171
    %v696 = vunpack.c.l.b16 %v172
    %v697 = vunpack.c.l.b16 %v173
    %v698 = vunpack.c.l.b16 %v174
    %v699 = vunpack.c.l.b16 %v175
    %v700 = vunpack.c.l.b16 %v176
    %v701 = vunpack.c.l.b16 %v177
    %v702 = vunpack.c.l.b16 %v178
    %v703 = vunpack.c.l.b16 %v179
    %v704 = vunpack.c.l.b16 %v180
    %v705 = vunpack.c.l.b16 %v181
    %v706 = vunpack.c.l.b16 %v182
    %v707 = vunpack.c.l.b16 %v183
    %v708 = vunpack.c.l.b16 %v184
    %v709 = vunpack.c.l.b16 %v185
    %v710 = vunpack.c.l.b16 %v186
    %v711 = vunpack.c.l.b16 %v187
    %v712 = vunpack.c.l.b16 %v188
    %v713 = vunpack.c.l.b16 %v189
    %v714 = vunpack.c.l.b16 %v190
    %v715 = vunpack.c.l.b16 %v191
    %v716 = vunpack.c.l.b16 %v192
    %v717 = vunpack.c.l.b16 %v193
    %v718 = vunpack.c.l.b16 %v194
    %v719 = vunpack.c.l.b16 %v195
    %v720 = vunpack.c.l.b16 %v196
    %v721 = vunpack.c.l.b16 %v197
    %v722 = vunpack.c.l.b16 %v198
    %v723 = vunpack.c.l.b16 %v199
    %v724 = vunpack.c.l.b16 %v200
    %v725 = vunpack.c.l.b16 %v201
    %v726 = vunpack.c.l.b16 %v202
    %v727 = vunpack.c.l.b16 %v203
    %v728 = vunpack.c.l.b16 %v204
    %v729 = vunpack.c.l.b16 %v205
    %v730 = vunpack.c.l.b16 %v206
    %v731 = vunpack.c.l.b16 %v207
    %v732 = vunpack.c.l.b16 %v208
    %v733 = vunpack.c.l.b16 %v209
    %v734 = vunpack.c.l.b16 %v210
    %v735 = vunpack.c.l.b16 %v211
    %v736 = vunpack.c.l.b16 %v212
    %v737 = vunpack.c.l.b16 %v213
    %v738 = vunpack.c.l.b16 %v214
    %v739 = vunpack.c.l.b16 %v215
    %v740 = vunpack.c.l.b16 %v216
    %v741 = vunpack.c.l.b16 %v217
    %v742 = vunpack.c.l.b16 %v218
    %v743 = vunpack.c.l.b16 %v219
    %v744 = vunpack.c.l.b16 %v220
    %v745 = vunpack.c.l.b16 %v221
    %v746 = vunpack.c.l.b16 %v222
    %v747 = vunpack.c.l.b16 %v223
    %v748 = vunpack.c.l.b16 %v224
    %v749 = vunpack.c.l.b16 %v225
    %v750 = vunpack.c.l.b16 %v226
    %v751 = vunpack.c.l.b16 %v227
    %v752 = vunpack.c.l.b16 %v228
    %v753 = vunpack.c.l.b16 %v229
    %v754 = vunpack.c.l.b16 %v230
    %v755 = vunpack.c.l.b16 %v231
    %v756 = vunpack.c.l.b16 %v232
    %v757 = vunpack.c.l.b16 %v233
    %v758 = vunpack.c.l.b16 %v234
    %v759 = vunpack.c.l.b16 %v235
    %v760 = vunpack.c.l.b16 %v236
    %v761 = vunpack.c.l.b16 %v237
    %v762 = vunpack.c.l.b16 %v238
    %v763 = vunpack.c.l.b16 %v239
    %v764 = vunpack.c.l.b16 %v240
    %v765 = vunpack.c.l.b16 %v241
    %v766 = vunpack.c.l.b16 %v242
    %v767 = vunpack.c.l.b16 %v243
    %v768 = vunpack.c.l.b16 %v244
    %v769 = vunpack.c.l.b16 %v245
    %v770 = vunpack.c.l.b16 %v246
    %v771 = vunpack.c.l.b16 %v247
    %v772 = vunpack.c.l.b16 %v248
    %v773 = vunpack.c.l.b16 %v249
    %v774 = vunpack.c.l.b16 %v250
    %v775 = vunpack.c.l.b16 %v251
    %v776 = vunpack.c.l.b16 %v252
    %v777 = vunpack.c.l.b16 %v253
    %v778 = vunpack.c.l.b16 %v254
    %v779 = vunpack.c.l.b16 %v255
    %v780 = vunpack.c.l.b16 %v256
    %v781 = vunpack.c.l.b16 %v257
    %v782 = vunpack.c.l.b16 %v258
    %v783 = vunpack.c.l.b16 %v259
    %v784 = vunpack.c.l.b16 %v260
    %v785 = vunpack.c.l.b16 %v261
    %v786 = vunpack.c.l.b16 %v262
    %v787 = vunpack.c.l.b16 %v263
    %v788 = vunpack.c.l.b16 %v264
    %v789 = vunpack.c.l.b16 %v265
    %v790 = vunpack.c.l.b16 %v266
    %v791 = vunpack.c.l.b16 %v267
    %v792 = vunpack.c.l.b16 %v268
    %v793 = vunpack.c.l.b16 %v269
    %v794 = vunpack.c.l.b16 %v270
    %v795 = vunpack.c.l.b16 %v271
    %v796 = vunpack.c.l.b16 %v272
    %v797 = vunpack.c.l.b16 %v273
    %v798 = vunpack.c.l.b16 %v274
    %v799 = vunpack.c.l.b16 %v275
    %v800 = vunpack.c.l.b16 %v276
    %v801 = vunpack.c.l.b16 %v277
    %v802 = vunpack.c.l.b16 %v278
    %v803 = vunpack.c.l.b16 %v279
    %v804 = vunpack.c.l.b16 %v280
    %v805 = vunpack.c.l.b16 %v281
    %v806 = vunpack.c.l.b16 %v282
    %v807 = vpack.c.b16 %v552, %v551
    %v808 = vpack.c.b16 %v554, %v553
    %v809 = vpack.c.b16 %v556, %v555
    %v810 = vpack.c.b16 %v558, %v557
    %v811 = vpack.c.b16 %v560, %v559
    %v812 = vpack.c.b16 %v562, %v561
    %v813 = vpack.c.b16 %v564, %v563
    %v814 = vpack.c.b16 %v566, %v565
    %v815 = vpack.c.b16 %v568, %v567
    %v816 = vpack.c.b16 %v570, %v569
    %v817 = vpack.c.b16 %v572, %v571
    %v818 = vpack.c.b16 %v574, %v573
    %v819 = vpack.c.b16 %v576, %v575
    %v820 = vpack.c.b16 %v578, %v577
    %v821 = vpack.c.b16 %v580, %v579
    %v822 = vpack.c.b16 %v582, %v581
    %v823 = vpack.c.b16 %v584, %v583
    %v824 = vpack.c.b16 %v586, %v585
    %v825 = vpack.c.b16 %v588, %v587
    %v826 = vpack.c.b16 %v590, %v589
    %v827 = vpack.c.b16 %v592, %v591
    %v828 = vpack.c.b16 %v594, %v593
    %v829 = vpack.c.b16 %v596, %v595
    %v830 = vpack.c.b16 %v598, %v597
    %v831 = vpack.c.b16 %v600, %v599
    %v832 = vpack.c.b16 %v602, %v601
    %v833 = vpack.c.b16 %v604, %v603
    %v834 = vpack.c.b16 %v606, %v605
    %v835 = vpack.c.b16 %v608, %v607
    %v836 = vpack.c.b16 %v610, %v609
    %v837 = vpack.c.b16 %v612, %v611
    %v838 = vpack.c.b16 %v614, %v613
    %v839 = vpack.c.b16 %v616, %v615
    %v840 = vpack.c.b16 %v618, %v617
    %v841 = vpack.c.b16 %v620, %v619
    %v842 = vpack.c.b16 %v622, %v621
    %v843 = vpack.c.b16 %v624, %v623
    %v844 = vpack.c.b16 %v626, %v625
    %v845 = vpack.c.b16 %v628, %v627
    %v846 = vpack.c.b16 %v630, %v629
    %v847 = vpack.c.b16 %v632, %v631
    %v848 = vpack.c.b16 %v634, %v633
    %v849 = vpack.c.b16 %v636, %v635
    %v850 = vpack.c.b16 %v638, %v637
    %v851 = vpack.c.b16 %v640, %v639
    %v852 = vpack.c.b16 %v642, %v641
    %v853 = vpack.c.b16 %v644, %v643
    %v854 = vpack.c.b16 %v646, %v645
    %v855 = vpack.c.b16 %v648, %v647
    %v856 = vpack.c.b16 %v650, %v649
    %v857 = vpack.c.b16 %v652, %v651
    %v858 = vpack.c.b16 %v654, %v653
    %v859 = vpack.c.b16 %v656, %v655
    %v860 = vpack.c.b16 %v658, %v657
    %v861 = vpack.c.b16 %v660, %v659
    %v862 = vpack.c.b16 %v662, %v661
    %v863 = vpack.c.b16 %v664, %v663
    %v864 = vpack.c.b16 %v666, %v665
    %v865 = vpack.c.b16 %v668, %v667
    %v866 = vpack.c.b16 %v670, %v669
    %v867 = vpack.c.b16 %v672, %v671
    %v868 = vpack.c.b16 %v674, %v673
    %v869 = vpack.c.b16 %v676, %v675
    %v870 = vpack.c.b16 %v678, %v677
    %v871 = vpack.c.b16 %v680, %v679
    %v872 = vpack.c.b16 %v682, %v681
    %v873 = vpack.c.b16 %v684, %v683
    %v874 = vpack.c.b16 %v686, %v685
    %v875 = vpack.c.b16 %v688, %v687
    %v876 = vpack.c.b16 %v690, %v689
    %v877 = vpack.c.b16 %v692, %v691
    %v878 = vpack.c.b16 %v694, %v693
    %v879 = vpack.c.b16 %v696, %v695
    %v880 = vpack.c.b16 %v698, %v697
    %v881 = vpack.c.b16 %v700, %v699
    %v882 = vpack.c.b16 %v702, %v701
    %v883 = vpack.c.b16 %v704, %v703
    %v884 = vpack.c.b16 %v706, %v705
    %v885 = vpack.c.b16 %v708, %v707
    %v886 = vpack.c.b16 %v710, %v709
    %v887 = vpack.c.b16 %v712, %v711
    %v888 = vpack.c.b16 %v714, %v713
    %v889 = vpack.c.b16 %v716, %v715
    %v890 = vpack.c.b16 %v718, %v717
    %v891 = vpack.c.b16 %v720, %v719
    %v892 = vpack.c.b16 %v722, %v721
    %v893 = vpack.c.b16 %v724, %v723
    %v894 = vpack.c.b16 %v726, %v725
    %v895 = vpack.c.b16 %v728, %v727
    %v896 = vpack.c.b16 %v730, %v729
    %v897 = vpack.c.b16 %v732, %v731
    %v898 = vpack.c.b16 %v734, %v733
    %v899 = vpack.c.b16 %v736, %v735
    %v900 = vpack.c.b16 %v738, %v737
    %v901 = vpack.c.b16 %v740, %v739
    %v902 = vpack.c.b16 %v742, %v741
    %v903 = vpack.c.b16 %v744, %v743
    %v904 = vpack.c.b16 %v746, %v745
    %v905 = vpack.c.b16 %v748, %v747
    %v906 = vpack.c.b16 %v750, %v749
    %v907 = vpack.c.b16 %v752, %v751
    %v908 = vpack.c.b16 %v754, %v753
    %v909 = vpack.c.b16 %v756, %v755
    %v910 = vpack.c.b16 %v758, %v757
    %v911 = vpack.c.b16 %v760, %v759
    %v912 = vpack.c.b16 %v762, %v761
    %v913 = vpack.c.b16 %v764, %v763
    %v914 = vpack.c.b16 %v766, %v765
    %v915 = vpack.c.b16 %v768, %v767
    %v916 = vpack.c.b16 %v770, %v769
    %v917 = vpack.c.b16 %v772, %v771
    %v918 = vpack.c.b16 %v774, %v773
    %v919 = vpack.c.b16 %v776, %v775
    %v920 = vpack.c.b16 %v778, %v777
    %v921 = vpack.c.b16 %v780, %v779
    %v922 = vpack.c.b16 %v782, %v781
    %v923 = vpack.c.b16 %v784, %v783
    %v924 = vpack.c.b16 %v786, %v785
    %v925 = vpack.c.b16 %v788, %v787
    %v926 = vpack.c.b16 %v790, %v789
    %v927 = vpack.c.b16 %v792, %v791
    %v928 = vpack.c.b16 %v794, %v793
    %v929 = vpack.c.b16 %v796, %v795
    %v930 = vpack.c.b16 %v798, %v797
    %v931 = vpack.c.b16 %v800, %v799
    %v932 = vpack.c.b16 %v802, %v801
    %v933 = vpack.c.b16 %v804, %v803
    %v934 = vpack.c.b16 %v806, %v805
    %v940 = vunpack.c.l.b16 %v283
    %v941 = vunpack.c.l.b16 %v284
    %v942 = vunpack.c.l.b16 %v285
    %v943 = vunpack.c.l.b16 %v286
    %v944 = vunpack.c.l.b16 %v287
    %v945 = vpack.c.b16 %v941, %v940
    %v946 = vpack.c.b16 %v943, %v942
    %v947 = vpack.c.b16 %v944, %v944
    %vm950 = vcmask 293888
    %v952 = vsel %vm950, %v807, 0
    %v955 = vsel %vm950, %v808, 0
    %v958 = vsel %vm950, %v809, 0
    %v961 = vsel %vm950, %v810, 0
    %v964 = vsel %vm950, %v811, 0
    %v967 = vsel %vm950, %v812, 0
    %v970 = vsel %vm950, %v813, 0
    %v973 = vsel %vm950, %v814, 0
    %v976 = vsel %vm950, %v815, 0
    %v979 = vsel %vm950, %v816, 0
    %v982 = vsel %vm950, %v817, 0
    %v985 = vsel %vm950, %v818, 0
    %v988 = vsel %vm950, %v819, 0
    %v991 = vsel %vm950, %v820, 0
    %v994 = vsel %vm950, %v821, 0
    %v997 = vsel %vm950, %v822, 0
    %v1000 = vsel %vm950, %v823, 0
    %v1003 = vsel %vm950, %v824, 0
    %v1006 = vsel %vm950, %v825, 0
    %v1009 = vsel %vm950, %v826, 0
    %v1012 = vsel %vm950, %v827, 0
    %v1015 = vsel %vm950, %v828, 0
    %v1018 = vsel %vm950, %v829, 0
    %v1021 = vsel %vm950, %v830, 0
    %v1024 = vsel %vm950, %v831, 0
    %v1027 = vsel %vm950, %v832, 0
    %v1030 = vsel %vm950, %v833, 0
    %v1033 = vsel %vm950, %v834, 0
    %v1036 = vsel %vm950, %v835, 0
    %v1039 = vsel %vm950, %v836, 0
    %v1042 = vsel %vm950, %v837, 0
    %v1045 = vsel %vm950, %v838, 0
    %v1048 = vsel %vm950, %v839, 0
    %v1051 = vsel %vm950, %v840, 0
    %v1054 = vsel %vm950, %v841, 0
    %v1057 = vsel %vm950, %v842, 0
    %v1060 = vsel %vm950, %v843, 0
    %v1063 = vsel %vm950, %v844, 0
    %v1066 = vsel %vm950, %v845, 0
    %v1069 = vsel %vm950, %v846, 0
    %v1072 = vsel %vm950, %v847, 0
    %v1075 = vsel %vm950, %v848, 0
    %v1078 = vsel %vm950, %v849, 0
    %v1081 = vsel %vm950, %v850, 0
    %v1084 = vsel %vm950, %v851, 0
    %v1087 = vsel %vm950, %v852, 0
    %v1090 = vsel %vm950, %v853, 0
    %v1093 = vsel %vm950, %v854, 0
    %v1096 = vsel %vm950, %v855, 0
    %v1099 = vsel %vm950, %v856, 0
    %v1102 = vsel %vm950, %v857, 0
    %v1105 = vsel %vm950, %v858, 0
    %v1108 = vsel %vm950, %v859, 0
    %v1111 = vsel %vm950, %v860, 0
    %v1114 = vsel %vm950, %v861, 0
    %v1117 = vsel %vm950, %v862, 0
    %v1120 = vsel %vm950, %v863, 0
    %v1123 = vsel %vm950, %v864, 0
    %v1126 = vsel %vm950, %v865, 0
    %v1129 = vsel %vm950, %v866, 0
    %v1132 = vsel %vm950, %v867, 0
    %v1135 = vsel %vm950, %v868, 0
    %v1138 = vsel %vm950, %v869, 0
    %v1141 = vsel %vm950, %v870, 0
    %v1144 = vsel %vm950, %v871, 0
    %v1147 = vsel %vm950, %v872, 0
    %v1150 = vsel %vm950, %v873, 0
    %v1153 = vsel %vm950, %v874, 0
    %v1156 = vsel %vm950, %v875, 0
    %v1159 = vsel %vm950, %v876, 0
    %v1162 = vsel %vm950, %v877, 0
    %v1165 = vsel %vm950, %v878, 0
    %v1168 = vsel %vm950, %v879, 0
    %v1171 = vsel %vm950, %v880, 0
    %v1174 = vsel %vm950, %v881, 0
    %v1177 = vsel %vm950, %v882, 0
    %v1180 = vsel %vm950, %v883, 0
    %v1183 = vsel %vm950, %v884, 0
    %v1186 = vsel %vm950, %v885, 0
    %v1189 = vsel %vm950, %v886, 0
    %v1192 = vsel %vm950, %v887, 0
    %v1195 = vsel %vm950, %v888, 0
    %v1198 = vsel %vm950, %v889, 0
    %v1201 = vsel %vm950, %v890, 0
    %v1204 = vsel %vm950, %v891, 0
    %v1207 = vsel %vm950, %v892, 0
    %v1210 = vsel %vm950, %v893, 0
    %v1213 = vsel %vm950, %v894, 0
    %v1216 = vsel %vm950, %v895, 0
    %v1219 = vsel %vm950, %v896, 0
    %v1222 = vsel %vm950, %v897, 0
    %v1225 = vsel %vm950, %v898, 0
    %v1228 = vsel %vm950, %v899, 0
    %v1231 = vsel %vm950, %v900, 0
    %v1234 = vsel %vm950, %v901, 0
    %v1237 = vsel %vm950, %v902, 0
    %v1240 = vsel %vm950, %v903, 0
    %v1243 = vsel %vm950, %v904, 0
    %v1246 = vsel %vm950, %v905, 0
    %v1249 = vsel %vm950, %v906, 0
    %v1252 = vsel %vm950, %v907, 0
    %v1255 = vsel %vm950, %v908, 0
    %v1258 = vsel %vm950, %v909, 0
    %v1261 = vsel %vm950, %v910, 0
    %v1264 = vsel %vm950, %v911, 0
    %v1267 = vsel %vm950, %v912, 0
    %v1270 = vsel %vm950, %v913, 0
    %v1273 = vsel %vm950, %v914, 0
    %v1276 = vsel %vm950, %v915, 0
    %v1279 = vsel %vm950, %v916, 0
    %v1282 = vsel %vm950, %v917, 0
    %v1285 = vsel %vm950, %v918, 0
    %v1288 = vsel %vm950, %v919, 0
    %v1291 = vsel %vm950, %v920, 0
    %v1294 = vsel %vm950, %v921, 0
    %v1297 = vsel %vm950, %v922, 0
    %v1300 = vsel %vm950, %v923, 0
    %v1303 = vsel %vm950, %v924, 0
    %v1306 = vsel %vm950, %v925, 0
    %v1309 = vsel %vm950, %v926, 0
    %v1312 = vsel %vm950, %v927, 0
    %v1315 = vsel %vm950, %v928, 0
    %v1318 = vsel %vm950, %v929, 0
    %v1321 = vsel %vm950, %v930, 0
    %v1324 = vsel %vm950, %v931, 0
    %v1327 = vsel %vm950, %v932, 0
    %v1330 = vsel %vm950, %v933, 0
    %v1333 = vsel %vm950, %v934, 0
    %vm1335 = vcmask 1041408
    %v1337 = vsel %vm1335, %v947, 0
    %1339 = vmatprep.subr.bf16.mxu0 0
    %1340 = vmatpush1.bf16.msra.mxu0 0
    %1341 = vmatprep.subr.bf16.mxu0 0
    %1342 = vmatpush1.bf16.msra.mxu0 0
    %1343 = vmatprep.subr.bf16.mxu0 0
    %1344 = vmatpush1.bf16.msra.mxu0 0
    %1345 = vmatprep.subr.bf16.mxu0 0
    %1346 = vmatpush1.bf16.msra.mxu0 0
    %1347 = vmatprep.subr.bf16.mxu0 0
    %1348 = vmatpush1.bf16.msra.mxu0 0
    %1349 = vmatprep.subr.bf16.mxu0 0
    %1350 = vmatpush1.bf16.msra.mxu0 %v1337
    %1351 = vmatprep.subr.bf16.mxu0 0
    %1352 = vmatpush1.bf16.msra.mxu0 %v946
    %1353 = vmatprep.subr.bf16.mxu0 0
    %1354 = vmatpush1.bf16.msra.mxu0 %v945
    %1355 = vmatprep.subr.bf16.mxu0 0
    %1356 = vmatpush2.bf16.msra.mxu0 0
    %1357 = vmatprep.subr.bf16.mxu0 0
    %1358 = vmatpush2.bf16.msra.mxu0 0
    %1359 = vmatprep.subr.bf16.mxu0 0
    %1360 = vmatpush2.bf16.msra.mxu0 0
    %1361 = vmatprep.subr.bf16.mxu0 0
    %1362 = vmatpush2.bf16.msra.mxu0 0
    %1363 = vmatprep.subr.bf16.mxu0 0
    %1364 = vmatpush2.bf16.msra.mxu0 0
    %1365 = vmatprep.subr.bf16.mxu0 0
    %1366 = vmatpush2.bf16.msra.mxu0 0
    %1367 = vmatprep.subr.bf16.mxu0 0
    %1368 = vmatpush2.bf16.msra.mxu0 0
    %1369 = vmatprep.subr.bf16.mxu0 0
    %1370 = vmatpush2.bf16.msra.mxu0 0
    %1371 = vmatprep.mubr.bf16.mxu0 0
    %1372 = vmatmul.mubr.bf16.gmra.mxu0 %v952
    %v1373 = vpop.f32.mrf.mxu0
    %v1374 = vadd.f32 %v293, %v1373
    %v1375 = vpop.f32.mrf.mxu0
    %v1376 = vpop.f32.mrf.mxu0
    %v1377 = vadd.f32 %v293, %v1376
    %v1378 = vpop.f32.mrf.mxu0
    %1379 = vmatprep.mubr.bf16.mxu0 0
    %1380 = vmatmul.mubr.bf16.gmra.mxu0 %v955
    %v1381 = vpop.f32.mrf.mxu0
    %v1382 = vadd.f32 %v293, %v1381
    %v1383 = vpop.f32.mrf.mxu0
    %v1384 = vpop.f32.mrf.mxu0
    %v1385 = vadd.f32 %v293, %v1384
    %v1386 = vpop.f32.mrf.mxu0
    %1387 = vmatprep.mubr.bf16.mxu0 0
    %1388 = vmatmul.mubr.bf16.gmra.mxu0 %v958
    %v1389 = vpop.f32.mrf.mxu0
    %v1390 = vadd.f32 %v293, %v1389
    %v1391 = vpop.f32.mrf.mxu0
    %v1392 = vpop.f32.mrf.mxu0
    %v1393 = vadd.f32 %v293, %v1392
    %v1394 = vpop.f32.mrf.mxu0
    %1395 = vmatprep.mubr.bf16.mxu0 0
    %1396 = vmatmul.mubr.bf16.gmra.mxu0 %v961
    %v1397 = vpop.f32.mrf.mxu0
    %v1398 = vadd.f32 %v293, %v1397
    %v1399 = vpop.f32.mrf.mxu0
    %v1400 = vpop.f32.mrf.mxu0
    %v1401 = vadd.f32 %v293, %v1400
    %v1402 = vpop.f32.mrf.mxu0
    %1403 = vmatprep.mubr.bf16.mxu0 0
    %1404 = vmatmul.mubr.bf16.gmra.mxu0 %v964
    %v1405 = vpop.f32.mrf.mxu0
    %v1406 = vadd.f32 %v293, %v1405
    %v1407 = vpop.f32.mrf.mxu0
    %v1408 = vpop.f32.mrf.mxu0
    %v1409 = vadd.f32 %v293, %v1408
    %v1410 = vpop.f32.mrf.mxu0
    %1411 = vmatprep.mubr.bf16.mxu0 0
    %1412 = vmatmul.mubr.bf16.gmra.mxu0 %v967
    %v1413 = vpop.f32.mrf.mxu0
    %v1414 = vadd.f32 %v293, %v1413
    %v1415 = vpop.f32.mrf.mxu0
    %v1416 = vpop.f32.mrf.mxu0
    %v1417 = vadd.f32 %v293, %v1416
    %v1418 = vpop.f32.mrf.mxu0
    %1419 = vmatprep.mubr.bf16.mxu0 0
    %1420 = vmatmul.mubr.bf16.gmra.mxu0 %v970
    %v1421 = vpop.f32.mrf.mxu0
    %v1422 = vadd.f32 %v293, %v1421
    %v1423 = vpop.f32.mrf.mxu0
    %v1424 = vpop.f32.mrf.mxu0
    %v1425 = vadd.f32 %v293, %v1424
    %v1426 = vpop.f32.mrf.mxu0
    %1427 = vmatprep.mubr.bf16.mxu0 0
    %1428 = vmatmul.mubr.bf16.gmra.mxu0 %v973
    %v1429 = vpop.f32.mrf.mxu0
    %v1430 = vadd.f32 %v293, %v1429
    %v1431 = vpop.f32.mrf.mxu0
    %v1432 = vpop.f32.mrf.mxu0
    %v1433 = vadd.f32 %v293, %v1432
    %v1434 = vpop.f32.mrf.mxu0
    %1435 = vmatprep.mubr.bf16.mxu0 0
    %1436 = vmatmul.mubr.bf16.gmra.mxu0 %v976
    %v1437 = vpop.f32.mrf.mxu0
    %v1438 = vadd.f32 %v293, %v1437
    %v1439 = vpop.f32.mrf.mxu0
    %v1440 = vpop.f32.mrf.mxu0
    %v1441 = vadd.f32 %v293, %v1440
    %v1442 = vpop.f32.mrf.mxu0
    %1443 = vmatprep.mubr.bf16.mxu0 0
    %1444 = vmatmul.mubr.bf16.gmra.mxu0 %v979
    %v1445 = vpop.f32.mrf.mxu0
    %v1446 = vadd.f32 %v293, %v1445
    %v1447 = vpop.f32.mrf.mxu0
    %v1448 = vpop.f32.mrf.mxu0
    %v1449 = vadd.f32 %v293, %v1448
    %v1450 = vpop.f32.mrf.mxu0
    %1451 = vmatprep.mubr.bf16.mxu0 0
    %1452 = vmatmul.mubr.bf16.gmra.mxu0 %v982
    %v1453 = vpop.f32.mrf.mxu0
    %v1454 = vadd.f32 %v293, %v1453
    %v1455 = vpop.f32.mrf.mxu0
    %v1456 = vpop.f32.mrf.mxu0
    %v1457 = vadd.f32 %v293, %v1456
    %v1458 = vpop.f32.mrf.mxu0
    %1459 = vmatprep.mubr.bf16.mxu0 0
    %1460 = vmatmul.mubr.bf16.gmra.mxu0 %v985
    %v1461 = vpop.f32.mrf.mxu0
    %v1462 = vadd.f32 %v293, %v1461
    %v1463 = vpop.f32.mrf.mxu0
    %v1464 = vpop.f32.mrf.mxu0
    %v1465 = vadd.f32 %v293, %v1464
    %v1466 = vpop.f32.mrf.mxu0
    %1467 = vmatprep.mubr.bf16.mxu0 0
    %1468 = vmatmul.mubr.bf16.gmra.mxu0 %v988
    %v1469 = vpop.f32.mrf.mxu0
    %v1470 = vadd.f32 %v293, %v1469
    %v1471 = vpop.f32.mrf.mxu0
    %v1472 = vpop.f32.mrf.mxu0
    %v1473 = vadd.f32 %v293, %v1472
    %v1474 = vpop.f32.mrf.mxu0
    %1475 = vmatprep.mubr.bf16.mxu0 0
    %1476 = vmatmul.mubr.bf16.gmra.mxu0 %v991
    %v1477 = vpop.f32.mrf.mxu0
    %v1478 = vadd.f32 %v293, %v1477
    %v1479 = vpop.f32.mrf.mxu0
    %v1480 = vpop.f32.mrf.mxu0
    %v1481 = vadd.f32 %v293, %v1480
    %v1482 = vpop.f32.mrf.mxu0
    %1483 = vmatprep.mubr.bf16.mxu0 0
    %1484 = vmatmul.mubr.bf16.gmra.mxu0 %v994
    %v1485 = vpop.f32.mrf.mxu0
    %v1486 = vadd.f32 %v293, %v1485
    %v1487 = vpop.f32.mrf.mxu0
    %v1488 = vpop.f32.mrf.mxu0
    %v1489 = vadd.f32 %v293, %v1488
    %v1490 = vpop.f32.mrf.mxu0
    %1491 = vmatprep.mubr.bf16.mxu0 0
    %1492 = vmatmul.mubr.bf16.gmra.mxu0 %v997
    %v1493 = vpop.f32.mrf.mxu0
    %v1494 = vadd.f32 %v293, %v1493
    %v1495 = vpop.f32.mrf.mxu0
    %v1496 = vpop.f32.mrf.mxu0
    %v1497 = vadd.f32 %v293, %v1496
    %v1498 = vpop.f32.mrf.mxu0
    %1499 = vmatprep.mubr.bf16.mxu0 0
    %1500 = vmatmul.mubr.bf16.gmra.mxu0 %v1000
    %v1501 = vpop.f32.mrf.mxu0
    %v1502 = vadd.f32 %v293, %v1501
    %v1503 = vpop.f32.mrf.mxu0
    %v1504 = vpop.f32.mrf.mxu0
    %v1505 = vadd.f32 %v293, %v1504
    %v1506 = vpop.f32.mrf.mxu0
    %1507 = vmatprep.mubr.bf16.mxu0 0
    %1508 = vmatmul.mubr.bf16.gmra.mxu0 %v1003
    %v1509 = vpop.f32.mrf.mxu0
    %v1510 = vadd.f32 %v293, %v1509
    %v1511 = vpop.f32.mrf.mxu0
    %v1512 = vpop.f32.mrf.mxu0
    %v1513 = vadd.f32 %v293, %v1512
    %v1514 = vpop.f32.mrf.mxu0
    %1515 = vmatprep.mubr.bf16.mxu0 0
    %1516 = vmatmul.mubr.bf16.gmra.mxu0 %v1006
    %v1517 = vpop.f32.mrf.mxu0
    %v1518 = vadd.f32 %v293, %v1517
    %v1519 = vpop.f32.mrf.mxu0
    %v1520 = vpop.f32.mrf.mxu0
    %v1521 = vadd.f32 %v293, %v1520
    %v1522 = vpop.f32.mrf.mxu0
    %1523 = vmatprep.mubr.bf16.mxu0 0
    %1524 = vmatmul.mubr.bf16.gmra.mxu0 %v1009
    %v1525 = vpop.f32.mrf.mxu0
    %v1526 = vadd.f32 %v293, %v1525
    %v1527 = vpop.f32.mrf.mxu0
    %v1528 = vpop.f32.mrf.mxu0
    %v1529 = vadd.f32 %v293, %v1528
    %v1530 = vpop.f32.mrf.mxu0
    %1531 = vmatprep.mubr.bf16.mxu0 0
    %1532 = vmatmul.mubr.bf16.gmra.mxu0 %v1012
    %v1533 = vpop.f32.mrf.mxu0
    %v1534 = vadd.f32 %v293, %v1533
    %v1535 = vpop.f32.mrf.mxu0
    %v1536 = vpop.f32.mrf.mxu0
    %v1537 = vadd.f32 %v293, %v1536
    %v1538 = vpop.f32.mrf.mxu0
    %1539 = vmatprep.mubr.bf16.mxu0 0
    %1540 = vmatmul.mubr.bf16.gmra.mxu0 %v1015
    %v1541 = vpop.f32.mrf.mxu0
    %v1542 = vadd.f32 %v293, %v1541
    %v1543 = vpop.f32.mrf.mxu0
    %v1544 = vpop.f32.mrf.mxu0
    %v1545 = vadd.f32 %v293, %v1544
    %v1546 = vpop.f32.mrf.mxu0
    %1547 = vmatprep.mubr.bf16.mxu0 0
    %1548 = vmatmul.mubr.bf16.gmra.mxu0 %v1018
    %v1549 = vpop.f32.mrf.mxu0
    %v1550 = vadd.f32 %v293, %v1549
    %v1551 = vpop.f32.mrf.mxu0
    %v1552 = vpop.f32.mrf.mxu0
    %v1553 = vadd.f32 %v293, %v1552
    %v1554 = vpop.f32.mrf.mxu0
    %1555 = vmatprep.mubr.bf16.mxu0 0
    %1556 = vmatmul.mubr.bf16.gmra.mxu0 %v1021
    %v1557 = vpop.f32.mrf.mxu0
    %v1558 = vadd.f32 %v293, %v1557
    %v1559 = vpop.f32.mrf.mxu0
    %v1560 = vpop.f32.mrf.mxu0
    %v1561 = vadd.f32 %v293, %v1560
    %v1562 = vpop.f32.mrf.mxu0
    %1563 = vmatprep.mubr.bf16.mxu0 0
    %1564 = vmatmul.mubr.bf16.gmra.mxu0 %v1024
    %v1565 = vpop.f32.mrf.mxu0
    %v1566 = vadd.f32 %v293, %v1565
    %v1567 = vpop.f32.mrf.mxu0
    %v1568 = vpop.f32.mrf.mxu0
    %v1569 = vadd.f32 %v293, %v1568
    %v1570 = vpop.f32.mrf.mxu0
    %1571 = vmatprep.mubr.bf16.mxu0 0
    %1572 = vmatmul.mubr.bf16.gmra.mxu0 %v1027
    %v1573 = vpop.f32.mrf.mxu0
    %v1574 = vadd.f32 %v293, %v1573
    %v1575 = vpop.f32.mrf.mxu0
    %v1576 = vpop.f32.mrf.mxu0
    %v1577 = vadd.f32 %v293, %v1576
    %v1578 = vpop.f32.mrf.mxu0
    %1579 = vmatprep.mubr.bf16.mxu0 0
    %1580 = vmatmul.mubr.bf16.gmra.mxu0 %v1030
    %v1581 = vpop.f32.mrf.mxu0
    %v1582 = vadd.f32 %v293, %v1581
    %v1583 = vpop.f32.mrf.mxu0
    %v1584 = vpop.f32.mrf.mxu0
    %v1585 = vadd.f32 %v293, %v1584
    %v1586 = vpop.f32.mrf.mxu0
    %1587 = vmatprep.mubr.bf16.mxu0 0
    %1588 = vmatmul.mubr.bf16.gmra.mxu0 %v1033
    %v1589 = vpop.f32.mrf.mxu0
    %v1590 = vadd.f32 %v293, %v1589
    %v1591 = vpop.f32.mrf.mxu0
    %v1592 = vpop.f32.mrf.mxu0
    %v1593 = vadd.f32 %v293, %v1592
    %v1594 = vpop.f32.mrf.mxu0
    %1595 = vmatprep.mubr.bf16.mxu0 0
    %1596 = vmatmul.mubr.bf16.gmra.mxu0 %v1036
    %v1597 = vpop.f32.mrf.mxu0
    %v1598 = vadd.f32 %v293, %v1597
    %v1599 = vpop.f32.mrf.mxu0
    %v1600 = vpop.f32.mrf.mxu0
    %v1601 = vadd.f32 %v293, %v1600
    %v1602 = vpop.f32.mrf.mxu0
    %1603 = vmatprep.mubr.bf16.mxu0 0
    %1604 = vmatmul.mubr.bf16.gmra.mxu0 %v1039
    %v1605 = vpop.f32.mrf.mxu0
    %v1606 = vadd.f32 %v293, %v1605
    %v1607 = vpop.f32.mrf.mxu0
    %v1608 = vpop.f32.mrf.mxu0
    %v1609 = vadd.f32 %v293, %v1608
    %v1610 = vpop.f32.mrf.mxu0
    %1611 = vmatprep.mubr.bf16.mxu0 0
    %1612 = vmatmul.mubr.bf16.gmra.mxu0 %v1042
    %v1613 = vpop.f32.mrf.mxu0
    %v1614 = vadd.f32 %v293, %v1613
    %v1615 = vpop.f32.mrf.mxu0
    %v1616 = vpop.f32.mrf.mxu0
    %v1617 = vadd.f32 %v293, %v1616
    %v1618 = vpop.f32.mrf.mxu0
    %1619 = vmatprep.mubr.bf16.mxu0 0
    %1620 = vmatmul.mubr.bf16.gmra.mxu0 %v1045
    %v1621 = vpop.f32.mrf.mxu0
    %v1622 = vadd.f32 %v293, %v1621
    %v1623 = vpop.f32.mrf.mxu0
    %v1624 = vpop.f32.mrf.mxu0
    %v1625 = vadd.f32 %v293, %v1624
    %v1626 = vpop.f32.mrf.mxu0
    %1627 = vmatprep.mubr.bf16.mxu0 0
    %1628 = vmatmul.mubr.bf16.gmra.mxu0 %v1048
    %v1629 = vpop.f32.mrf.mxu0
    %v1630 = vadd.f32 %v293, %v1629
    %v1631 = vpop.f32.mrf.mxu0
    %v1632 = vpop.f32.mrf.mxu0
    %v1633 = vadd.f32 %v293, %v1632
    %v1634 = vpop.f32.mrf.mxu0
    %1635 = vmatprep.mubr.bf16.mxu0 0
    %1636 = vmatmul.mubr.bf16.gmra.mxu0 %v1051
    %v1637 = vpop.f32.mrf.mxu0
    %v1638 = vadd.f32 %v293, %v1637
    %v1639 = vpop.f32.mrf.mxu0
    %v1640 = vpop.f32.mrf.mxu0
    %v1641 = vadd.f32 %v293, %v1640
    %v1642 = vpop.f32.mrf.mxu0
    %1643 = vmatprep.mubr.bf16.mxu0 0
    %1644 = vmatmul.mubr.bf16.gmra.mxu0 %v1054
    %v1645 = vpop.f32.mrf.mxu0
    %v1646 = vadd.f32 %v293, %v1645
    %v1647 = vpop.f32.mrf.mxu0
    %v1648 = vpop.f32.mrf.mxu0
    %v1649 = vadd.f32 %v293, %v1648
    %v1650 = vpop.f32.mrf.mxu0
    %1651 = vmatprep.mubr.bf16.mxu0 0
    %1652 = vmatmul.mubr.bf16.gmra.mxu0 %v1057
    %v1653 = vpop.f32.mrf.mxu0
    %v1654 = vadd.f32 %v293, %v1653
    %v1655 = vpop.f32.mrf.mxu0
    %v1656 = vpop.f32.mrf.mxu0
    %v1657 = vadd.f32 %v293, %v1656
    %v1658 = vpop.f32.mrf.mxu0
    %1659 = vmatprep.mubr.bf16.mxu0 0
    %1660 = vmatmul.mubr.bf16.gmra.mxu0 %v1060
    %v1661 = vpop.f32.mrf.mxu0
    %v1662 = vadd.f32 %v293, %v1661
    %v1663 = vpop.f32.mrf.mxu0
    %v1664 = vpop.f32.mrf.mxu0
    %v1665 = vadd.f32 %v293, %v1664
    %v1666 = vpop.f32.mrf.mxu0
    %1667 = vmatprep.mubr.bf16.mxu0 0
    %1668 = vmatmul.mubr.bf16.gmra.mxu0 %v1063
    %v1669 = vpop.f32.mrf.mxu0
    %v1670 = vadd.f32 %v293, %v1669
    %v1671 = vpop.f32.mrf.mxu0
    %v1672 = vpop.f32.mrf.mxu0
    %v1673 = vadd.f32 %v293, %v1672
    %v1674 = vpop.f32.mrf.mxu0
    %1675 = vmatprep.mubr.bf16.mxu0 0
    %1676 = vmatmul.mubr.bf16.gmra.mxu0 %v1066
    %v1677 = vpop.f32.mrf.mxu0
    %v1678 = vadd.f32 %v293, %v1677
    %v1679 = vpop.f32.mrf.mxu0
    %v1680 = vpop.f32.mrf.mxu0
    %v1681 = vadd.f32 %v293, %v1680
    %v1682 = vpop.f32.mrf.mxu0
    %1683 = vmatprep.mubr.bf16.mxu0 0
    %1684 = vmatmul.mubr.bf16.gmra.mxu0 %v1069
    %v1685 = vpop.f32.mrf.mxu0
    %v1686 = vadd.f32 %v293, %v1685
    %v1687 = vpop.f32.mrf.mxu0
    %v1688 = vpop.f32.mrf.mxu0
    %v1689 = vadd.f32 %v293, %v1688
    %v1690 = vpop.f32.mrf.mxu0
    %1691 = vmatprep.mubr.bf16.mxu0 0
    %1692 = vmatmul.mubr.bf16.gmra.mxu0 %v1072
    %v1693 = vpop.f32.mrf.mxu0
    %v1694 = vadd.f32 %v293, %v1693
    %v1695 = vpop.f32.mrf.mxu0
    %v1696 = vpop.f32.mrf.mxu0
    %v1697 = vadd.f32 %v293, %v1696
    %v1698 = vpop.f32.mrf.mxu0
    %1699 = vmatprep.mubr.bf16.mxu0 0
    %1700 = vmatmul.mubr.bf16.gmra.mxu0 %v1075
    %v1701 = vpop.f32.mrf.mxu0
    %v1702 = vadd.f32 %v293, %v1701
    %v1703 = vpop.f32.mrf.mxu0
    %v1704 = vpop.f32.mrf.mxu0
    %v1705 = vadd.f32 %v293, %v1704
    %v1706 = vpop.f32.mrf.mxu0
    %1707 = vmatprep.mubr.bf16.mxu0 0
    %1708 = vmatmul.mubr.bf16.gmra.mxu0 %v1078
    %v1709 = vpop.f32.mrf.mxu0
    %v1710 = vadd.f32 %v293, %v1709
    %v1711 = vpop.f32.mrf.mxu0
    %v1712 = vpop.f32.mrf.mxu0
    %v1713 = vadd.f32 %v293, %v1712
    %v1714 = vpop.f32.mrf.mxu0
    %1715 = vmatprep.mubr.bf16.mxu0 0
    %1716 = vmatmul.mubr.bf16.gmra.mxu0 %v1081
    %v1717 = vpop.f32.mrf.mxu0
    %v1718 = vadd.f32 %v293, %v1717
    %v1719 = vpop.f32.mrf.mxu0
    %v1720 = vpop.f32.mrf.mxu0
    %v1721 = vadd.f32 %v293, %v1720
    %v1722 = vpop.f32.mrf.mxu0
    %1723 = vmatprep.mubr.bf16.mxu0 0
    %1724 = vmatmul.mubr.bf16.gmra.mxu0 %v1084
    %v1725 = vpop.f32.mrf.mxu0
    %v1726 = vadd.f32 %v293, %v1725
    %v1727 = vpop.f32.mrf.mxu0
    %v1728 = vpop.f32.mrf.mxu0
    %v1729 = vadd.f32 %v293, %v1728
    %v1730 = vpop.f32.mrf.mxu0
    %1731 = vmatprep.mubr.bf16.mxu0 0
    %1732 = vmatmul.mubr.bf16.gmra.mxu0 %v1087
    %v1733 = vpop.f32.mrf.mxu0
    %v1734 = vadd.f32 %v293, %v1733
    %v1735 = vpop.f32.mrf.mxu0
    %v1736 = vpop.f32.mrf.mxu0
    %v1737 = vadd.f32 %v293, %v1736
    %v1738 = vpop.f32.mrf.mxu0
    %1739 = vmatprep.mubr.bf16.mxu0 0
    %1740 = vmatmul.mubr.bf16.gmra.mxu0 %v1090
    %v1741 = vpop.f32.mrf.mxu0
    %v1742 = vadd.f32 %v293, %v1741
    %v1743 = vpop.f32.mrf.mxu0
    %v1744 = vpop.f32.mrf.mxu0
    %v1745 = vadd.f32 %v293, %v1744
    %v1746 = vpop.f32.mrf.mxu0
    %1747 = vmatprep.mubr.bf16.mxu0 0
    %1748 = vmatmul.mubr.bf16.gmra.mxu0 %v1093
    %v1749 = vpop.f32.mrf.mxu0
    %v1750 = vadd.f32 %v293, %v1749
    %v1751 = vpop.f32.mrf.mxu0
    %v1752 = vpop.f32.mrf.mxu0
    %v1753 = vadd.f32 %v293, %v1752
    %v1754 = vpop.f32.mrf.mxu0
    %1755 = vmatprep.mubr.bf16.mxu0 0
    %1756 = vmatmul.mubr.bf16.gmra.mxu0 %v1096
    %v1757 = vpop.f32.mrf.mxu0
    %v1758 = vadd.f32 %v293, %v1757
    %v1759 = vpop.f32.mrf.mxu0
    %v1760 = vpop.f32.mrf.mxu0
    %v1761 = vadd.f32 %v293, %v1760
    %v1762 = vpop.f32.mrf.mxu0
    %1763 = vmatprep.mubr.bf16.mxu0 0
    %1764 = vmatmul.mubr.bf16.gmra.mxu0 %v1099
    %v1765 = vpop.f32.mrf.mxu0
    %v1766 = vadd.f32 %v293, %v1765
    %v1767 = vpop.f32.mrf.mxu0
    %v1768 = vpop.f32.mrf.mxu0
    %v1769 = vadd.f32 %v293, %v1768
    %v1770 = vpop.f32.mrf.mxu0
    %1771 = vmatprep.mubr.bf16.mxu0 0
    %1772 = vmatmul.mubr.bf16.gmra.mxu0 %v1102
    %v1773 = vpop.f32.mrf.mxu0
    %v1774 = vadd.f32 %v293, %v1773
    %v1775 = vpop.f32.mrf.mxu0
    %v1776 = vpop.f32.mrf.mxu0
    %v1777 = vadd.f32 %v293, %v1776
    %v1778 = vpop.f32.mrf.mxu0
    %1779 = vmatprep.mubr.bf16.mxu0 0
    %1780 = vmatmul.mubr.bf16.gmra.mxu0 %v1105
    %v1781 = vpop.f32.mrf.mxu0
    %v1782 = vadd.f32 %v293, %v1781
    %v1783 = vpop.f32.mrf.mxu0
    %v1784 = vpop.f32.mrf.mxu0
    %v1785 = vadd.f32 %v293, %v1784
    %v1786 = vpop.f32.mrf.mxu0
    %1787 = vmatprep.mubr.bf16.mxu0 0
    %1788 = vmatmul.mubr.bf16.gmra.mxu0 %v1108
    %v1789 = vpop.f32.mrf.mxu0
    %v1790 = vadd.f32 %v293, %v1789
    %v1791 = vpop.f32.mrf.mxu0
    %v1792 = vpop.f32.mrf.mxu0
    %v1793 = vadd.f32 %v293, %v1792
    %v1794 = vpop.f32.mrf.mxu0
    %1795 = vmatprep.mubr.bf16.mxu0 0
    %1796 = vmatmul.mubr.bf16.gmra.mxu0 %v1111
    %v1797 = vpop.f32.mrf.mxu0
    %v1798 = vadd.f32 %v293, %v1797
    %v1799 = vpop.f32.mrf.mxu0
    %v1800 = vpop.f32.mrf.mxu0
    %v1801 = vadd.f32 %v293, %v1800
    %v1802 = vpop.f32.mrf.mxu0
    %1803 = vmatprep.mubr.bf16.mxu0 0
    %1804 = vmatmul.mubr.bf16.gmra.mxu0 %v1114
    %v1805 = vpop.f32.mrf.mxu0
    %v1806 = vadd.f32 %v293, %v1805
    %v1807 = vpop.f32.mrf.mxu0
    %v1808 = vpop.f32.mrf.mxu0
    %v1809 = vadd.f32 %v293, %v1808
    %v1810 = vpop.f32.mrf.mxu0
    %1811 = vmatprep.mubr.bf16.mxu0 0
    %1812 = vmatmul.mubr.bf16.gmra.mxu0 %v1117
    %v1813 = vpop.f32.mrf.mxu0
    %v1814 = vadd.f32 %v293, %v1813
    %v1815 = vpop.f32.mrf.mxu0
    %v1816 = vpop.f32.mrf.mxu0
    %v1817 = vadd.f32 %v293, %v1816
    %v1818 = vpop.f32.mrf.mxu0
    %1819 = vmatprep.mubr.bf16.mxu0 0
    %1820 = vmatmul.mubr.bf16.gmra.mxu0 %v1120
    %v1821 = vpop.f32.mrf.mxu0
    %v1822 = vadd.f32 %v293, %v1821
    %v1823 = vpop.f32.mrf.mxu0
    %v1824 = vpop.f32.mrf.mxu0
    %v1825 = vadd.f32 %v293, %v1824
    %v1826 = vpop.f32.mrf.mxu0
    %1827 = vmatprep.mubr.bf16.mxu0 0
    %1828 = vmatmul.mubr.bf16.gmra.mxu0 %v1123
    %v1829 = vpop.f32.mrf.mxu0
    %v1830 = vadd.f32 %v293, %v1829
    %v1831 = vpop.f32.mrf.mxu0
    %v1832 = vpop.f32.mrf.mxu0
    %v1833 = vadd.f32 %v293, %v1832
    %v1834 = vpop.f32.mrf.mxu0
    %1835 = vmatprep.mubr.bf16.mxu0 0
    %1836 = vmatmul.mubr.bf16.gmra.mxu0 %v1126
    %v1837 = vpop.f32.mrf.mxu0
    %v1838 = vadd.f32 %v293, %v1837
    %v1839 = vpop.f32.mrf.mxu0
    %v1840 = vpop.f32.mrf.mxu0
    %v1841 = vadd.f32 %v293, %v1840
    %v1842 = vpop.f32.mrf.mxu0
    %1843 = vmatprep.mubr.bf16.mxu0 0
    %1844 = vmatmul.mubr.bf16.gmra.mxu0 %v1129
    %v1845 = vpop.f32.mrf.mxu0
    %v1846 = vadd.f32 %v293, %v1845
    %v1847 = vpop.f32.mrf.mxu0
    %v1848 = vpop.f32.mrf.mxu0
    %v1849 = vadd.f32 %v293, %v1848
    %v1850 = vpop.f32.mrf.mxu0
    %1851 = vmatprep.mubr.bf16.mxu0 0
    %1852 = vmatmul.mubr.bf16.gmra.mxu0 %v1132
    %v1853 = vpop.f32.mrf.mxu0
    %v1854 = vadd.f32 %v293, %v1853
    %v1855 = vpop.f32.mrf.mxu0
    %v1856 = vpop.f32.mrf.mxu0
    %v1857 = vadd.f32 %v293, %v1856
    %v1858 = vpop.f32.mrf.mxu0
    %1859 = vmatprep.mubr.bf16.mxu0 0
    %1860 = vmatmul.mubr.bf16.gmra.mxu0 %v1135
    %v1861 = vpop.f32.mrf.mxu0
    %v1862 = vadd.f32 %v293, %v1861
    %v1863 = vpop.f32.mrf.mxu0
    %v1864 = vpop.f32.mrf.mxu0
    %v1865 = vadd.f32 %v293, %v1864
    %v1866 = vpop.f32.mrf.mxu0
    %1867 = vmatprep.mubr.bf16.mxu0 0
    %1868 = vmatmul.mubr.bf16.gmra.mxu0 %v1138
    %v1869 = vpop.f32.mrf.mxu0
    %v1870 = vadd.f32 %v293, %v1869
    %v1871 = vpop.f32.mrf.mxu0
    %v1872 = vpop.f32.mrf.mxu0
    %v1873 = vadd.f32 %v293, %v1872
    %v1874 = vpop.f32.mrf.mxu0
    %1875 = vmatprep.mubr.bf16.mxu0 0
    %1876 = vmatmul.mubr.bf16.gmra.mxu0 %v1141
    %v1877 = vpop.f32.mrf.mxu0
    %v1878 = vadd.f32 %v293, %v1877
    %v1879 = vpop.f32.mrf.mxu0
    %v1880 = vpop.f32.mrf.mxu0
    %v1881 = vadd.f32 %v293, %v1880
    %v1882 = vpop.f32.mrf.mxu0
    %1883 = vmatprep.mubr.bf16.mxu0 0
    %1884 = vmatmul.mubr.bf16.gmra.mxu0 %v1144
    %v1885 = vpop.f32.mrf.mxu0
    %v1886 = vadd.f32 %v293, %v1885
    %v1887 = vpop.f32.mrf.mxu0
    %v1888 = vpop.f32.mrf.mxu0
    %v1889 = vadd.f32 %v293, %v1888
    %v1890 = vpop.f32.mrf.mxu0
    %1891 = vmatprep.mubr.bf16.mxu0 0
    %1892 = vmatmul.mubr.bf16.gmra.mxu0 %v1147
    %v1893 = vpop.f32.mrf.mxu0
    %v1894 = vadd.f32 %v293, %v1893
    %v1895 = vpop.f32.mrf.mxu0
    %v1896 = vpop.f32.mrf.mxu0
    %v1897 = vadd.f32 %v293, %v1896
    %v1898 = vpop.f32.mrf.mxu0
    %1899 = vmatprep.mubr.bf16.mxu0 0
    %1900 = vmatmul.mubr.bf16.gmra.mxu0 %v1150
    %v1901 = vpop.f32.mrf.mxu0
    %v1902 = vadd.f32 %v293, %v1901
    %v1903 = vpop.f32.mrf.mxu0
    %v1904 = vpop.f32.mrf.mxu0
    %v1905 = vadd.f32 %v293, %v1904
    %v1906 = vpop.f32.mrf.mxu0
    %1907 = vmatprep.mubr.bf16.mxu0 0
    %1908 = vmatmul.mubr.bf16.gmra.mxu0 %v1153
    %v1909 = vpop.f32.mrf.mxu0
    %v1910 = vadd.f32 %v293, %v1909
    %v1911 = vpop.f32.mrf.mxu0
    %v1912 = vpop.f32.mrf.mxu0
    %v1913 = vadd.f32 %v293, %v1912
    %v1914 = vpop.f32.mrf.mxu0
    %1915 = vmatprep.mubr.bf16.mxu0 0
    %1916 = vmatmul.mubr.bf16.gmra.mxu0 %v1156
    %v1917 = vpop.f32.mrf.mxu0
    %v1918 = vadd.f32 %v293, %v1917
    %v1919 = vpop.f32.mrf.mxu0
    %v1920 = vpop.f32.mrf.mxu0
    %v1921 = vadd.f32 %v293, %v1920
    %v1922 = vpop.f32.mrf.mxu0
    %1923 = vmatprep.mubr.bf16.mxu0 0
    %1924 = vmatmul.mubr.bf16.gmra.mxu0 %v1159
    %v1925 = vpop.f32.mrf.mxu0
    %v1926 = vadd.f32 %v293, %v1925
    %v1927 = vpop.f32.mrf.mxu0
    %v1928 = vpop.f32.mrf.mxu0
    %v1929 = vadd.f32 %v293, %v1928
    %v1930 = vpop.f32.mrf.mxu0
    %1931 = vmatprep.mubr.bf16.mxu0 0
    %1932 = vmatmul.mubr.bf16.gmra.mxu0 %v1162
    %v1933 = vpop.f32.mrf.mxu0
    %v1934 = vadd.f32 %v293, %v1933
    %v1935 = vpop.f32.mrf.mxu0
    %v1936 = vpop.f32.mrf.mxu0
    %v1937 = vadd.f32 %v293, %v1936
    %v1938 = vpop.f32.mrf.mxu0
    %1939 = vmatprep.mubr.bf16.mxu0 0
    %1940 = vmatmul.mubr.bf16.gmra.mxu0 %v1165
    %v1941 = vpop.f32.mrf.mxu0
    %v1942 = vadd.f32 %v293, %v1941
    %v1943 = vpop.f32.mrf.mxu0
    %v1944 = vpop.f32.mrf.mxu0
    %v1945 = vadd.f32 %v293, %v1944
    %v1946 = vpop.f32.mrf.mxu0
    %1947 = vmatprep.mubr.bf16.mxu0 0
    %1948 = vmatmul.mubr.bf16.gmra.mxu0 %v1168
    %v1949 = vpop.f32.mrf.mxu0
    %v1950 = vadd.f32 %v293, %v1949
    %v1951 = vpop.f32.mrf.mxu0
    %v1952 = vpop.f32.mrf.mxu0
    %v1953 = vadd.f32 %v293, %v1952
    %v1954 = vpop.f32.mrf.mxu0
    %1955 = vmatprep.mubr.bf16.mxu0 0
    %1956 = vmatmul.mubr.bf16.gmra.mxu0 %v1171
    %v1957 = vpop.f32.mrf.mxu0
    %v1958 = vadd.f32 %v293, %v1957
    %v1959 = vpop.f32.mrf.mxu0
    %v1960 = vpop.f32.mrf.mxu0
    %v1961 = vadd.f32 %v293, %v1960
    %v1962 = vpop.f32.mrf.mxu0
    %1963 = vmatprep.mubr.bf16.mxu0 0
    %1964 = vmatmul.mubr.bf16.gmra.mxu0 %v1174
    %v1965 = vpop.f32.mrf.mxu0
    %v1966 = vadd.f32 %v293, %v1965
    %v1967 = vpop.f32.mrf.mxu0
    %v1968 = vpop.f32.mrf.mxu0
    %v1969 = vadd.f32 %v293, %v1968
    %v1970 = vpop.f32.mrf.mxu0
    %1971 = vmatprep.mubr.bf16.mxu0 0
    %1972 = vmatmul.mubr.bf16.gmra.mxu0 %v1177
    %v1973 = vpop.f32.mrf.mxu0
    %v1974 = vadd.f32 %v293, %v1973
    %v1975 = vpop.f32.mrf.mxu0
    %v1976 = vpop.f32.mrf.mxu0
    %v1977 = vadd.f32 %v293, %v1976
    %v1978 = vpop.f32.mrf.mxu0
    %1979 = vmatprep.mubr.bf16.mxu0 0
    %1980 = vmatmul.mubr.bf16.gmra.mxu0 %v1180
    %v1981 = vpop.f32.mrf.mxu0
    %v1982 = vadd.f32 %v293, %v1981
    %v1983 = vpop.f32.mrf.mxu0
    %v1984 = vpop.f32.mrf.mxu0
    %v1985 = vadd.f32 %v293, %v1984
    %v1986 = vpop.f32.mrf.mxu0
    %1987 = vmatprep.mubr.bf16.mxu0 0
    %1988 = vmatmul.mubr.bf16.gmra.mxu0 %v1183
    %v1989 = vpop.f32.mrf.mxu0
    %v1990 = vadd.f32 %v293, %v1989
    %v1991 = vpop.f32.mrf.mxu0
    %v1992 = vpop.f32.mrf.mxu0
    %v1993 = vadd.f32 %v293, %v1992
    %v1994 = vpop.f32.mrf.mxu0
    %1995 = vmatprep.mubr.bf16.mxu0 0
    %1996 = vmatmul.mubr.bf16.gmra.mxu0 %v1186
    %v1997 = vpop.f32.mrf.mxu0
    %v1998 = vadd.f32 %v293, %v1997
    %v1999 = vpop.f32.mrf.mxu0
    %v2000 = vpop.f32.mrf.mxu0
    %v2001 = vadd.f32 %v293, %v2000
    %v2002 = vpop.f32.mrf.mxu0
    %2003 = vmatprep.mubr.bf16.mxu0 0
    %2004 = vmatmul.mubr.bf16.gmra.mxu0 %v1189
    %v2005 = vpop.f32.mrf.mxu0
    %v2006 = vadd.f32 %v293, %v2005
    %v2007 = vpop.f32.mrf.mxu0
    %v2008 = vpop.f32.mrf.mxu0
    %v2009 = vadd.f32 %v293, %v2008
    %v2010 = vpop.f32.mrf.mxu0
    %2011 = vmatprep.mubr.bf16.mxu0 0
    %2012 = vmatmul.mubr.bf16.gmra.mxu0 %v1192
    %v2013 = vpop.f32.mrf.mxu0
    %v2014 = vadd.f32 %v293, %v2013
    %v2015 = vpop.f32.mrf.mxu0
    %v2016 = vpop.f32.mrf.mxu0
    %v2017 = vadd.f32 %v293, %v2016
    %v2018 = vpop.f32.mrf.mxu0
    %2019 = vmatprep.mubr.bf16.mxu0 0
    %2020 = vmatmul.mubr.bf16.gmra.mxu0 %v1195
    %v2021 = vpop.f32.mrf.mxu0
    %v2022 = vadd.f32 %v293, %v2021
    %v2023 = vpop.f32.mrf.mxu0
    %v2024 = vpop.f32.mrf.mxu0
    %v2025 = vadd.f32 %v293, %v2024
    %v2026 = vpop.f32.mrf.mxu0
    %2027 = vmatprep.mubr.bf16.mxu0 0
    %2028 = vmatmul.mubr.bf16.gmra.mxu0 %v1198
    %v2029 = vpop.f32.mrf.mxu0
    %v2030 = vadd.f32 %v293, %v2029
    %v2031 = vpop.f32.mrf.mxu0
    %v2032 = vpop.f32.mrf.mxu0
    %v2033 = vadd.f32 %v293, %v2032
    %v2034 = vpop.f32.mrf.mxu0
    %2035 = vmatprep.mubr.bf16.mxu0 0
    %2036 = vmatmul.mubr.bf16.gmra.mxu0 %v1201
    %v2037 = vpop.f32.mrf.mxu0
    %v2038 = vadd.f32 %v293, %v2037
    %v2039 = vpop.f32.mrf.mxu0
    %v2040 = vpop.f32.mrf.mxu0
    %v2041 = vadd.f32 %v293, %v2040
    %v2042 = vpop.f32.mrf.mxu0
    %2043 = vmatprep.mubr.bf16.mxu0 0
    %2044 = vmatmul.mubr.bf16.gmra.mxu0 %v1204
    %v2045 = vpop.f32.mrf.mxu0
    %v2046 = vadd.f32 %v293, %v2045
    %v2047 = vpop.f32.mrf.mxu0
    %v2048 = vpop.f32.mrf.mxu0
    %v2049 = vadd.f32 %v293, %v2048
    %v2050 = vpop.f32.mrf.mxu0
    %2051 = vmatprep.mubr.bf16.mxu0 0
    %2052 = vmatmul.mubr.bf16.gmra.mxu0 %v1207
    %v2053 = vpop.f32.mrf.mxu0
    %v2054 = vadd.f32 %v293, %v2053
    %v2055 = vpop.f32.mrf.mxu0
    %v2056 = vpop.f32.mrf.mxu0
    %v2057 = vadd.f32 %v293, %v2056
    %v2058 = vpop.f32.mrf.mxu0
    %2059 = vmatprep.mubr.bf16.mxu0 0
    %2060 = vmatmul.mubr.bf16.gmra.mxu0 %v1210
    %v2061 = vpop.f32.mrf.mxu0
    %v2062 = vadd.f32 %v293, %v2061
    %v2063 = vpop.f32.mrf.mxu0
    %v2064 = vpop.f32.mrf.mxu0
    %v2065 = vadd.f32 %v293, %v2064
    %v2066 = vpop.f32.mrf.mxu0
    %2067 = vmatprep.mubr.bf16.mxu0 0
    %2068 = vmatmul.mubr.bf16.gmra.mxu0 %v1213
    %v2069 = vpop.f32.mrf.mxu0
    %v2070 = vadd.f32 %v293, %v2069
    %v2071 = vpop.f32.mrf.mxu0
    %v2072 = vpop.f32.mrf.mxu0
    %v2073 = vadd.f32 %v293, %v2072
    %v2074 = vpop.f32.mrf.mxu0
    %2075 = vmatprep.mubr.bf16.mxu0 0
    %2076 = vmatmul.mubr.bf16.gmra.mxu0 %v1216
    %v2077 = vpop.f32.mrf.mxu0
    %v2078 = vadd.f32 %v293, %v2077
    %v2079 = vpop.f32.mrf.mxu0
    %v2080 = vpop.f32.mrf.mxu0
    %v2081 = vadd.f32 %v293, %v2080
    %v2082 = vpop.f32.mrf.mxu0
    %2083 = vmatprep.mubr.bf16.mxu0 0
    %2084 = vmatmul.mubr.bf16.gmra.mxu0 %v1219
    %v2085 = vpop.f32.mrf.mxu0
    %v2086 = vadd.f32 %v293, %v2085
    %v2087 = vpop.f32.mrf.mxu0
    %v2088 = vpop.f32.mrf.mxu0
    %v2089 = vadd.f32 %v293, %v2088
    %v2090 = vpop.f32.mrf.mxu0
    %2091 = vmatprep.mubr.bf16.mxu0 0
    %2092 = vmatmul.mubr.bf16.gmra.mxu0 %v1222
    %v2093 = vpop.f32.mrf.mxu0
    %v2094 = vadd.f32 %v293, %v2093
    %v2095 = vpop.f32.mrf.mxu0
    %v2096 = vpop.f32.mrf.mxu0
    %v2097 = vadd.f32 %v293, %v2096
    %v2098 = vpop.f32.mrf.mxu0
    %2099 = vmatprep.mubr.bf16.mxu0 0
    %2100 = vmatmul.mubr.bf16.gmra.mxu0 %v1225
    %v2101 = vpop.f32.mrf.mxu0
    %v2102 = vadd.f32 %v293, %v2101
    %v2103 = vpop.f32.mrf.mxu0
    %v2104 = vpop.f32.mrf.mxu0
    %v2105 = vadd.f32 %v293, %v2104
    %v2106 = vpop.f32.mrf.mxu0
    %2107 = vmatprep.mubr.bf16.mxu0 0
    %2108 = vmatmul.mubr.bf16.gmra.mxu0 %v1228
    %v2109 = vpop.f32.mrf.mxu0
    %v2110 = vadd.f32 %v293, %v2109
    %v2111 = vpop.f32.mrf.mxu0
    %v2112 = vpop.f32.mrf.mxu0
    %v2113 = vadd.f32 %v293, %v2112
    %v2114 = vpop.f32.mrf.mxu0
    %2115 = vmatprep.mubr.bf16.mxu0 0
    %2116 = vmatmul.mubr.bf16.gmra.mxu0 %v1231
    %v2117 = vpop.f32.mrf.mxu0
    %v2118 = vadd.f32 %v293, %v2117
    %v2119 = vpop.f32.mrf.mxu0
    %v2120 = vpop.f32.mrf.mxu0
    %v2121 = vadd.f32 %v293, %v2120
    %v2122 = vpop.f32.mrf.mxu0
    %2123 = vmatprep.mubr.bf16.mxu0 0
    %2124 = vmatmul.mubr.bf16.gmra.mxu0 %v1234
    %v2125 = vpop.f32.mrf.mxu0
    %v2126 = vadd.f32 %v293, %v2125
    %v2127 = vpop.f32.mrf.mxu0
    %v2128 = vpop.f32.mrf.mxu0
    %v2129 = vadd.f32 %v293, %v2128
    %v2130 = vpop.f32.mrf.mxu0
    %2131 = vmatprep.mubr.bf16.mxu0 0
    %2132 = vmatmul.mubr.bf16.gmra.mxu0 %v1237
    %v2133 = vpop.f32.mrf.mxu0
    %v2134 = vadd.f32 %v293, %v2133
    %v2135 = vpop.f32.mrf.mxu0
    %v2136 = vpop.f32.mrf.mxu0
    %v2137 = vadd.f32 %v293, %v2136
    %v2138 = vpop.f32.mrf.mxu0
    %2139 = vmatprep.mubr.bf16.mxu0 0
    %2140 = vmatmul.mubr.bf16.gmra.mxu0 %v1240
    %v2141 = vpop.f32.mrf.mxu0
    %v2142 = vadd.f32 %v293, %v2141
    %v2143 = vpop.f32.mrf.mxu0
    %v2144 = vpop.f32.mrf.mxu0
    %v2145 = vadd.f32 %v293, %v2144
    %v2146 = vpop.f32.mrf.mxu0
    %2147 = vmatprep.mubr.bf16.mxu0 0
    %2148 = vmatmul.mubr.bf16.gmra.mxu0 %v1243
    %v2149 = vpop.f32.mrf.mxu0
    %v2150 = vadd.f32 %v293, %v2149
    %v2151 = vpop.f32.mrf.mxu0
    %v2152 = vpop.f32.mrf.mxu0
    %v2153 = vadd.f32 %v293, %v2152
    %v2154 = vpop.f32.mrf.mxu0
    %2155 = vmatprep.mubr.bf16.mxu0 0
    %2156 = vmatmul.mubr.bf16.gmra.mxu0 %v1246
    %v2157 = vpop.f32.mrf.mxu0
    %v2158 = vadd.f32 %v293, %v2157
    %v2159 = vpop.f32.mrf.mxu0
    %v2160 = vpop.f32.mrf.mxu0
    %v2161 = vadd.f32 %v293, %v2160
    %v2162 = vpop.f32.mrf.mxu0
    %2163 = vmatprep.mubr.bf16.mxu0 0
    %2164 = vmatmul.mubr.bf16.gmra.mxu0 %v1249
    %v2165 = vpop.f32.mrf.mxu0
    %v2166 = vadd.f32 %v293, %v2165
    %v2167 = vpop.f32.mrf.mxu0
    %v2168 = vpop.f32.mrf.mxu0
    %v2169 = vadd.f32 %v293, %v2168
    %v2170 = vpop.f32.mrf.mxu0
    %2171 = vmatprep.mubr.bf16.mxu0 0
    %2172 = vmatmul.mubr.bf16.gmra.mxu0 %v1252
    %v2173 = vpop.f32.mrf.mxu0
    %v2174 = vadd.f32 %v293, %v2173
    %v2175 = vpop.f32.mrf.mxu0
    %v2176 = vpop.f32.mrf.mxu0
    %v2177 = vadd.f32 %v293, %v2176
    %v2178 = vpop.f32.mrf.mxu0
    %2179 = vmatprep.mubr.bf16.mxu0 0
    %2180 = vmatmul.mubr.bf16.gmra.mxu0 %v1255
    %v2181 = vpop.f32.mrf.mxu0
    %v2182 = vadd.f32 %v293, %v2181
    %v2183 = vpop.f32.mrf.mxu0
    %v2184 = vpop.f32.mrf.mxu0
    %v2185 = vadd.f32 %v293, %v2184
    %v2186 = vpop.f32.mrf.mxu0
    %2187 = vmatprep.mubr.bf16.mxu0 0
    %2188 = vmatmul.mubr.bf16.gmra.mxu0 %v1258
    %v2189 = vpop.f32.mrf.mxu0
    %v2190 = vadd.f32 %v293, %v2189
    %v2191 = vpop.f32.mrf.mxu0
    %v2192 = vpop.f32.mrf.mxu0
    %v2193 = vadd.f32 %v293, %v2192
    %v2194 = vpop.f32.mrf.mxu0
    %2195 = vmatprep.mubr.bf16.mxu0 0
    %2196 = vmatmul.mubr.bf16.gmra.mxu0 %v1261
    %v2197 = vpop.f32.mrf.mxu0
    %v2198 = vadd.f32 %v293, %v2197
    %v2199 = vpop.f32.mrf.mxu0
    %v2200 = vpop.f32.mrf.mxu0
    %v2201 = vadd.f32 %v293, %v2200
    %v2202 = vpop.f32.mrf.mxu0
    %2203 = vmatprep.mubr.bf16.mxu0 0
    %2204 = vmatmul.mubr.bf16.gmra.mxu0 %v1264
    %v2205 = vpop.f32.mrf.mxu0
    %v2206 = vadd.f32 %v293, %v2205
    %v2207 = vpop.f32.mrf.mxu0
    %v2208 = vpop.f32.mrf.mxu0
    %v2209 = vadd.f32 %v293, %v2208
    %v2210 = vpop.f32.mrf.mxu0
    %2211 = vmatprep.mubr.bf16.mxu0 0
    %2212 = vmatmul.mubr.bf16.gmra.mxu0 %v1267
    %v2213 = vpop.f32.mrf.mxu0
    %v2214 = vadd.f32 %v293, %v2213
    %v2215 = vpop.f32.mrf.mxu0
    %v2216 = vpop.f32.mrf.mxu0
    %v2217 = vadd.f32 %v293, %v2216
    %v2218 = vpop.f32.mrf.mxu0
    %2219 = vmatprep.mubr.bf16.mxu0 0
    %2220 = vmatmul.mubr.bf16.gmra.mxu0 %v1270
    %v2221 = vpop.f32.mrf.mxu0
    %v2222 = vadd.f32 %v293, %v2221
    %v2223 = vpop.f32.mrf.mxu0
    %v2224 = vpop.f32.mrf.mxu0
    %v2225 = vadd.f32 %v293, %v2224
    %v2226 = vpop.f32.mrf.mxu0
    %2227 = vmatprep.mubr.bf16.mxu0 0
    %2228 = vmatmul.mubr.bf16.gmra.mxu0 %v1273
    %v2229 = vpop.f32.mrf.mxu0
    %v2230 = vadd.f32 %v293, %v2229
    %v2231 = vpop.f32.mrf.mxu0
    %v2232 = vpop.f32.mrf.mxu0
    %v2233 = vadd.f32 %v293, %v2232
    %v2234 = vpop.f32.mrf.mxu0
    %2235 = vmatprep.mubr.bf16.mxu0 0
    %2236 = vmatmul.mubr.bf16.gmra.mxu0 %v1276
    %v2237 = vpop.f32.mrf.mxu0
    %v2238 = vadd.f32 %v293, %v2237
    %v2239 = vpop.f32.mrf.mxu0
    %v2240 = vpop.f32.mrf.mxu0
    %v2241 = vadd.f32 %v293, %v2240
    %v2242 = vpop.f32.mrf.mxu0
    %2243 = vmatprep.mubr.bf16.mxu0 0
    %2244 = vmatmul.mubr.bf16.gmra.mxu0 %v1279
    %v2245 = vpop.f32.mrf.mxu0
    %v2246 = vadd.f32 %v293, %v2245
    %v2247 = vpop.f32.mrf.mxu0
    %v2248 = vpop.f32.mrf.mxu0
    %v2249 = vadd.f32 %v293, %v2248
    %v2250 = vpop.f32.mrf.mxu0
    %2251 = vmatprep.mubr.bf16.mxu0 0
    %2252 = vmatmul.mubr.bf16.gmra.mxu0 %v1282
    %v2253 = vpop.f32.mrf.mxu0
    %v2254 = vadd.f32 %v293, %v2253
    %v2255 = vpop.f32.mrf.mxu0
    %v2256 = vpop.f32.mrf.mxu0
    %v2257 = vadd.f32 %v293, %v2256
    %v2258 = vpop.f32.mrf.mxu0
    %2259 = vmatprep.mubr.bf16.mxu0 0
    %2260 = vmatmul.mubr.bf16.gmra.mxu0 %v1285
    %v2261 = vpop.f32.mrf.mxu0
    %v2262 = vadd.f32 %v293, %v2261
    %v2263 = vpop.f32.mrf.mxu0
    %v2264 = vpop.f32.mrf.mxu0
    %v2265 = vadd.f32 %v293, %v2264
    %v2266 = vpop.f32.mrf.mxu0
    %2267 = vmatprep.mubr.bf16.mxu0 0
    %2268 = vmatmul.mubr.bf16.gmra.mxu0 %v1288
    %v2269 = vpop.f32.mrf.mxu0
    %v2270 = vadd.f32 %v293, %v2269
    %v2271 = vpop.f32.mrf.mxu0
    %v2272 = vpop.f32.mrf.mxu0
    %v2273 = vadd.f32 %v293, %v2272
    %v2274 = vpop.f32.mrf.mxu0
    %2275 = vmatprep.mubr.bf16.mxu0 0
    %2276 = vmatmul.mubr.bf16.gmra.mxu0 %v1291
    %v2277 = vpop.f32.mrf.mxu0
    %v2278 = vadd.f32 %v293, %v2277
    %v2279 = vpop.f32.mrf.mxu0
    %v2280 = vpop.f32.mrf.mxu0
    %v2281 = vadd.f32 %v293, %v2280
    %v2282 = vpop.f32.mrf.mxu0
    %2283 = vmatprep.mubr.bf16.mxu0 0
    %2284 = vmatmul.mubr.bf16.gmra.mxu0 %v1294
    %v2285 = vpop.f32.mrf.mxu0
    %v2286 = vadd.f32 %v293, %v2285
    %v2287 = vpop.f32.mrf.mxu0
    %v2288 = vpop.f32.mrf.mxu0
    %v2289 = vadd.f32 %v293, %v2288
    %v2290 = vpop.f32.mrf.mxu0
    %2291 = vmatprep.mubr.bf16.mxu0 0
    %2292 = vmatmul.mubr.bf16.gmra.mxu0 %v1297
    %v2293 = vpop.f32.mrf.mxu0
    %v2294 = vadd.f32 %v293, %v2293
    %v2295 = vpop.f32.mrf.mxu0
    %v2296 = vpop.f32.mrf.mxu0
    %v2297 = vadd.f32 %v293, %v2296
    %v2298 = vpop.f32.mrf.mxu0
    %2299 = vmatprep.mubr.bf16.mxu0 0
    %2300 = vmatmul.mubr.bf16.gmra.mxu0 %v1300
    %v2301 = vpop.f32.mrf.mxu0
    %v2302 = vadd.f32 %v293, %v2301
    %v2303 = vpop.f32.mrf.mxu0
    %v2304 = vpop.f32.mrf.mxu0
    %v2305 = vadd.f32 %v293, %v2304
    %v2306 = vpop.f32.mrf.mxu0
    %2307 = vmatprep.mubr.bf16.mxu0 0
    %2308 = vmatmul.mubr.bf16.gmra.mxu0 %v1303
    %v2309 = vpop.f32.mrf.mxu0
    %v2310 = vadd.f32 %v293, %v2309
    %v2311 = vpop.f32.mrf.mxu0
    %v2312 = vpop.f32.mrf.mxu0
    %v2313 = vadd.f32 %v293, %v2312
    %v2314 = vpop.f32.mrf.mxu0
    %2315 = vmatprep.mubr.bf16.mxu0 0
    %2316 = vmatmul.mubr.bf16.gmra.mxu0 %v1306
    %v2317 = vpop.f32.mrf.mxu0
    %v2318 = vadd.f32 %v293, %v2317
    %v2319 = vpop.f32.mrf.mxu0
    %v2320 = vpop.f32.mrf.mxu0
    %v2321 = vadd.f32 %v293, %v2320
    %v2322 = vpop.f32.mrf.mxu0
    %2323 = vmatprep.mubr.bf16.mxu0 0
    %2324 = vmatmul.mubr.bf16.gmra.mxu0 %v1309
    %v2325 = vpop.f32.mrf.mxu0
    %v2326 = vadd.f32 %v293, %v2325
    %v2327 = vpop.f32.mrf.mxu0
    %v2328 = vpop.f32.mrf.mxu0
    %v2329 = vadd.f32 %v293, %v2328
    %v2330 = vpop.f32.mrf.mxu0
    %2331 = vmatprep.mubr.bf16.mxu0 0
    %2332 = vmatmul.mubr.bf16.gmra.mxu0 %v1312
    %v2333 = vpop.f32.mrf.mxu0
    %v2334 = vadd.f32 %v293, %v2333
    %v2335 = vpop.f32.mrf.mxu0
    %v2336 = vpop.f32.mrf.mxu0
    %v2337 = vadd.f32 %v293, %v2336
    %v2338 = vpop.f32.mrf.mxu0
    %2339 = vmatprep.mubr.bf16.mxu0 0
    %2340 = vmatmul.mubr.bf16.gmra.mxu0 %v1315
    %v2341 = vpop.f32.mrf.mxu0
    %v2342 = vadd.f32 %v293, %v2341
    %v2343 = vpop.f32.mrf.mxu0
    %v2344 = vpop.f32.mrf.mxu0
    %v2345 = vadd.f32 %v293, %v2344
    %v2346 = vpop.f32.mrf.mxu0
    %2347 = vmatprep.mubr.bf16.mxu0 0
    %2348 = vmatmul.mubr.bf16.gmra.mxu0 %v1318
    %v2349 = vpop.f32.mrf.mxu0
    %v2350 = vadd.f32 %v293, %v2349
    %v2351 = vpop.f32.mrf.mxu0
    %v2352 = vpop.f32.mrf.mxu0
    %v2353 = vadd.f32 %v293, %v2352
    %v2354 = vpop.f32.mrf.mxu0
    %2355 = vmatprep.mubr.bf16.mxu0 0
    %2356 = vmatmul.mubr.bf16.gmra.mxu0 %v1321
    %v2357 = vpop.f32.mrf.mxu0
    %v2358 = vadd.f32 %v293, %v2357
    %v2359 = vpop.f32.mrf.mxu0
    %v2360 = vpop.f32.mrf.mxu0
    %v2361 = vadd.f32 %v293, %v2360
    %v2362 = vpop.f32.mrf.mxu0
    %2363 = vmatprep.mubr.bf16.mxu0 0
    %2364 = vmatmul.mubr.bf16.gmra.mxu0 %v1324
    %v2365 = vpop.f32.mrf.mxu0
    %v2366 = vadd.f32 %v293, %v2365
    %v2367 = vpop.f32.mrf.mxu0
    %v2368 = vpop.f32.mrf.mxu0
    %v2369 = vadd.f32 %v293, %v2368
    %v2370 = vpop.f32.mrf.mxu0
    %2371 = vmatprep.mubr.bf16.mxu0 0
    %2372 = vmatmul.mubr.bf16.gmra.mxu0 %v1327
    %v2373 = vpop.f32.mrf.mxu0
    %v2374 = vadd.f32 %v293, %v2373
    %v2375 = vpop.f32.mrf.mxu0
    %v2376 = vpop.f32.mrf.mxu0
    %v2377 = vadd.f32 %v293, %v2376
    %v2378 = vpop.f32.mrf.mxu0
    %2379 = vmatprep.mubr.bf16.mxu0 0
    %2380 = vmatmul.mubr.bf16.gmra.mxu0 %v1330
    %v2381 = vpop.f32.mrf.mxu0
    %v2382 = vadd.f32 %v293, %v2381
    %v2383 = vpop.f32.mrf.mxu0
    %v2384 = vpop.f32.mrf.mxu0
    %v2385 = vadd.f32 %v293, %v2384
    %v2386 = vpop.f32.mrf.mxu0
    %2387 = vmatprep.mubr.bf16.mxu0 0
    %2388 = vmatmul.mubr.bf16.gmra.mxu0 %v1333
    %v2389 = vpop.f32.mrf.mxu0
    %v2390 = vadd.f32 %v293, %v2389
    %v2391 = vpop.f32.mrf.mxu0
    %v2392 = vpop.f32.mrf.mxu0
    %v2393 = vadd.f32 %v293, %v2392
    %v2394 = vpop.f32.mrf.mxu0
    %2395 = vdwg.mxu0
    %v2396 = vmax.f32 %v1374, 0.0
    %v2397 = vmax.f32 %v1377, 0.0
    %v2398 = vmax.f32 %v1382, 0.0
    %v2399 = vmax.f32 %v1385, 0.0
    %v2400 = vmax.f32 %v1390, 0.0
    %v2401 = vmax.f32 %v1393, 0.0
    %v2402 = vmax.f32 %v1398, 0.0
    %v2403 = vmax.f32 %v1401, 0.0
    %v2404 = vmax.f32 %v1406, 0.0
    %v2405 = vmax.f32 %v1409, 0.0
    %v2406 = vmax.f32 %v1414, 0.0
    %v2407 = vmax.f32 %v1417, 0.0
    %v2408 = vmax.f32 %v1422, 0.0
    %v2409 = vmax.f32 %v1425, 0.0
    %v2410 = vmax.f32 %v1430, 0.0
    %v2411 = vmax.f32 %v1433, 0.0
    %v2412 = vmax.f32 %v1438, 0.0
    %v2413 = vmax.f32 %v1441, 0.0
    %v2414 = vmax.f32 %v1446, 0.0
    %v2415 = vmax.f32 %v1449, 0.0
    %v2416 = vmax.f32 %v1454, 0.0
    %v2417 = vmax.f32 %v1457, 0.0
    %v2418 = vmax.f32 %v1462, 0.0
    %v2419 = vmax.f32 %v1465, 0.0
    %v2420 = vmax.f32 %v1470, 0.0
    %v2421 = vmax.f32 %v1473, 0.0
    %v2422 = vmax.f32 %v1478, 0.0
    %v2423 = vmax.f32 %v1481, 0.0
    %v2424 = vmax.f32 %v1486, 0.0
    %v2425 = vmax.f32 %v1489, 0.0
    %v2426 = vmax.f32 %v1494, 0.0
    %v2427 = vmax.f32 %v1497, 0.0
    %v2428 = vmax.f32 %v1502, 0.0
    %v2429 = vmax.f32 %v1505, 0.0
    %v2430 = vmax.f32 %v1510, 0.0
    %v2431 = vmax.f32 %v1513, 0.0
    %v2432 = vmax.f32 %v1518, 0.0
    %v2433 = vmax.f32 %v1521, 0.0
    %v2434 = vmax.f32 %v1526, 0.0
    %v2435 = vmax.f32 %v1529, 0.0
    %v2436 = vmax.f32 %v1534, 0.0
    %v2437 = vmax.f32 %v1537, 0.0
    %v2438 = vmax.f32 %v1542, 0.0
    %v2439 = vmax.f32 %v1545, 0.0
    %v2440 = vmax.f32 %v1550, 0.0
    %v2441 = vmax.f32 %v1553, 0.0
    %v2442 = vmax.f32 %v1558, 0.0
    %v2443 = vmax.f32 %v1561, 0.0
    %v2444 = vmax.f32 %v1566, 0.0
    %v2445 = vmax.f32 %v1569, 0.0
    %v2446 = vmax.f32 %v1574, 0.0
    %v2447 = vmax.f32 %v1577, 0.0
    %v2448 = vmax.f32 %v1582, 0.0
    %v2449 = vmax.f32 %v1585, 0.0
    %v2450 = vmax.f32 %v1590, 0.0
    %v2451 = vmax.f32 %v1593, 0.0
    %v2452 = vmax.f32 %v1598, 0.0
    %v2453 = vmax.f32 %v1601, 0.0
    %v2454 = vmax.f32 %v1606, 0.0
    %v2455 = vmax.f32 %v1609, 0.0
    %v2456 = vmax.f32 %v1614, 0.0
    %v2457 = vmax.f32 %v1617, 0.0
    %v2458 = vmax.f32 %v1622, 0.0
    %v2459 = vmax.f32 %v1625, 0.0
    %v2460 = vmax.f32 %v1630, 0.0
    %v2461 = vmax.f32 %v1633, 0.0
    %v2462 = vmax.f32 %v1638, 0.0
    %v2463 = vmax.f32 %v1641, 0.0
    %v2464 = vmax.f32 %v1646, 0.0
    %v2465 = vmax.f32 %v1649, 0.0
    %v2466 = vmax.f32 %v1654, 0.0
    %v2467 = vmax.f32 %v1657, 0.0
    %v2468 = vmax.f32 %v1662, 0.0
    %v2469 = vmax.f32 %v1665, 0.0
    %v2470 = vmax.f32 %v1670, 0.0
    %v2471 = vmax.f32 %v1673, 0.0
    %v2472 = vmax.f32 %v1678, 0.0
    %v2473 = vmax.f32 %v1681, 0.0
    %v2474 = vmax.f32 %v1686, 0.0
    %v2475 = vmax.f32 %v1689, 0.0
    %v2476 = vmax.f32 %v1694, 0.0
    %v2477 = vmax.f32 %v1697, 0.0
    %v2478 = vmax.f32 %v1702, 0.0
    %v2479 = vmax.f32 %v1705, 0.0
    %v2480 = vmax.f32 %v1710, 0.0
    %v2481 = vmax.f32 %v1713, 0.0
    %v2482 = vmax.f32 %v1718, 0.0
    %v2483 = vmax.f32 %v1721, 0.0
    %v2484 = vmax.f32 %v1726, 0.0
    %v2485 = vmax.f32 %v1729, 0.0
    %v2486 = vmax.f32 %v1734, 0.0
    %v2487 = vmax.f32 %v1737, 0.0
    %v2488 = vmax.f32 %v1742, 0.0
    %v2489 = vmax.f32 %v1745, 0.0
    %v2490 = vmax.f32 %v1750, 0.0
    %v2491 = vmax.f32 %v1753, 0.0
    %v2492 = vmax.f32 %v1758, 0.0
    %v2493 = vmax.f32 %v1761, 0.0
    %v2494 = vmax.f32 %v1766, 0.0
    %v2495 = vmax.f32 %v1769, 0.0
    %v2496 = vmax.f32 %v1774, 0.0
    %v2497 = vmax.f32 %v1777, 0.0
    %v2498 = vmax.f32 %v1782, 0.0
    %v2499 = vmax.f32 %v1785, 0.0
    %v2500 = vmax.f32 %v1790, 0.0
    %v2501 = vmax.f32 %v1793, 0.0
    %v2502 = vmax.f32 %v1798, 0.0
    %v2503 = vmax.f32 %v1801, 0.0
    %v2504 = vmax.f32 %v1806, 0.0
    %v2505 = vmax.f32 %v1809, 0.0
    %v2506 = vmax.f32 %v1814, 0.0
    %v2507 = vmax.f32 %v1817, 0.0
    %v2508 = vmax.f32 %v1822, 0.0
    %v2509 = vmax.f32 %v1825, 0.0
    %v2510 = vmax.f32 %v1830, 0.0
    %v2511 = vmax.f32 %v1833, 0.0
    %v2512 = vmax.f32 %v1838, 0.0
    %v2513 = vmax.f32 %v1841, 0.0
    %v2514 = vmax.f32 %v1846, 0.0
    %v2515 = vmax.f32 %v1849, 0.0
    %v2516 = vmax.f32 %v1854, 0.0
    %v2517 = vmax.f32 %v1857, 0.0
    %v2518 = vmax.f32 %v1862, 0.0
    %v2519 = vmax.f32 %v1865, 0.0
    %v2520 = vmax.f32 %v1870, 0.0
    %v2521 = vmax.f32 %v1873, 0.0
    %v2522 = vmax.f32 %v1878, 0.0
    %v2523 = vmax.f32 %v1881, 0.0
    %v2524 = vmax.f32 %v1886, 0.0
    %v2525 = vmax.f32 %v1889, 0.0
    %v2526 = vmax.f32 %v1894, 0.0
    %v2527 = vmax.f32 %v1897, 0.0
    %v2528 = vmax.f32 %v1902, 0.0
    %v2529 = vmax.f32 %v1905, 0.0
    %v2530 = vmax.f32 %v1910, 0.0
    %v2531 = vmax.f32 %v1913, 0.0
    %v2532 = vmax.f32 %v1918, 0.0
    %v2533 = vmax.f32 %v1921, 0.0
    %v2534 = vmax.f32 %v1926, 0.0
    %v2535 = vmax.f32 %v1929, 0.0
    %v2536 = vmax.f32 %v1934, 0.0
    %v2537 = vmax.f32 %v1937, 0.0
    %v2538 = vmax.f32 %v1942, 0.0
    %v2539 = vmax.f32 %v1945, 0.0
    %v2540 = vmax.f32 %v1950, 0.0
    %v2541 = vmax.f32 %v1953, 0.0
    %v2542 = vmax.f32 %v1958, 0.0
    %v2543 = vmax.f32 %v1961, 0.0
    %v2544 = vmax.f32 %v1966, 0.0
    %v2545 = vmax.f32 %v1969, 0.0
    %v2546 = vmax.f32 %v1974, 0.0
    %v2547 = vmax.f32 %v1977, 0.0
    %v2548 = vmax.f32 %v1982, 0.0
    %v2549 = vmax.f32 %v1985, 0.0
    %v2550 = vmax.f32 %v1990, 0.0
    %v2551 = vmax.f32 %v1993, 0.0
    %v2552 = vmax.f32 %v1998, 0.0
    %v2553 = vmax.f32 %v2001, 0.0
    %v2554 = vmax.f32 %v2006, 0.0
    %v2555 = vmax.f32 %v2009, 0.0
    %v2556 = vmax.f32 %v2014, 0.0
    %v2557 = vmax.f32 %v2017, 0.0
    %v2558 = vmax.f32 %v2022, 0.0
    %v2559 = vmax.f32 %v2025, 0.0
    %v2560 = vmax.f32 %v2030, 0.0
    %v2561 = vmax.f32 %v2033, 0.0
    %v2562 = vmax.f32 %v2038, 0.0
    %v2563 = vmax.f32 %v2041, 0.0
    %v2564 = vmax.f32 %v2046, 0.0
    %v2565 = vmax.f32 %v2049, 0.0
    %v2566 = vmax.f32 %v2054, 0.0
    %v2567 = vmax.f32 %v2057, 0.0
    %v2568 = vmax.f32 %v2062, 0.0
    %v2569 = vmax.f32 %v2065, 0.0
    %v2570 = vmax.f32 %v2070, 0.0
    %v2571 = vmax.f32 %v2073, 0.0
    %v2572 = vmax.f32 %v2078, 0.0
    %v2573 = vmax.f32 %v2081, 0.0
    %v2574 = vmax.f32 %v2086, 0.0
    %v2575 = vmax.f32 %v2089, 0.0
    %v2576 = vmax.f32 %v2094, 0.0
    %v2577 = vmax.f32 %v2097, 0.0
    %v2578 = vmax.f32 %v2102, 0.0
    %v2579 = vmax.f32 %v2105, 0.0
    %v2580 = vmax.f32 %v2110, 0.0
    %v2581 = vmax.f32 %v2113, 0.0
    %v2582 = vmax.f32 %v2118, 0.0
    %v2583 = vmax.f32 %v2121, 0.0
    %v2584 = vmax.f32 %v2126, 0.0
    %v2585 = vmax.f32 %v2129, 0.0
    %v2586 = vmax.f32 %v2134, 0.0
    %v2587 = vmax.f32 %v2137, 0.0
    %v2588 = vmax.f32 %v2142, 0.0
    %v2589 = vmax.f32 %v2145, 0.0
    %v2590 = vmax.f32 %v2150, 0.0
    %v2591 = vmax.f32 %v2153, 0.0
    %v2592 = vmax.f32 %v2158, 0.0
    %v2593 = vmax.f32 %v2161, 0.0
    %v2594 = vmax.f32 %v2166, 0.0
    %v2595 = vmax.f32 %v2169, 0.0
    %v2596 = vmax.f32 %v2174, 0.0
    %v2597 = vmax.f32 %v2177, 0.0
    %v2598 = vmax.f32 %v2182, 0.0
    %v2599 = vmax.f32 %v2185, 0.0
    %v2600 = vmax.f32 %v2190, 0.0
    %v2601 = vmax.f32 %v2193, 0.0
    %v2602 = vmax.f32 %v2198, 0.0
    %v2603 = vmax.f32 %v2201, 0.0
    %v2604 = vmax.f32 %v2206, 0.0
    %v2605 = vmax.f32 %v2209, 0.0
    %v2606 = vmax.f32 %v2214, 0.0
    %v2607 = vmax.f32 %v2217, 0.0
    %v2608 = vmax.f32 %v2222, 0.0
    %v2609 = vmax.f32 %v2225, 0.0
    %v2610 = vmax.f32 %v2230, 0.0
    %v2611 = vmax.f32 %v2233, 0.0
    %v2612 = vmax.f32 %v2238, 0.0
    %v2613 = vmax.f32 %v2241, 0.0
    %v2614 = vmax.f32 %v2246, 0.0
    %v2615 = vmax.f32 %v2249, 0.0
    %v2616 = vmax.f32 %v2254, 0.0
    %v2617 = vmax.f32 %v2257, 0.0
    %v2618 = vmax.f32 %v2262, 0.0
    %v2619 = vmax.f32 %v2265, 0.0
    %v2620 = vmax.f32 %v2270, 0.0
    %v2621 = vmax.f32 %v2273, 0.0
    %v2622 = vmax.f32 %v2278, 0.0
    %v2623 = vmax.f32 %v2281, 0.0
    %v2624 = vmax.f32 %v2286, 0.0
    %v2625 = vmax.f32 %v2289, 0.0
    %v2626 = vmax.f32 %v2294, 0.0
    %v2627 = vmax.f32 %v2297, 0.0
    %v2628 = vmax.f32 %v2302, 0.0
    %v2629 = vmax.f32 %v2305, 0.0
    %v2630 = vmax.f32 %v2310, 0.0
    %v2631 = vmax.f32 %v2313, 0.0
    %v2632 = vmax.f32 %v2318, 0.0
    %v2633 = vmax.f32 %v2321, 0.0
    %v2634 = vmax.f32 %v2326, 0.0
    %v2635 = vmax.f32 %v2329, 0.0
    %v2636 = vmax.f32 %v2334, 0.0
    %v2637 = vmax.f32 %v2337, 0.0
    %v2638 = vmax.f32 %v2342, 0.0
    %v2639 = vmax.f32 %v2345, 0.0
    %v2640 = vmax.f32 %v2350, 0.0
    %v2641 = vmax.f32 %v2353, 0.0
    %v2642 = vmax.f32 %v2358, 0.0
    %v2643 = vmax.f32 %v2361, 0.0
    %v2644 = vmax.f32 %v2366, 0.0
    %v2645 = vmax.f32 %v2369, 0.0
    %v2646 = vmax.f32 %v2374, 0.0
    %v2647 = vmax.f32 %v2377, 0.0
    %v2648 = vmax.f32 %v2382, 0.0
    %v2649 = vmax.f32 %v2385, 0.0
    %v2650 = vmax.f32 %v2390, 0.0
    %v2651 = vmax.f32 %v2393, 0.0
    %v2652 = vld [vmem:[#allocation2] sm:$0xff]
    %v2653 = vadd.f32 %v2396, %v2397
    %v2654 = vadd.f32 %v2653, %v2398
    %v2655 = vadd.f32 %v2654, %v2399
    %v2656 = vadd.f32 %v2655, %v2400
    %v2657 = vadd.f32 %v2656, %v2401
    %v2658 = vadd.f32 %v2657, %v2402
    %v2659 = vadd.f32 %v2658, %v2403
    %v2660 = vadd.f32 %v2659, %v2404
    %v2661 = vadd.f32 %v2660, %v2405
    %v2662 = vadd.f32 %v2661, %v2406
    %v2663 = vadd.f32 %v2662, %v2407
    %v2664 = vadd.f32 %v2663, %v2408
    %v2665 = vadd.f32 %v2664, %v2409
    %v2666 = vadd.f32 %v2665, %v2410
    %v2667 = vadd.f32 %v2666, %v2411
    %v2668 = vadd.f32 %v2667, %v2412
    %v2669 = vadd.f32 %v2668, %v2413
    %v2670 = vadd.f32 %v2669, %v2414
    %v2671 = vadd.f32 %v2670, %v2415
    %v2672 = vadd.f32 %v2671, %v2416
    %v2673 = vadd.f32 %v2672, %v2417
    %v2674 = vadd.f32 %v2673, %v2418
    %v2675 = vadd.f32 %v2674, %v2419
    %v2676 = vadd.f32 %v2675, %v2420
    %v2677 = vadd.f32 %v2676, %v2421
    %v2678 = vadd.f32 %v2677, %v2422
    %v2679 = vadd.f32 %v2678, %v2423
    %v2680 = vadd.f32 %v2679, %v2424
    %v2681 = vadd.f32 %v2680, %v2425
    %v2682 = vadd.f32 %v2681, %v2426
    %v2683 = vadd.f32 %v2682, %v2427
    %v2684 = vrot.slane %v2683, 4
    %v2685 = vadd.f32 %v2683, %v2684
    %v2686 = vrot.slane %v2685, 2
    %v2687 = vadd.f32 %v2685, %v2686
    %v2688 = vrot.slane %v2687, 1
    %v2689 = vadd.f32 %v2687, %v2688
    %v2690 = vadd.f32 %v2428, %v2429
    %v2691 = vadd.f32 %v2690, %v2430
    %v2692 = vadd.f32 %v2691, %v2431
    %v2693 = vadd.f32 %v2692, %v2432
    %v2694 = vadd.f32 %v2693, %v2433
    %v2695 = vadd.f32 %v2694, %v2434
    %v2696 = vadd.f32 %v2695, %v2435
    %v2697 = vadd.f32 %v2696, %v2436
    %v2698 = vadd.f32 %v2697, %v2437
    %v2699 = vadd.f32 %v2698, %v2438
    %v2700 = vadd.f32 %v2699, %v2439
    %v2701 = vadd.f32 %v2700, %v2440
    %v2702 = vadd.f32 %v2701, %v2441
    %v2703 = vadd.f32 %v2702, %v2442
    %v2704 = vadd.f32 %v2703, %v2443
    %v2705 = vadd.f32 %v2704, %v2444
    %v2706 = vadd.f32 %v2705, %v2445
    %v2707 = vadd.f32 %v2706, %v2446
    %v2708 = vadd.f32 %v2707, %v2447
    %v2709 = vadd.f32 %v2708, %v2448
    %v2710 = vadd.f32 %v2709, %v2449
    %v2711 = vadd.f32 %v2710, %v2450
    %v2712 = vadd.f32 %v2711, %v2451
    %v2713 = vadd.f32 %v2712, %v2452
    %v2714 = vadd.f32 %v2713, %v2453
    %v2715 = vadd.f32 %v2714, %v2454
    %v2716 = vadd.f32 %v2715, %v2455
    %v2717 = vadd.f32 %v2716, %v2456
    %v2718 = vadd.f32 %v2717, %v2457
    %v2719 = vadd.f32 %v2718, %v2458
    %v2720 = vadd.f32 %v2719, %v2459
    %v2721 = vrot.slane %v2720, 4
    %v2722 = vadd.f32 %v2720, %v2721
    %v2723 = vrot.slane %v2722, 2
    %v2724 = vadd.f32 %v2722, %v2723
    %v2725 = vrot.slane %v2724, 1
    %v2726 = vadd.f32 %v2724, %v2725
    %v2727 = vadd.f32 %v2460, %v2461
    %v2728 = vadd.f32 %v2727, %v2462
    %v2729 = vadd.f32 %v2728, %v2463
    %v2730 = vadd.f32 %v2729, %v2464
    %v2731 = vadd.f32 %v2730, %v2465
    %v2732 = vadd.f32 %v2731, %v2466
    %v2733 = vadd.f32 %v2732, %v2467
    %v2734 = vadd.f32 %v2733, %v2468
    %v2735 = vadd.f32 %v2734, %v2469
    %v2736 = vadd.f32 %v2735, %v2470
    %v2737 = vadd.f32 %v2736, %v2471
    %v2738 = vadd.f32 %v2737, %v2472
    %v2739 = vadd.f32 %v2738, %v2473
    %v2740 = vadd.f32 %v2739, %v2474
    %v2741 = vadd.f32 %v2740, %v2475
    %v2742 = vadd.f32 %v2741, %v2476
    %v2743 = vadd.f32 %v2742, %v2477
    %v2744 = vadd.f32 %v2743, %v2478
    %v2745 = vadd.f32 %v2744, %v2479
    %v2746 = vadd.f32 %v2745, %v2480
    %v2747 = vadd.f32 %v2746, %v2481
    %v2748 = vadd.f32 %v2747, %v2482
    %v2749 = vadd.f32 %v2748, %v2483
    %v2750 = vadd.f32 %v2749, %v2484
    %v2751 = vadd.f32 %v2750, %v2485
    %v2752 = vadd.f32 %v2751, %v2486
    %v2753 = vadd.f32 %v2752, %v2487
    %v2754 = vadd.f32 %v2753, %v2488
    %v2755 = vadd.f32 %v2754, %v2489
    %v2756 = vadd.f32 %v2755, %v2490
    %v2757 = vadd.f32 %v2756, %v2491
    %v2758 = vrot.slane %v2757, 4
    %v2759 = vadd.f32 %v2757, %v2758
    %v2760 = vrot.slane %v2759, 2
    %v2761 = vadd.f32 %v2759, %v2760
    %v2762 = vrot.slane %v2761, 1
    %v2763 = vadd.f32 %v2761, %v2762
    %v2764 = vadd.f32 %v2492, %v2493
    %v2765 = vadd.f32 %v2764, %v2494
    %v2766 = vadd.f32 %v2765, %v2495
    %v2767 = vadd.f32 %v2766, %v2496
    %v2768 = vadd.f32 %v2767, %v2497
    %v2769 = vadd.f32 %v2768, %v2498
    %v2770 = vadd.f32 %v2769, %v2499
    %v2771 = vadd.f32 %v2770, %v2500
    %v2772 = vadd.f32 %v2771, %v2501
    %v2773 = vadd.f32 %v2772, %v2502
    %v2774 = vadd.f32 %v2773, %v2503
    %v2775 = vadd.f32 %v2774, %v2504
    %v2776 = vadd.f32 %v2775, %v2505
    %v2777 = vadd.f32 %v2776, %v2506
    %v2778 = vadd.f32 %v2777, %v2507
    %v2779 = vadd.f32 %v2778, %v2508
    %v2780 = vadd.f32 %v2779, %v2509
    %v2781 = vadd.f32 %v2780, %v2510
    %v2782 = vadd.f32 %v2781, %v2511
    %v2783 = vadd.f32 %v2782, %v2512
    %v2784 = vadd.f32 %v2783, %v2513
    %v2785 = vadd.f32 %v2784, %v2514
    %v2786 = vadd.f32 %v2785, %v2515
    %v2787 = vadd.f32 %v2786, %v2516
    %v2788 = vadd.f32 %v2787, %v2517
    %v2789 = vadd.f32 %v2788, %v2518
    %v2790 = vadd.f32 %v2789, %v2519
    %v2791 = vadd.f32 %v2790, %v2520
    %v2792 = vadd.f32 %v2791, %v2521
    %v2793 = vadd.f32 %v2792, %v2522
    %v2794 = vadd.f32 %v2793, %v2523
    %v2795 = vrot.slane %v2794, 4
    %v2796 = vadd.f32 %v2794, %v2795
    %v2797 = vrot.slane %v2796, 2
    %v2798 = vadd.f32 %v2796, %v2797
    %v2799 = vrot.slane %v2798, 1
    %v2800 = vadd.f32 %v2798, %v2799
    %v2801 = vadd.f32 %v2524, %v2525
    %v2802 = vadd.f32 %v2801, %v2526
    %v2803 = vadd.f32 %v2802, %v2527
    %v2804 = vadd.f32 %v2803, %v2528
    %v2805 = vadd.f32 %v2804, %v2529
    %v2806 = vadd.f32 %v2805, %v2530
    %v2807 = vadd.f32 %v2806, %v2531
    %v2808 = vadd.f32 %v2807, %v2532
    %v2809 = vadd.f32 %v2808, %v2533
    %v2810 = vadd.f32 %v2809, %v2534
    %v2811 = vadd.f32 %v2810, %v2535
    %v2812 = vadd.f32 %v2811, %v2536
    %v2813 = vadd.f32 %v2812, %v2537
    %v2814 = vadd.f32 %v2813, %v2538
    %v2815 = vadd.f32 %v2814, %v2539
    %v2816 = vadd.f32 %v2815, %v2540
    %v2817 = vadd.f32 %v2816, %v2541
    %v2818 = vadd.f32 %v2817, %v2542
    %v2819 = vadd.f32 %v2818, %v2543
    %v2820 = vadd.f32 %v2819, %v2544
    %v2821 = vadd.f32 %v2820, %v2545
    %v2822 = vadd.f32 %v2821, %v2546
    %v2823 = vadd.f32 %v2822, %v2547
    %v2824 = vadd.f32 %v2823, %v2548
    %v2825 = vadd.f32 %v2824, %v2549
    %v2826 = vadd.f32 %v2825, %v2550
    %v2827 = vadd.f32 %v2826, %v2551
    %v2828 = vadd.f32 %v2827, %v2552
    %v2829 = vadd.f32 %v2828, %v2553
    %v2830 = vadd.f32 %v2829, %v2554
    %v2831 = vadd.f32 %v2830, %v2555
    %v2832 = vrot.slane %v2831, 4
    %v2833 = vadd.f32 %v2831, %v2832
    %v2834 = vrot.slane %v2833, 2
    %v2835 = vadd.f32 %v2833, %v2834
    %v2836 = vrot.slane %v2835, 1
    %v2837 = vadd.f32 %v2835, %v2836
    %v2838 = vadd.f32 %v2556, %v2557
    %v2839 = vadd.f32 %v2838, %v2558
    %v2840 = vadd.f32 %v2839, %v2559
    %v2841 = vadd.f32 %v2840, %v2560
    %v2842 = vadd.f32 %v2841, %v2561
    %v2843 = vadd.f32 %v2842, %v2562
    %v2844 = vadd.f32 %v2843, %v2563
    %v2845 = vadd.f32 %v2844, %v2564
    %v2846 = vadd.f32 %v2845, %v2565
    %v2847 = vadd.f32 %v2846, %v2566
    %v2848 = vadd.f32 %v2847, %v2567
    %v2849 = vadd.f32 %v2848, %v2568
    %v2850 = vadd.f32 %v2849, %v2569
    %v2851 = vadd.f32 %v2850, %v2570
    %v2852 = vadd.f32 %v2851, %v2571
    %v2853 = vadd.f32 %v2852, %v2572
    %v2854 = vadd.f32 %v2853, %v2573
    %v2855 = vadd.f32 %v2854, %v2574
    %v2856 = vadd.f32 %v2855, %v2575
    %v2857 = vadd.f32 %v2856, %v2576
    %v2858 = vadd.f32 %v2857, %v2577
    %v2859 = vadd.f32 %v2858, %v2578
    %v2860 = vadd.f32 %v2859, %v2579
    %v2861 = vadd.f32 %v2860, %v2580
    %v2862 = vadd.f32 %v2861, %v2581
    %v2863 = vadd.f32 %v2862, %v2582
    %v2864 = vadd.f32 %v2863, %v2583
    %v2865 = vadd.f32 %v2864, %v2584
    %v2866 = vadd.f32 %v2865, %v2585
    %v2867 = vadd.f32 %v2866, %v2586
    %v2868 = vadd.f32 %v2867, %v2587
    %v2869 = vrot.slane %v2868, 4
    %v2870 = vadd.f32 %v2868, %v2869
    %v2871 = vrot.slane %v2870, 2
    %v2872 = vadd.f32 %v2870, %v2871
    %v2873 = vrot.slane %v2872, 1
    %v2874 = vadd.f32 %v2872, %v2873
    %v2875 = vadd.f32 %v2588, %v2589
    %v2876 = vadd.f32 %v2875, %v2590
    %v2877 = vadd.f32 %v2876, %v2591
    %v2878 = vadd.f32 %v2877, %v2592
    %v2879 = vadd.f32 %v2878, %v2593
    %v2880 = vadd.f32 %v2879, %v2594
    %v2881 = vadd.f32 %v2880, %v2595
    %v2882 = vadd.f32 %v2881, %v2596
    %v2883 = vadd.f32 %v2882, %v2597
    %v2884 = vadd.f32 %v2883, %v2598
    %v2885 = vadd.f32 %v2884, %v2599
    %v2886 = vadd.f32 %v2885, %v2600
    %v2887 = vadd.f32 %v2886, %v2601
    %v2888 = vadd.f32 %v2887, %v2602
    %v2889 = vadd.f32 %v2888, %v2603
    %v2890 = vadd.f32 %v2889, %v2604
    %v2891 = vadd.f32 %v2890, %v2605
    %v2892 = vadd.f32 %v2891, %v2606
    %v2893 = vadd.f32 %v2892, %v2607
    %v2894 = vadd.f32 %v2893, %v2608
    %v2895 = vadd.f32 %v2894, %v2609
    %v2896 = vadd.f32 %v2895, %v2610
    %v2897 = vadd.f32 %v2896, %v2611
    %v2898 = vadd.f32 %v2897, %v2612
    %v2899 = vadd.f32 %v2898, %v2613
    %v2900 = vadd.f32 %v2899, %v2614
    %v2901 = vadd.f32 %v2900, %v2615
    %v2902 = vadd.f32 %v2901, %v2616
    %v2903 = vadd.f32 %v2902, %v2617
    %v2904 = vadd.f32 %v2903, %v2618
    %v2905 = vadd.f32 %v2904, %v2619
    %v2906 = vrot.slane %v2905, 4
    %v2907 = vadd.f32 %v2905, %v2906
    %v2908 = vrot.slane %v2907, 2
    %v2909 = vadd.f32 %v2907, %v2908
    %v2910 = vrot.slane %v2909, 1
    %v2911 = vadd.f32 %v2909, %v2910
    %v2912 = vadd.f32 %v2620, %v2621
    %v2913 = vadd.f32 %v2912, %v2622
    %v2914 = vadd.f32 %v2913, %v2623
    %v2915 = vadd.f32 %v2914, %v2624
    %v2916 = vadd.f32 %v2915, %v2625
    %v2917 = vadd.f32 %v2916, %v2626
    %v2918 = vadd.f32 %v2917, %v2627
    %v2919 = vadd.f32 %v2918, %v2628
    %v2920 = vadd.f32 %v2919, %v2629
    %v2921 = vadd.f32 %v2920, %v2630
    %v2922 = vadd.f32 %v2921, %v2631
    %v2923 = vadd.f32 %v2922, %v2632
    %v2924 = vadd.f32 %v2923, %v2633
    %v2925 = vadd.f32 %v2924, %v2634
    %v2926 = vadd.f32 %v2925, %v2635
    %v2927 = vadd.f32 %v2926, %v2636
    %v2928 = vadd.f32 %v2927, %v2637
    %v2929 = vadd.f32 %v2928, %v2638
    %v2930 = vadd.f32 %v2929, %v2639
    %v2931 = vadd.f32 %v2930, %v2640
    %v2932 = vadd.f32 %v2931, %v2641
    %v2933 = vadd.f32 %v2932, %v2642
    %v2934 = vadd.f32 %v2933, %v2643
    %v2935 = vadd.f32 %v2934, %v2644
    %v2936 = vadd.f32 %v2935, %v2645
    %v2937 = vadd.f32 %v2936, %v2646
    %v2938 = vadd.f32 %v2937, %v2647
    %v2939 = vadd.f32 %v2938, %v2648
    %v2940 = vadd.f32 %v2939, %v2649
    %v2941 = vadd.f32 %v2940, %v2650
    %v2942 = vadd.f32 %v2941, %v2651
    %v2943 = vrot.slane %v2942, 4
    %v2944 = vadd.f32 %v2942, %v2943
    %v2945 = vrot.slane %v2944, 2
    %v2946 = vadd.f32 %v2944, %v2945
    %v2947 = vrot.slane %v2946, 1
    %v2948 = vadd.f32 %v2946, %v2947
    %vm2957 = vcmask 1041409
    %v2958 = vsel %vm2957, %v2726, %v2689
    %vm2959 = vcmask 1042434
    %v2960 = vsel %vm2959, %v2763, %v2958
    %vm2961 = vcmask 1043459
    %v2962 = vsel %vm2961, %v2800, %v2960
    %vm2963 = vcmask 1044484
    %v2964 = vsel %vm2963, %v2837, %v2962
    %vm2965 = vcmask 1045509
    %v2966 = vsel %vm2965, %v2874, %v2964
    %vm2967 = vcmask 1046534
    %v2968 = vsel %vm2967, %v2911, %v2966
    %vm2969 = vcmask 1047559
    %v2970 = vsel %vm2969, %v2948, %v2968
    %v2972 = vadd.f32 %v2652, %v2970
    %2973 = vst [vmem:[#allocation2] sm:$0xff] %v2972
    // Predicated region
    $region26: #{tpu_custom_call.1} parent=1 // pred_check
      %p2974 = pneg %p22
    $region27: #{tpu_custom_call.1} parent=1 // pred_check_branch
      %2976 = sbr.rel (%p2974) target = $region29
    $region28: #{tpu_custom_call.1} parent=1 // pred_region
      %v2977 = vld [vmem:[#allocation2] sm:$0xff]
      %v2978 = vld [vmem:[%s3] sm:$0xff]
      %v2979 = vld [vmem:[%s3 + $0x8] sm:$0xff]
      %v2980 = vld [vmem:[%s3 + $0x10] sm:$0xff]
      %v2981 = vld [vmem:[%s3 + $0x18] sm:$0xff]
      %v2982 = vld [vmem:[%s3 + $0x20] sm:$0xff]
      %v2983 = vld [vmem:[%s3 + $0x28] sm:$0xff]
      %v2984 = vld [vmem:[%s3 + $0x30] sm:$0xff]
      %v2985 = vld [vmem:[%s3 + $0x38] sm:$0xff]
      %v2986 = vld [vmem:[%s3 + $0x40] sm:$0xff]
      %v2987 = vld [vmem:[%s3 + $0x48] sm:$0xff]
      %v2988 = vld [vmem:[%s3 + $0x50] sm:$0xff]
      %v2989 = vld [vmem:[%s3 + $0x58] sm:$0xff]
      %v2990 = vld [vmem:[%s3 + $0x60] sm:$0xff]
      %v2991 = vld [vmem:[%s3 + $0x68] sm:$0xff]
      %v2992 = vld [vmem:[%s3 + $0x70] sm:$0xff]
      %v2993 = vld [vmem:[%s3 + $0x78] sm:$0xff]
      %v2994 = vld [vmem:[%s4] sm:$0x1]
      %v2996 = vlaneseq
      %v2997 = vshrl.u32 %v2996, 7
      %v2998 = vsub.s32 0, %v2997
      %v2999 = vrot.slane %v2994, %v2998
      %3001 = vmatprep.subr.mxu0 0.0
      %3002 = vmatpush1.msra.mxu0 %v2993
      %3003 = vmatprep.subr.mxu0 0.0
      %3004 = vmatpush1.msra.mxu0 %v2992
      %3005 = vmatprep.subr.mxu0 0.0
      %3006 = vmatpush1.msra.mxu0 %v2991
      %3007 = vmatprep.subr.mxu0 0.0
      %3008 = vmatpush1.msra.mxu0 %v2990
      %3009 = vmatprep.subr.mxu0 0.0
      %3010 = vmatpush1.msra.mxu0 %v2989
      %3011 = vmatprep.subr.mxu0 0.0
      %3012 = vmatpush1.msra.mxu0 %v2988
      %3013 = vmatprep.subr.mxu0 0.0
      %3014 = vmatpush1.msra.mxu0 %v2987
      %3015 = vmatprep.subr.mxu0 0.0
      %3016 = vmatpush1.msra.mxu0 %v2986
      %3017 = vmatprep.subr.mxu0 0.0
      %3018 = vmatpush1.msra.mxu0 %v2985
      %3019 = vmatprep.subr.mxu0 0.0
      %3020 = vmatpush1.msra.mxu0 %v2984
      %3021 = vmatprep.subr.mxu0 0.0
      %3022 = vmatpush1.msra.mxu0 %v2983
      %3023 = vmatprep.subr.mxu0 0.0
      %3024 = vmatpush1.msra.mxu0 %v2982
      %3025 = vmatprep.subr.mxu0 0.0
      %3026 = vmatpush1.msra.mxu0 %v2981
      %3027 = vmatprep.subr.mxu0 0.0
      %3028 = vmatpush1.msra.mxu0 %v2980
      %3029 = vmatprep.subr.mxu0 0.0
      %3030 = vmatpush1.msra.mxu0 %v2979
      %3031 = vmatprep.subr.mxu0 0.0
      %3032 = vmatpush1.msra.mxu0 %v2978
      %3033 = vmatprep.subr.mxu0 0.0
      %3034 = vmatpush2.msra.mxu0 0.0
      %3035 = vmatprep.subr.mxu0 0.0
      %3036 = vmatpush2.msra.mxu0 0.0
      %3037 = vmatprep.subr.mxu0 0.0
      %3038 = vmatpush2.msra.mxu0 0.0
      %3039 = vmatprep.subr.mxu0 0.0
      %3040 = vmatpush2.msra.mxu0 0.0
      %3041 = vmatprep.subr.mxu0 0.0
      %3042 = vmatpush2.msra.mxu0 0.0
      %3043 = vmatprep.subr.mxu0 0.0
      %3044 = vmatpush2.msra.mxu0 0.0
      %3045 = vmatprep.subr.mxu0 0.0
      %3046 = vmatpush2.msra.mxu0 0.0
      %3047 = vmatprep.subr.mxu0 0.0
      %3048 = vmatpush2.msra.mxu0 0.0
      %3049 = vmatprep.subr.mxu0 0.0
      %3050 = vmatpush2.msra.mxu0 0.0
      %3051 = vmatprep.subr.mxu0 0.0
      %3052 = vmatpush2.msra.mxu0 0.0
      %3053 = vmatprep.subr.mxu0 0.0
      %3054 = vmatpush2.msra.mxu0 0.0
      %3055 = vmatprep.subr.mxu0 0.0
      %3056 = vmatpush2.msra.mxu0 0.0
      %3057 = vmatprep.subr.mxu0 0.0
      %3058 = vmatpush2.msra.mxu0 0.0
      %3059 = vmatprep.subr.mxu0 0.0
      %3060 = vmatpush2.msra.mxu0 0.0
      %3061 = vmatprep.subr.mxu0 0.0
      %3062 = vmatpush2.msra.mxu0 0.0
      %3063 = vmatprep.subr.mxu0 0.0
      %3064 = vmatpush2.msra.mxu0 0.0
      %3065 = vmatprep.mubr.f32.mxu0 0.0
      %3066 = vmatmul.mubr.f32.gmra.mxu0 %v2977
      %v3067 = vpop.f32.mrf.mxu0
      %v3068 = vadd.f32 %v2999, %v3067
      %v3069 = vpop.f32.mrf.mxu0
      %3070 = vdwg.mxu0
      %3071 = vst [vmem:[#allocation3] sm:$0xff] %v3068
    $region29: #{tpu_custom_call.1} parent=1 // pred_fallthru
      _
    // Predicated region
    $region30: #{tpu_custom_call.1} parent=1 // pred_check
      _
    $region31: #{tpu_custom_call.1} parent=1 // pred_check_branch
      %3073 = sbr.rel (0) target = $region33
    $region32: #{tpu_custom_call.1} parent=1 // pred_region
      %s3075 = ssub.s32 128, 128
      %3076 = vsyncadd [#allocation4], %s3075
      %s3078 = sshll.u32 [#allocation3], 4
      %s3079 = int_to_ptr.vmem [resolvable:$true] %s3078
      %3081 = dma.vmem_to_hbm [thread:$0]  %s3079, 128, %s5, [#allocation4]
    $region33: #{tpu_custom_call.1} parent=1 // pred_fallthru
      _
    // Predicated region
    $region34: #{tpu_custom_call.1} parent=1 // pred_check
      _
    $region35: #{tpu_custom_call.1} parent=1 // pred_check_branch
      %3083 = sbr.rel (0) target = $region37
    $region36: #{tpu_custom_call.1} parent=1 // pred_region
      %3084 = dma.done [#allocation4], 128
    $region37: #{tpu_custom_call.1} parent=1 // pred_fallthru
      _
    %3085 = vsyncpa [#allocation4], 1

</llo_original>
